<compile_context>
chip_gen: v6e
topology: v6e:2x2x1
jax: 0.10.0
libtpu: 0.0.40
codegen_flags: <defaults>
</compile_context>

<pallas_src>
import math

import jax
import jax.numpy as jnp
from jax.experimental import pallas as pl
from jax.experimental.pallas import tpu as pltpu


# Static conv configuration: (out_channels, kernel_size, dilation); padding = d*(k-1)//2.
_CONV_CFG = (
    (256, 1, 1),
    (128, 3, 1),
    (128, 3, 2),
    (128, 3, 3),
    (128, 5, 1),
    (128, 5, 2),
    (128, 5, 3),
)
_PAD = max(d * (k - 1) // 2 for _, k, d in _CONV_CFG)   # = 6
_CAT_C = sum(oc for oc, _, _ in _CONV_CFG)              # = 1024

# Channel permutation of the 1024-wide concat: ordering convs as (0,1,4,5,2,3,6) makes
# every per-offset tap group land in a contiguous, 128-aligned column range.
_PERM = (0, 1, 4, 5, 2, 3, 6)


def _build_groups():
    col_of = {}
    c = 0
    for ci in _PERM:
        col_of[ci] = c
        c += _CONV_CFG[ci][0]
    by_off = {}
    for ci, (oc, k, d) in enumerate(_CONV_CFG):
        p = d * (k - 1) // 2
        for t in range(k):
            by_off.setdefault(_PAD - p + t * d, []).append((ci, t))
    groups = []
    for off in sorted(by_off):
        members = tuple(sorted(by_off[off], key=lambda m: col_of[m[0]]))
        col0 = col_of[members[0][0]]
        width = 0
        for ci, _ in members:
            assert col_of[ci] == col0 + width          # contiguous permuted columns
            width += _CONV_CFG[ci][0]
        groups.append((off, col0, width, members))
    # Full-width (center-offset) group first: it initializes the accumulator.
    groups.sort(key=lambda g: (g[2] != _CAT_C, g[0]))
    assert groups[0][2] == _CAT_C
    return tuple(groups), col_of


_GROUPS, _COL_OF = _build_groups()   # 11 groups, widths {128,256,384,1024}


def _round_up(n, m):
    return ((n + m - 1) // m) * m


def _summarization_kernel(x_ref, *refs):
    """x_ref: (1,1,TL+2*PAD,E) bf16; then 11 packed group weights, b_cat, wfc, bfc,
    output (1,TL,smry_k) f32, and a (TL,1024) f32 VMEM accumulator scratch."""
    n_g = len(_GROUPS)
    w_refs = refs[:n_g]
    b_cat_ref, wfc_ref, bfc_ref, o_ref, pre_ref = refs[n_g:]
    TL = o_ref.shape[1]

    x = x_ref[0, 0]                                    # (TL + 2*PAD, E) bf16
    for (off, col, width, _), w_ref in zip(_GROUPS, w_refs):
        part = jnp.dot(x[off:off + TL, :], w_ref[...],
                       preferred_element_type=jnp.float32)
        if width == _CAT_C:
            pre_ref[...] = part                        # center offset covers all channels
        else:
            pre_ref[:, col:col + width] += part        # 128-aligned column slice

    feat = jnp.maximum(pre_ref[...] + b_cat_ref[...], 0.0).astype(jnp.bfloat16)
    out = jnp.dot(feat, wfc_ref[...], preferred_element_type=jnp.float32)
    o_ref[0] = (out + bfc_ref[...]).astype(o_ref.dtype)


def summarization(rgn_emb, params, *, seq_tile=512, single_buffer_weights=True):
    """rgn_emb: (B, L, E) float32. Returns (B, L, smry_k) float32."""
    B, L, E = rgn_emb.shape
    K = params["wfc"].shape[1]

    TL = min(_round_up(seq_tile, 8), _round_up(L, 8))
    n_tiles = pl.cdiv(L, TL)
    Lt = n_tiles * TL
    win = TL + 2 * _PAD

    # ---- host-side packing (bf16 operands for the MXU) ----------------------------
    x_pad = jnp.pad(rgn_emb.astype(jnp.bfloat16),
                    ((0, 0), (_PAD, Lt - L + _PAD), (0, 0)))
    idx = jnp.arange(n_tiles)[:, None] * TL + jnp.arange(win)[None, :]
    x_tiles = x_pad[:, idx, :]                         # (B, n_tiles, win, E) overlapped windows

    w_groups = []
    for _, _, _, members in _GROUPS:
        w_groups.append(jnp.concatenate(
            [params[f"w{ci}"][t] for ci, t in members], axis=1).astype(jnp.bfloat16))
    b_cat = jnp.concatenate([params[f"b{ci}"] for ci in _PERM],
                            axis=1).astype(jnp.float32)            # (1, 1024) permuted
    nat_col = {}
    c = 0
    for ci, (oc, _, _) in enumerate(_CONV_CFG):
        nat_col[ci] = c
        c += oc
    wfc_perm = jnp.concatenate(
        [params["wfc"][nat_col[ci]:nat_col[ci] + _CONV_CFG[ci][0]] for ci in _PERM],
        axis=0).astype(jnp.bfloat16)                               # (1024, K) permuted rows
    bfc = params["bfc"].astype(jnp.float32)

    # ---- block specs ---------------------------------------------------------------
    def resident(shape):
        idx_map = lambda b, l: (0,) * len(shape)
        if single_buffer_weights and hasattr(pl, "Buffered"):
            try:
                return pl.BlockSpec(shape, idx_map, pipeline_mode=pl.Buffered(1))
            except TypeError:
                pass
        return pl.BlockSpec(shape, idx_map)

    in_specs = [pl.BlockSpec((1, 1, win, E), lambda b, l: (b, l, 0, 0))]
    args = [x_tiles]
    for w in w_groups:
        in_specs.append(resident(w.shape))
        args.append(w)
    in_specs += [resident(b_cat.shape), resident(wfc_perm.shape), resident(bfc.shape)]
    args += [b_cat, wfc_perm, bfc]

    # ---- VMEM budget ---------------------------------------------------------------
    wmult = 1 if single_buffer_weights else 2
    wbytes = (sum(int(w.size) for w in w_groups) * 2 + int(wfc_perm.size) * 2
              + (int(b_cat.size) + int(bfc.size)) * 4)
    est = (wbytes * wmult
           + 2 * win * E * 2          # x window, double-buffered, bf16
           + 2 * TL * K * 4           # output tile, double-buffered, f32
           + TL * _CAT_C * 4          # pre-activation accumulator scratch
           + TL * _CAT_C * 2          # feat bf16 temp
           + 4 * TL * E * 2)          # realigned shifted-slice temporaries
    # TODO(synk): tune the 56 MiB ceiling per generation (up to ~100 MiB on v5e/v6e).
    vmem_limit = int(min(max(2 * est, 32 * 2**20), 56 * 2**20))

    out = pl.pallas_call(
        _summarization_kernel,
        out_shape=jax.ShapeDtypeStruct((B, Lt, K), jnp.float32),
        grid_spec=pltpu.PrefetchScalarGridSpec(
            num_scalar_prefetch=0,
            grid=(B, n_tiles),
            in_specs=in_specs,
            out_specs=pl.BlockSpec((1, TL, K), lambda b, l: (b, l, 0)),
            scratch_shapes=[pltpu.VMEM((TL, _CAT_C), jnp.float32)]),
        compiler_params=pltpu.CompilerParams(
            dimension_semantics=("parallel", "parallel"),
            vmem_limit_bytes=vmem_limit),
    )(*args)
    return out[:, :L, :]


def _reference(rgn_emb, params):
    """Pure-JAX f32 re-statement of the PyTorch forward (independent code path)."""
    feats = []
    for i, (oc, k, d) in enumerate(_CONV_CFG):
        p = d * (k - 1) // 2
        y = jax.lax.conv_general_dilated(
            rgn_emb, params[f"w{i}"],
            window_strides=(1,), padding=[(p, p)], rhs_dilation=(d,),
            dimension_numbers=("NWC", "WIO", "NWC"),
            precision=jax.lax.Precision.HIGHEST)
        feats.append(jax.nn.relu(y + params[f"b{i}"].reshape(1, 1, oc)))
    feat = jnp.concatenate(feats, axis=-1)                         # (B, L, 1024)
    out = jnp.einsum("blc,ck->blk", feat, params["wfc"],
                     precision=jax.lax.Precision.HIGHEST)
    return out + params["bfc"].reshape(1, 1, -1)


def _init_params(key, embed_size, smry_k):
    params = {}
    keys = jax.random.split(key, 2 * len(_CONV_CFG) + 2)
    i = 0
    for ci, (oc, k, _) in enumerate(_CONV_CFG):
        s = 1.0 / math.sqrt(embed_size * k)
        # Conv1d weight stored tap-major as (k, in=E, out=oc) (= torch (oc,E,k) transposed).
        params[f"w{ci}"] = jax.random.uniform(keys[i], (k, embed_size, oc),
                                              jnp.float32, -s, s); i += 1
        params[f"b{ci}"] = jax.random.uniform(keys[i], (1, oc),
                                              jnp.float32, -s, s); i += 1
    s = 1.0 / math.sqrt(_CAT_C)
    params["wfc"] = jax.random.uniform(keys[i], (_CAT_C, smry_k),
                                       jnp.float32, -s, s); i += 1
    params["bfc"] = jax.random.uniform(keys[i], (1, smry_k), jnp.float32, -s, s)
    return params


if __name__ == "__main__":
    B, L, E, SMRY_K = 2, 40, 32, 12            # small shapes; seq_tile=16 -> 3 sequence tiles
    key = jax.random.PRNGKey(0)
    k_x, k_p = jax.random.split(key)
    rgn_emb = jax.random.normal(k_x, (B, L, E), jnp.float32)
    params = _init_params(k_p, E, SMRY_K)

    fn = jax.jit(summarization, static_argnames=("seq_tile", "single_buffer_weights"))
    try:
        out = fn(rgn_emb, params, seq_tile=16, single_buffer_weights=True)
        out = jax.block_until_ready(out)
    except Exception:
        # Fallback if this JAX build rejects single-buffered (pl.Buffered(1)) weight specs.
        out = fn(rgn_emb, params, seq_tile=16, single_buffer_weights=False)
        out = jax.block_until_ready(out)

    ref = _reference(rgn_emb, params)
    assert out.shape == (B, L, SMRY_K)
    max_err = float(jnp.max(jnp.abs(out - ref)))
    # bf16 MXU operands with f32 accumulation -> relaxed tolerance vs. the f32 reference.
    assert jnp.allclose(out, ref, atol=3e-2, rtol=3e-2), f"mismatch vs reference (max abs err {max_err})"
    print("KERNEL_OK")
</pallas_src>

<mosaic_0001>
module attributes {stable_mosaic.version = 11 : i64} {
  func.func @_summarization_kernel(%arg0: i32, %arg1: i32, %arg2: memref<1x1x28x32xbf16, #tpu.memory_space<vmem>>, %arg3: memref<32x1024xbf16, #tpu.memory_space<vmem>>, %arg4: memref<32x128xbf16, #tpu.memory_space<vmem>>, %arg5: memref<32x128xbf16, #tpu.memory_space<vmem>>, %arg6: memref<32x256xbf16, #tpu.memory_space<vmem>>, %arg7: memref<32x384xbf16, #tpu.memory_space<vmem>>, %arg8: memref<32x256xbf16, #tpu.memory_space<vmem>>, %arg9: memref<32x256xbf16, #tpu.memory_space<vmem>>, %arg10: memref<32x384xbf16, #tpu.memory_space<vmem>>, %arg11: memref<32x256xbf16, #tpu.memory_space<vmem>>, %arg12: memref<32x128xbf16, #tpu.memory_space<vmem>>, %arg13: memref<32x128xbf16, #tpu.memory_space<vmem>>, %arg14: memref<1x1024xf32, #tpu.memory_space<vmem>>, %arg15: memref<1024x12xbf16, #tpu.memory_space<vmem>>, %arg16: memref<1x12xf32, #tpu.memory_space<vmem>>, %arg17: memref<1x16x12xf32, #tpu.memory_space<vmem>>, %arg18: memref<16x1024xf32, #tpu.memory_space<vmem>>) attributes {dimension_semantics = [#tpu.dimension_semantics<parallel>, #tpu.dimension_semantics<parallel>], iteration_bounds = array<i64: 2, 3>, scalar_prefetch = 0 : i64, scratch_operands = 1 : i64, tpu.core_type = #tpu.core_type<tc>, window_params = [{transform_indices = @transform_0, window_bounds = array<i64: 1, 1, 28, 32>}, {pipeline_mode = #tpu.pipeline_mode<synchronous>, transform_indices = @transform_1, window_bounds = array<i64: 32, 1024>}, {pipeline_mode = #tpu.pipeline_mode<synchronous>, transform_indices = @transform_2, window_bounds = array<i64: 32, 128>}, {pipeline_mode = #tpu.pipeline_mode<synchronous>, transform_indices = @transform_3, window_bounds = array<i64: 32, 128>}, {pipeline_mode = #tpu.pipeline_mode<synchronous>, transform_indices = @transform_4, window_bounds = array<i64: 32, 256>}, {pipeline_mode = #tpu.pipeline_mode<synchronous>, transform_indices = @transform_5, window_bounds = array<i64: 32, 384>}, {pipeline_mode = #tpu.pipeline_mode<synchronous>, transform_indices = @transform_6, window_bounds = array<i64: 32, 256>}, {pipeline_mode = #tpu.pipeline_mode<synchronous>, transform_indices = @transform_7, window_bounds = array<i64: 32, 256>}, {pipeline_mode = #tpu.pipeline_mode<synchronous>, transform_indices = @transform_8, window_bounds = array<i64: 32, 384>}, {pipeline_mode = #tpu.pipeline_mode<synchronous>, transform_indices = @transform_9, window_bounds = array<i64: 32, 256>}, {pipeline_mode = #tpu.pipeline_mode<synchronous>, transform_indices = @transform_10, window_bounds = array<i64: 32, 128>}, {pipeline_mode = #tpu.pipeline_mode<synchronous>, transform_indices = @transform_11, window_bounds = array<i64: 32, 128>}, {pipeline_mode = #tpu.pipeline_mode<synchronous>, transform_indices = @transform_12, window_bounds = array<i64: 1, 1024>}, {pipeline_mode = #tpu.pipeline_mode<synchronous>, transform_indices = @transform_13, window_bounds = array<i64: 1024, 12>}, {pipeline_mode = #tpu.pipeline_mode<synchronous>, transform_indices = @transform_14, window_bounds = array<i64: 1, 12>}, {transform_indices = @transform_15, window_bounds = array<i64: 1, 16, 12>}]} {
    %c0 = arith.constant 0 : index
    %c0_0 = arith.constant 0 : index
    %c0_1 = arith.constant 0 : index
    %c0_2 = arith.constant 0 : index
    %0 = vector.load %arg2[%c0, %c0_0, %c0_1, %c0_2] : memref<1x1x28x32xbf16, #tpu.memory_space<vmem>>, vector<1x1x28x32xbf16>
    %1 = vector.shape_cast %0 : vector<1x1x28x32xbf16> to vector<28x32xbf16>
    %2 = vector.extract_strided_slice %1 {offsets = [6, 0], sizes = [16, 32], strides = [1, 1]} : vector<28x32xbf16> to vector<16x32xbf16>
    %c0_3 = arith.constant 0 : index
    %c0_4 = arith.constant 0 : index
    %3 = vector.load %arg3[%c0_3, %c0_4] : memref<32x1024xbf16, #tpu.memory_space<vmem>>, vector<32x1024xbf16>
    %cst = arith.constant dense<0.000000e+00> : vector<16x1024xf32>
    %4 = tpu.matmul %2, %3, %cst {dimension_numbers = #tpu.dot_dimension_numbers<[1], [0], [0], [1], [0, 0, 1, 1], [], []>} : vector<16x32xbf16>, vector<32x1024xbf16>, vector<16x1024xf32> -> vector<16x1024xf32>
    %c0_5 = arith.constant 0 : index
    %c0_6 = arith.constant 0 : index
    %5 = vector.load %arg18[%c0_5, %c0_6] : memref<16x1024xf32, #tpu.memory_space<vmem>>, vector<16x1024xf32>
    tpu.vector_store %arg18[%c0_5, %c0_6], %4 {strides = array<i32>} : memref<16x1024xf32, #tpu.memory_space<vmem>>, vector<16x1024xf32>,
    %6 = vector.extract_strided_slice %1 {offsets = [0, 0], sizes = [16, 32], strides = [1, 1]} : vector<28x32xbf16> to vector<16x32xbf16>
    %c0_7 = arith.constant 0 : index
    %c0_8 = arith.constant 0 : index
    %7 = vector.load %arg4[%c0_7, %c0_8] : memref<32x128xbf16, #tpu.memory_space<vmem>>, vector<32x128xbf16>
    %cst_9 = arith.constant dense<0.000000e+00> : vector<16x128xf32>
    %8 = tpu.matmul %6, %7, %cst_9 {dimension_numbers = #tpu.dot_dimension_numbers<[1], [0], [0], [1], [0, 0, 1, 1], [], []>} : vector<16x32xbf16>, vector<32x128xbf16>, vector<16x128xf32> -> vector<16x128xf32>
    %c0_10 = arith.constant 0 : index
    %c896 = arith.constant 896 : index
    %9 = vector.load %arg18[%c0_10, %c896] : memref<16x1024xf32, #tpu.memory_space<vmem>>, vector<16x128xf32>
    %10 = arith.addf %9, %8 : vector<16x128xf32>
    %c0_11 = arith.constant 0 : index
    %c896_12 = arith.constant 896 : index
    %11 = vector.load %arg18[%c0_11, %c896_12] : memref<16x1024xf32, #tpu.memory_space<vmem>>, vector<16x128xf32>
    tpu.vector_store %arg18[%c0_11, %c896_12], %10 {strides = array<i32>} : memref<16x1024xf32, #tpu.memory_space<vmem>>, vector<16x128xf32>,
    %12 = vector.extract_strided_slice %1 {offsets = [2, 0], sizes = [16, 32], strides = [1, 1]} : vector<28x32xbf16> to vector<16x32xbf16>
    %c0_13 = arith.constant 0 : index
    %c0_14 = arith.constant 0 : index
    %13 = vector.load %arg5[%c0_13, %c0_14] : memref<32x128xbf16, #tpu.memory_space<vmem>>, vector<32x128xbf16>
    %cst_15 = arith.constant dense<0.000000e+00> : vector<16x128xf32>
    %14 = tpu.matmul %12, %13, %cst_15 {dimension_numbers = #tpu.dot_dimension_numbers<[1], [0], [0], [1], [0, 0, 1, 1], [], []>} : vector<16x32xbf16>, vector<32x128xbf16>, vector<16x128xf32> -> vector<16x128xf32>
    %c0_16 = arith.constant 0 : index
    %c512 = arith.constant 512 : index
    %15 = vector.load %arg18[%c0_16, %c512] : memref<16x1024xf32, #tpu.memory_space<vmem>>, vector<16x128xf32>
    %16 = arith.addf %15, %14 : vector<16x128xf32>
    %c0_17 = arith.constant 0 : index
    %c512_18 = arith.constant 512 : index
    %17 = vector.load %arg18[%c0_17, %c512_18] : memref<16x1024xf32, #tpu.memory_space<vmem>>, vector<16x128xf32>
    tpu.vector_store %arg18[%c0_17, %c512_18], %16 {strides = array<i32>} : memref<16x1024xf32, #tpu.memory_space<vmem>>, vector<16x128xf32>,
    %18 = vector.extract_strided_slice %1 {offsets = [3, 0], sizes = [16, 32], strides = [1, 1]} : vector<28x32xbf16> to vector<16x32xbf16>
    %c0_19 = arith.constant 0 : index
    %c0_20 = arith.constant 0 : index
    %19 = vector.load %arg6[%c0_19, %c0_20] : memref<32x256xbf16, #tpu.memory_space<vmem>>, vector<32x256xbf16>
    %cst_21 = arith.constant dense<0.000000e+00> : vector<16x256xf32>
    %20 = tpu.matmul %18, %19, %cst_21 {dimension_numbers = #tpu.dot_dimension_numbers<[1], [0], [0], [1], [0, 0, 1, 1], [], []>} : vector<16x32xbf16>, vector<32x256xbf16>, vector<16x256xf32> -> vector<16x256xf32>
    %c0_22 = arith.constant 0 : index
    %c768 = arith.constant 768 : index
    %21 = vector.load %arg18[%c0_22, %c768] : memref<16x1024xf32, #tpu.memory_space<vmem>>, vector<16x256xf32>
    %22 = arith.addf %21, %20 : vector<16x256xf32>
    %c0_23 = arith.constant 0 : index
    %c768_24 = arith.constant 768 : index
    %23 = vector.load %arg18[%c0_23, %c768_24] : memref<16x1024xf32, #tpu.memory_space<vmem>>, vector<16x256xf32>
    tpu.vector_store %arg18[%c0_23, %c768_24], %22 {strides = array<i32>} : memref<16x1024xf32, #tpu.memory_space<vmem>>, vector<16x256xf32>,
    %24 = vector.extract_strided_slice %1 {offsets = [4, 0], sizes = [16, 32], strides = [1, 1]} : vector<28x32xbf16> to vector<16x32xbf16>
    %c0_25 = arith.constant 0 : index
    %c0_26 = arith.constant 0 : index
    %25 = vector.load %arg7[%c0_25, %c0_26] : memref<32x384xbf16, #tpu.memory_space<vmem>>, vector<32x384xbf16>
    %cst_27 = arith.constant dense<0.000000e+00> : vector<16x384xf32>
    %26 = tpu.matmul %24, %25, %cst_27 {dimension_numbers = #tpu.dot_dimension_numbers<[1], [0], [0], [1], [0, 0, 1, 1], [], []>} : vector<16x32xbf16>, vector<32x384xbf16>, vector<16x384xf32> -> vector<16x384xf32>
    %c0_28 = arith.constant 0 : index
    %c384 = arith.constant 384 : index
    %27 = vector.load %arg18[%c0_28, %c384] : memref<16x1024xf32, #tpu.memory_space<vmem>>, vector<16x384xf32>
    %28 = arith.addf %27, %26 : vector<16x384xf32>
    %c0_29 = arith.constant 0 : index
    %c384_30 = arith.constant 384 : index
    %29 = vector.load %arg18[%c0_29, %c384_30] : memref<16x1024xf32, #tpu.memory_space<vmem>>, vector<16x384xf32>
    tpu.vector_store %arg18[%c0_29, %c384_30], %28 {strides = array<i32>} : memref<16x1024xf32, #tpu.memory_space<vmem>>, vector<16x384xf32>,
    %30 = vector.extract_strided_slice %1 {offsets = [5, 0], sizes = [16, 32], strides = [1, 1]} : vector<28x32xbf16> to vector<16x32xbf16>
    %c0_31 = arith.constant 0 : index
    %c0_32 = arith.constant 0 : index
    %31 = vector.load %arg8[%c0_31, %c0_32] : memref<32x256xbf16, #tpu.memory_space<vmem>>, vector<32x256xbf16>
    %cst_33 = arith.constant dense<0.000000e+00> : vector<16x256xf32>
    %32 = tpu.matmul %30, %31, %cst_33 {dimension_numbers = #tpu.dot_dimension_numbers<[1], [0], [0], [1], [0, 0, 1, 1], [], []>} : vector<16x32xbf16>, vector<32x256xbf16>, vector<16x256xf32> -> vector<16x256xf32>
    %c0_34 = arith.constant 0 : index
    %c256 = arith.constant 256 : index
    %33 = vector.load %arg18[%c0_34, %c256] : memref<16x1024xf32, #tpu.memory_space<vmem>>, vector<16x256xf32>
    %34 = arith.addf %33, %32 : vector<16x256xf32>
    %c0_35 = arith.constant 0 : index
    %c256_36 = arith.constant 256 : index
    %35 = vector.load %arg18[%c0_35, %c256_36] : memref<16x1024xf32, #tpu.memory_space<vmem>>, vector<16x256xf32>
    tpu.vector_store %arg18[%c0_35, %c256_36], %34 {strides = array<i32>} : memref<16x1024xf32, #tpu.memory_space<vmem>>, vector<16x256xf32>,
    %36 = vector.extract_strided_slice %1 {offsets = [7, 0], sizes = [16, 32], strides = [1, 1]} : vector<28x32xbf16> to vector<16x32xbf16>
    %c0_37 = arith.constant 0 : index
    %c0_38 = arith.constant 0 : index
    %37 = vector.load %arg9[%c0_37, %c0_38] : memref<32x256xbf16, #tpu.memory_space<vmem>>, vector<32x256xbf16>
    %cst_39 = arith.constant dense<0.000000e+00> : vector<16x256xf32>
    %38 = tpu.matmul %36, %37, %cst_39 {dimension_numbers = #tpu.dot_dimension_numbers<[1], [0], [0], [1], [0, 0, 1, 1], [], []>} : vector<16x32xbf16>, vector<32x256xbf16>, vector<16x256xf32> -> vector<16x256xf32>
    %c0_40 = arith.constant 0 : index
    %c256_41 = arith.constant 256 : index
    %39 = vector.load %arg18[%c0_40, %c256_41] : memref<16x1024xf32, #tpu.memory_space<vmem>>, vector<16x256xf32>
    %40 = arith.addf %39, %38 : vector<16x256xf32>
    %c0_42 = arith.constant 0 : index
    %c256_43 = arith.constant 256 : index
    %41 = vector.load %arg18[%c0_42, %c256_43] : memref<16x1024xf32, #tpu.memory_space<vmem>>, vector<16x256xf32>
    tpu.vector_store %arg18[%c0_42, %c256_43], %40 {strides = array<i32>} : memref<16x1024xf32, #tpu.memory_space<vmem>>, vector<16x256xf32>,
    %42 = vector.extract_strided_slice %1 {offsets = [8, 0], sizes = [16, 32], strides = [1, 1]} : vector<28x32xbf16> to vector<16x32xbf16>
    %c0_44 = arith.constant 0 : index
    %c0_45 = arith.constant 0 : index
    %43 = vector.load %arg10[%c0_44, %c0_45] : memref<32x384xbf16, #tpu.memory_space<vmem>>, vector<32x384xbf16>
    %cst_46 = arith.constant dense<0.000000e+00> : vector<16x384xf32>
    %44 = tpu.matmul %42, %43, %cst_46 {dimension_numbers = #tpu.dot_dimension_numbers<[1], [0], [0], [1], [0, 0, 1, 1], [], []>} : vector<16x32xbf16>, vector<32x384xbf16>, vector<16x384xf32> -> vector<16x384xf32>
    %c0_47 = arith.constant 0 : index
    %c384_48 = arith.constant 384 : index
    %45 = vector.load %arg18[%c0_47, %c384_48] : memref<16x1024xf32, #tpu.memory_space<vmem>>, vector<16x384xf32>
    %46 = arith.addf %45, %44 : vector<16x384xf32>
    %c0_49 = arith.constant 0 : index
    %c384_50 = arith.constant 384 : index
    %47 = vector.load %arg18[%c0_49, %c384_50] : memref<16x1024xf32, #tpu.memory_space<vmem>>, vector<16x384xf32>
    tpu.vector_store %arg18[%c0_49, %c384_50], %46 {strides = array<i32>} : memref<16x1024xf32, #tpu.memory_space<vmem>>, vector<16x384xf32>,
    %48 = vector.extract_strided_slice %1 {offsets = [9, 0], sizes = [16, 32], strides = [1, 1]} : vector<28x32xbf16> to vector<16x32xbf16>
    %c0_51 = arith.constant 0 : index
    %c0_52 = arith.constant 0 : index
    %49 = vector.load %arg11[%c0_51, %c0_52] : memref<32x256xbf16, #tpu.memory_space<vmem>>, vector<32x256xbf16>
    %cst_53 = arith.constant dense<0.000000e+00> : vector<16x256xf32>
    %50 = tpu.matmul %48, %49, %cst_53 {dimension_numbers = #tpu.dot_dimension_numbers<[1], [0], [0], [1], [0, 0, 1, 1], [], []>} : vector<16x32xbf16>, vector<32x256xbf16>, vector<16x256xf32> -> vector<16x256xf32>
    %c0_54 = arith.constant 0 : index
    %c768_55 = arith.constant 768 : index
    %51 = vector.load %arg18[%c0_54, %c768_55] : memref<16x1024xf32, #tpu.memory_space<vmem>>, vector<16x256xf32>
    %52 = arith.addf %51, %50 : vector<16x256xf32>
    %c0_56 = arith.constant 0 : index
    %c768_57 = arith.constant 768 : index
    %53 = vector.load %arg18[%c0_56, %c768_57] : memref<16x1024xf32, #tpu.memory_space<vmem>>, vector<16x256xf32>
    tpu.vector_store %arg18[%c0_56, %c768_57], %52 {strides = array<i32>} : memref<16x1024xf32, #tpu.memory_space<vmem>>, vector<16x256xf32>,
    %54 = vector.extract_strided_slice %1 {offsets = [10, 0], sizes = [16, 32], strides = [1, 1]} : vector<28x32xbf16> to vector<16x32xbf16>
    %c0_58 = arith.constant 0 : index
    %c0_59 = arith.constant 0 : index
    %55 = vector.load %arg12[%c0_58, %c0_59] : memref<32x128xbf16, #tpu.memory_space<vmem>>, vector<32x128xbf16>
    %cst_60 = arith.constant dense<0.000000e+00> : vector<16x128xf32>
    %56 = tpu.matmul %54, %55, %cst_60 {dimension_numbers = #tpu.dot_dimension_numbers<[1], [0], [0], [1], [0, 0, 1, 1], [], []>} : vector<16x32xbf16>, vector<32x128xbf16>, vector<16x128xf32> -> vector<16x128xf32>
    %c0_61 = arith.constant 0 : index
    %c512_62 = arith.constant 512 : index
    %57 = vector.load %arg18[%c0_61, %c512_62] : memref<16x1024xf32, #tpu.memory_space<vmem>>, vector<16x128xf32>
    %58 = arith.addf %57, %56 : vector<16x128xf32>
    %c0_63 = arith.constant 0 : index
    %c512_64 = arith.constant 512 : index
    %59 = vector.load %arg18[%c0_63, %c512_64] : memref<16x1024xf32, #tpu.memory_space<vmem>>, vector<16x128xf32>
    tpu.vector_store %arg18[%c0_63, %c512_64], %58 {strides = array<i32>} : memref<16x1024xf32, #tpu.memory_space<vmem>>, vector<16x128xf32>,
    %60 = vector.extract_strided_slice %1 {offsets = [12, 0], sizes = [16, 32], strides = [1, 1]} : vector<28x32xbf16> to vector<16x32xbf16>
    %c0_65 = arith.constant 0 : index
    %c0_66 = arith.constant 0 : index
    %61 = vector.load %arg13[%c0_65, %c0_66] : memref<32x128xbf16, #tpu.memory_space<vmem>>, vector<32x128xbf16>
    %cst_67 = arith.constant dense<0.000000e+00> : vector<16x128xf32>
    %62 = tpu.matmul %60, %61, %cst_67 {dimension_numbers = #tpu.dot_dimension_numbers<[1], [0], [0], [1], [0, 0, 1, 1], [], []>} : vector<16x32xbf16>, vector<32x128xbf16>, vector<16x128xf32> -> vector<16x128xf32>
    %c0_68 = arith.constant 0 : index
    %c896_69 = arith.constant 896 : index
    %63 = vector.load %arg18[%c0_68, %c896_69] : memref<16x1024xf32, #tpu.memory_space<vmem>>, vector<16x128xf32>
    %64 = arith.addf %63, %62 : vector<16x128xf32>
    %c0_70 = arith.constant 0 : index
    %c896_71 = arith.constant 896 : index
    %65 = vector.load %arg18[%c0_70, %c896_71] : memref<16x1024xf32, #tpu.memory_space<vmem>>, vector<16x128xf32>
    tpu.vector_store %arg18[%c0_70, %c896_71], %64 {strides = array<i32>} : memref<16x1024xf32, #tpu.memory_space<vmem>>, vector<16x128xf32>,
    %c0_72 = arith.constant 0 : index
    %c0_73 = arith.constant 0 : index
    %66 = vector.load %arg18[%c0_72, %c0_73] : memref<16x1024xf32, #tpu.memory_space<vmem>>, vector<16x1024xf32>
    %c0_74 = arith.constant 0 : index
    %c0_75 = arith.constant 0 : index
    %67 = vector.load %arg14[%c0_74, %c0_75] : memref<1x1024xf32, #tpu.memory_space<vmem>>, vector<1x1024xf32>
    %68 = vector.broadcast %67 : vector<1x1024xf32> to vector<16x1024xf32>
    %69 = arith.addf %66, %68 : vector<16x1024xf32>
    %cst_76 = arith.constant 0.000000e+00 : f32
    %70 = vector.broadcast %cst_76 : f32 to vector<16x1024xf32>
    %71 = arith.maximumf %69, %70 : vector<16x1024xf32>
    %72 = arith.truncf %71 : vector<16x1024xf32> to vector<16x1024xbf16>
    %c0_77 = arith.constant 0 : index
    %c0_78 = arith.constant 0 : index
    %73 = vector.load %arg15[%c0_77, %c0_78] : memref<1024x12xbf16, #tpu.memory_space<vmem>>, vector<1024x12xbf16>
    %cst_79 = arith.constant dense<0.000000e+00> : vector<16x12xf32>
    %74 = tpu.matmul %72, %73, %cst_79 {dimension_numbers = #tpu.dot_dimension_numbers<[1], [0], [0], [1], [0, 0, 1, 1], [], []>} : vector<16x1024xbf16>, vector<1024x12xbf16>, vector<16x12xf32> -> vector<16x12xf32>
    %c0_80 = arith.constant 0 : index
    %c0_81 = arith.constant 0 : index
    %75 = vector.load %arg16[%c0_80, %c0_81] : memref<1x12xf32, #tpu.memory_space<vmem>>, vector<1x12xf32>
    %76 = vector.broadcast %75 : vector<1x12xf32> to vector<16x12xf32>
    %77 = arith.addf %74, %76 : vector<16x12xf32>
    %c0_82 = arith.constant 0 : index
    %c0_83 = arith.constant 0 : index
    %c0_84 = arith.constant 0 : index
    %78 = vector.load %arg17[%c0_82, %c0_83, %c0_84] : memref<1x16x12xf32, #tpu.memory_space<vmem>>, vector<1x16x12xf32>
    %79 = vector.shape_cast %78 : vector<1x16x12xf32> to vector<16x12xf32>
    %80 = vector.shape_cast %77 : vector<16x12xf32> to vector<1x16x12xf32>
    tpu.vector_store %arg17[%c0_82, %c0_83, %c0_84], %80 {strides = array<i32>} : memref<1x16x12xf32, #tpu.memory_space<vmem>>, vector<1x16x12xf32>,
    return
  }
  func.func @transform_0(%arg0: i32, %arg1: i32) -> (i32, i32, i32, i32) {
    %c0_i32 = arith.constant 0 : i32
    %c0_i32_0 = arith.constant 0 : i32
    %c0_i32_1 = arith.constant 0 : i32
    return %arg0, %arg1, %c0_i32, %c0_i32_0 : i32, i32, i32, i32
  }
  func.func @transform_1(%arg0: i32, %arg1: i32) -> (i32, i32) {
    %c0_i32 = arith.constant 0 : i32
    %c0_i32_0 = arith.constant 0 : i32
    %c0_i32_1 = arith.constant 0 : i32
    return %c0_i32, %c0_i32_0 : i32, i32
  }
  func.func @transform_2(%arg0: i32, %arg1: i32) -> (i32, i32) {
    %c0_i32 = arith.constant 0 : i32
    %c0_i32_0 = arith.constant 0 : i32
    %c0_i32_1 = arith.constant 0 : i32
    return %c0_i32, %c0_i32_0 : i32, i32
  }
  func.func @transform_3(%arg0: i32, %arg1: i32) -> (i32, i32) {
    %c0_i32 = arith.constant 0 : i32
    %c0_i32_0 = arith.constant 0 : i32
    %c0_i32_1 = arith.constant 0 : i32
    return %c0_i32, %c0_i32_0 : i32, i32
  }
  func.func @transform_4(%arg0: i32, %arg1: i32) -> (i32, i32) {
    %c0_i32 = arith.constant 0 : i32
    %c0_i32_0 = arith.constant 0 : i32
    %c0_i32_1 = arith.constant 0 : i32
    return %c0_i32, %c0_i32_0 : i32, i32
  }
  func.func @transform_5(%arg0: i32, %arg1: i32) -> (i32, i32) {
    %c0_i32 = arith.constant 0 : i32
    %c0_i32_0 = arith.constant 0 : i32
    %c0_i32_1 = arith.constant 0 : i32
    return %c0_i32, %c0_i32_0 : i32, i32
  }
  func.func @transform_6(%arg0: i32, %arg1: i32) -> (i32, i32) {
    %c0_i32 = arith.constant 0 : i32
    %c0_i32_0 = arith.constant 0 : i32
    %c0_i32_1 = arith.constant 0 : i32
    return %c0_i32, %c0_i32_0 : i32, i32
  }
  func.func @transform_7(%arg0: i32, %arg1: i32) -> (i32, i32) {
    %c0_i32 = arith.constant 0 : i32
    %c0_i32_0 = arith.constant 0 : i32
    %c0_i32_1 = arith.constant 0 : i32
    return %c0_i32, %c0_i32_0 : i32, i32
  }
  func.func @transform_8(%arg0: i32, %arg1: i32) -> (i32, i32) {
    %c0_i32 = arith.constant 0 : i32
    %c0_i32_0 = arith.constant 0 : i32
    %c0_i32_1 = arith.constant 0 : i32
    return %c0_i32, %c0_i32_0 : i32, i32
  }
  func.func @transform_9(%arg0: i32, %arg1: i32) -> (i32, i32) {
    %c0_i32 = arith.constant 0 : i32
    %c0_i32_0 = arith.constant 0 : i32
    %c0_i32_1 = arith.constant 0 : i32
    return %c0_i32, %c0_i32_0 : i32, i32
  }
  func.func @transform_10(%arg0: i32, %arg1: i32) -> (i32, i32) {
    %c0_i32 = arith.constant 0 : i32
    %c0_i32_0 = arith.constant 0 : i32
    %c0_i32_1 = arith.constant 0 : i32
    return %c0_i32, %c0_i32_0 : i32, i32
  }
  func.func @transform_11(%arg0: i32, %arg1: i32) -> (i32, i32) {
    %c0_i32 = arith.constant 0 : i32
    %c0_i32_0 = arith.constant 0 : i32
    %c0_i32_1 = arith.constant 0 : i32
    return %c0_i32, %c0_i32_0 : i32, i32
  }
  func.func @transform_12(%arg0: i32, %arg1: i32) -> (i32, i32) {
    %c0_i32 = arith.constant 0 : i32
    %c0_i32_0 = arith.constant 0 : i32
    %c0_i32_1 = arith.constant 0 : i32
    return %c0_i32, %c0_i32_0 : i32, i32
  }
  func.func @transform_13(%arg0: i32, %arg1: i32) -> (i32, i32) {
    %c0_i32 = arith.constant 0 : i32
    %c0_i32_0 = arith.constant 0 : i32
    %c0_i32_1 = arith.constant 0 : i32
    return %c0_i32, %c0_i32_0 : i32, i32
  }
  func.func @transform_14(%arg0: i32, %arg1: i32) -> (i32, i32) {
    %c0_i32 = arith.constant 0 : i32
    %c0_i32_0 = arith.constant 0 : i32
    %c0_i32_1 = arith.constant 0 : i32
    return %c0_i32, %c0_i32_0 : i32, i32
  }
  func.func @transform_15(%arg0: i32, %arg1: i32) -> (i32, i32, i32) {
    %c0_i32 = arith.constant 0 : i32
    %c0_i32_0 = arith.constant 0 : i32
    return %arg0, %arg1, %c0_i32 : i32, i32, i32
  }
}

module attributes {stable_mosaic.version = 11 : i64} {
  func.func @_summarization_kernel(%arg0: i32, %arg1: i32, %arg2: memref<1x1x28x32xbf16, #tpu.memory_space<vmem>>, %arg3: memref<32x1024xbf16, #tpu.memory_space<vmem>>, %arg4: memref<32x128xbf16, #tpu.memory_space<vmem>>, %arg5: memref<32x128xbf16, #tpu.memory_space<vmem>>, %arg6: memref<32x256xbf16, #tpu.memory_space<vmem>>, %arg7: memref<32x384xbf16, #tpu.memory_space<vmem>>, %arg8: memref<32x256xbf16, #tpu.memory_space<vmem>>, %arg9: memref<32x256xbf16, #tpu.memory_space<vmem>>, %arg10: memref<32x384xbf16, #tpu.memory_space<vmem>>, %arg11: memref<32x256xbf16, #tpu.memory_space<vmem>>, %arg12: memref<32x128xbf16, #tpu.memory_space<vmem>>, %arg13: memref<32x128xbf16, #tpu.memory_space<vmem>>, %arg14: memref<1x1024xf32, #tpu.memory_space<vmem>>, %arg15: memref<1024x12xbf16, #tpu.memory_space<vmem>>, %arg16: memref<1x12xf32, #tpu.memory_space<vmem>>, %arg17: memref<1x16x12xf32, #tpu.memory_space<vmem>>, %arg18: memref<16x1024xf32, #tpu.memory_space<vmem>>) attributes {dimension_semantics = [#tpu.dimension_semantics<parallel>, #tpu.dimension_semantics<parallel>], iteration_bounds = array<i64: 2, 3>, scalar_prefetch = 0 : i64, scratch_operands = 1 : i64, tpu.core_type = #tpu.core_type<tc>, window_params = [{transform_indices = @transform_0, window_bounds = array<i64: 1, 1, 28, 32>}, {pipeline_mode = #tpu.pipeline_mode<synchronous>, transform_indices = @transform_1, window_bounds = array<i64: 32, 1024>}, {pipeline_mode = #tpu.pipeline_mode<synchronous>, transform_indices = @transform_2, window_bounds = array<i64: 32, 128>}, {pipeline_mode = #tpu.pipeline_mode<synchronous>, transform_indices = @transform_3, window_bounds = array<i64: 32, 128>}, {pipeline_mode = #tpu.pipeline_mode<synchronous>, transform_indices = @transform_4, window_bounds = array<i64: 32, 256>}, {pipeline_mode = #tpu.pipeline_mode<synchronous>, transform_indices = @transform_5, window_bounds = array<i64: 32, 384>}, {pipeline_mode = #tpu.pipeline_mode<synchronous>, transform_indices = @transform_6, window_bounds = array<i64: 32, 256>}, {pipeline_mode = #tpu.pipeline_mode<synchronous>, transform_indices = @transform_7, window_bounds = array<i64: 32, 256>}, {pipeline_mode = #tpu.pipeline_mode<synchronous>, transform_indices = @transform_8, window_bounds = array<i64: 32, 384>}, {pipeline_mode = #tpu.pipeline_mode<synchronous>, transform_indices = @transform_9, window_bounds = array<i64: 32, 256>}, {pipeline_mode = #tpu.pipeline_mode<synchronous>, transform_indices = @transform_10, window_bounds = array<i64: 32, 128>}, {pipeline_mode = #tpu.pipeline_mode<synchronous>, transform_indices = @transform_11, window_bounds = array<i64: 32, 128>}, {pipeline_mode = #tpu.pipeline_mode<synchronous>, transform_indices = @transform_12, window_bounds = array<i64: 1, 1024>}, {pipeline_mode = #tpu.pipeline_mode<synchronous>, transform_indices = @transform_13, window_bounds = array<i64: 1024, 12>}, {pipeline_mode = #tpu.pipeline_mode<synchronous>, transform_indices = @transform_14, window_bounds = array<i64: 1, 12>}, {transform_indices = @transform_15, window_bounds = array<i64: 1, 16, 12>}]} {
    %c0 = arith.constant 0 : index
    %c0_0 = arith.constant 0 : index
    %c0_1 = arith.constant 0 : index
    %c0_2 = arith.constant 0 : index
    %0 = vector.load %arg2[%c0, %c0_0, %c0_1, %c0_2] : memref<1x1x28x32xbf16, #tpu.memory_space<vmem>>, vector<1x1x28x32xbf16>
    %1 = vector.shape_cast %0 : vector<1x1x28x32xbf16> to vector<28x32xbf16>
    %2 = vector.extract_strided_slice %1 {offsets = [6, 0], sizes = [16, 32], strides = [1, 1]} : vector<28x32xbf16> to vector<16x32xbf16>
    %c0_3 = arith.constant 0 : index
    %c0_4 = arith.constant 0 : index
    %3 = vector.load %arg3[%c0_3, %c0_4] : memref<32x1024xbf16, #tpu.memory_space<vmem>>, vector<32x1024xbf16>
    %cst = arith.constant dense<0.000000e+00> : vector<16x1024xf32>
    %4 = tpu.matmul %2, %3, %cst {dimension_numbers = #tpu.dot_dimension_numbers<[1], [0], [0], [1], [0, 0, 1, 1], [], []>} : vector<16x32xbf16>, vector<32x1024xbf16>, vector<16x1024xf32> -> vector<16x1024xf32>
    %c0_5 = arith.constant 0 : index
    %c0_6 = arith.constant 0 : index
    %5 = vector.load %arg18[%c0_5, %c0_6] : memref<16x1024xf32, #tpu.memory_space<vmem>>, vector<16x1024xf32>
    tpu.vector_store %arg18[%c0_5, %c0_6], %4 {strides = array<i32>} : memref<16x1024xf32, #tpu.memory_space<vmem>>, vector<16x1024xf32>,
    %6 = vector.extract_strided_slice %1 {offsets = [0, 0], sizes = [16, 32], strides = [1, 1]} : vector<28x32xbf16> to vector<16x32xbf16>
    %c0_7 = arith.constant 0 : index
    %c0_8 = arith.constant 0 : index
    %7 = vector.load %arg4[%c0_7, %c0_8] : memref<32x128xbf16, #tpu.memory_space<vmem>>, vector<32x128xbf16>
    %cst_9 = arith.constant dense<0.000000e+00> : vector<16x128xf32>
    %8 = tpu.matmul %6, %7, %cst_9 {dimension_numbers = #tpu.dot_dimension_numbers<[1], [0], [0], [1], [0, 0, 1, 1], [], []>} : vector<16x32xbf16>, vector<32x128xbf16>, vector<16x128xf32> -> vector<16x128xf32>
    %c0_10 = arith.constant 0 : index
    %c896 = arith.constant 896 : index
    %9 = vector.load %arg18[%c0_10, %c896] : memref<16x1024xf32, #tpu.memory_space<vmem>>, vector<16x128xf32>
    %10 = arith.addf %9, %8 : vector<16x128xf32>
    %c0_11 = arith.constant 0 : index
    %c896_12 = arith.constant 896 : index
    %11 = vector.load %arg18[%c0_11, %c896_12] : memref<16x1024xf32, #tpu.memory_space<vmem>>, vector<16x128xf32>
    tpu.vector_store %arg18[%c0_11, %c896_12], %10 {strides = array<i32>} : memref<16x1024xf32, #tpu.memory_space<vmem>>, vector<16x128xf32>,
    %12 = vector.extract_strided_slice %1 {offsets = [2, 0], sizes = [16, 32], strides = [1, 1]} : vector<28x32xbf16> to vector<16x32xbf16>
    %c0_13 = arith.constant 0 : index
    %c0_14 = arith.constant 0 : index
    %13 = vector.load %arg5[%c0_13, %c0_14] : memref<32x128xbf16, #tpu.memory_space<vmem>>, vector<32x128xbf16>
    %cst_15 = arith.constant dense<0.000000e+00> : vector<16x128xf32>
    %14 = tpu.matmul %12, %13, %cst_15 {dimension_numbers = #tpu.dot_dimension_numbers<[1], [0], [0], [1], [0, 0, 1, 1], [], []>} : vector<16x32xbf16>, vector<32x128xbf16>, vector<16x128xf32> -> vector<16x128xf32>
    %c0_16 = arith.constant 0 : index
    %c512 = arith.constant 512 : index
    %15 = vector.load %arg18[%c0_16, %c512] : memref<16x1024xf32, #tpu.memory_space<vmem>>, vector<16x128xf32>
    %16 = arith.addf %15, %14 : vector<16x128xf32>
    %c0_17 = arith.constant 0 : index
    %c512_18 = arith.constant 512 : index
    %17 = vector.load %arg18[%c0_17, %c512_18] : memref<16x1024xf32, #tpu.memory_space<vmem>>, vector<16x128xf32>
    tpu.vector_store %arg18[%c0_17, %c512_18], %16 {strides = array<i32>} : memref<16x1024xf32, #tpu.memory_space<vmem>>, vector<16x128xf32>,
    %18 = vector.extract_strided_slice %1 {offsets = [3, 0], sizes = [16, 32], strides = [1, 1]} : vector<28x32xbf16> to vector<16x32xbf16>
    %c0_19 = arith.constant 0 : index
    %c0_20 = arith.constant 0 : index
    %19 = vector.load %arg6[%c0_19, %c0_20] : memref<32x256xbf16, #tpu.memory_space<vmem>>, vector<32x256xbf16>
    %cst_21 = arith.constant dense<0.000000e+00> : vector<16x256xf32>
    %20 = tpu.matmul %18, %19, %cst_21 {dimension_numbers = #tpu.dot_dimension_numbers<[1], [0], [0], [1], [0, 0, 1, 1], [], []>} : vector<16x32xbf16>, vector<32x256xbf16>, vector<16x256xf32> -> vector<16x256xf32>
    %c0_22 = arith.constant 0 : index
    %c768 = arith.constant 768 : index
    %21 = vector.load %arg18[%c0_22, %c768] : memref<16x1024xf32, #tpu.memory_space<vmem>>, vector<16x256xf32>
    %22 = arith.addf %21, %20 : vector<16x256xf32>
    %c0_23 = arith.constant 0 : index
    %c768_24 = arith.constant 768 : index
    %23 = vector.load %arg18[%c0_23, %c768_24] : memref<16x1024xf32, #tpu.memory_space<vmem>>, vector<16x256xf32>
    tpu.vector_store %arg18[%c0_23, %c768_24], %22 {strides = array<i32>} : memref<16x1024xf32, #tpu.memory_space<vmem>>, vector<16x256xf32>,
    %24 = vector.extract_strided_slice %1 {offsets = [4, 0], sizes = [16, 32], strides = [1, 1]} : vector<28x32xbf16> to vector<16x32xbf16>
    %c0_25 = arith.constant 0 : index
    %c0_26 = arith.constant 0 : index
    %25 = vector.load %arg7[%c0_25, %c0_26] : memref<32x384xbf16, #tpu.memory_space<vmem>>, vector<32x384xbf16>
    %cst_27 = arith.constant dense<0.000000e+00> : vector<16x384xf32>
    %26 = tpu.matmul %24, %25, %cst_27 {dimension_numbers = #tpu.dot_dimension_numbers<[1], [0], [0], [1], [0, 0, 1, 1], [], []>} : vector<16x32xbf16>, vector<32x384xbf16>, vector<16x384xf32> -> vector<16x384xf32>
    %c0_28 = arith.constant 0 : index
    %c384 = arith.constant 384 : index
    %27 = vector.load %arg18[%c0_28, %c384] : memref<16x1024xf32, #tpu.memory_space<vmem>>, vector<16x384xf32>
    %28 = arith.addf %27, %26 : vector<16x384xf32>
    %c0_29 = arith.constant 0 : index
    %c384_30 = arith.constant 384 : index
    %29 = vector.load %arg18[%c0_29, %c384_30] : memref<16x1024xf32, #tpu.memory_space<vmem>>, vector<16x384xf32>
    tpu.vector_store %arg18[%c0_29, %c384_30], %28 {strides = array<i32>} : memref<16x1024xf32, #tpu.memory_space<vmem>>, vector<16x384xf32>,
    %30 = vector.extract_strided_slice %1 {offsets = [5, 0], sizes = [16, 32], strides = [1, 1]} : vector<28x32xbf16> to vector<16x32xbf16>
    %c0_31 = arith.constant 0 : index
    %c0_32 = arith.constant 0 : index
    %31 = vector.load %arg8[%c0_31, %c0_32] : memref<32x256xbf16, #tpu.memory_space<vmem>>, vector<32x256xbf16>
    %cst_33 = arith.constant dense<0.000000e+00> : vector<16x256xf32>
    %32 = tpu.matmul %30, %31, %cst_33 {dimension_numbers = #tpu.dot_dimension_numbers<[1], [0], [0], [1], [0, 0, 1, 1], [], []>} : vector<16x32xbf16>, vector<32x256xbf16>, vector<16x256xf32> -> vector<16x256xf32>
    %c0_34 = arith.constant 0 : index
    %c256 = arith.constant 256 : index
    %33 = vector.load %arg18[%c0_34, %c256] : memref<16x1024xf32, #tpu.memory_space<vmem>>, vector<16x256xf32>
    %34 = arith.addf %33, %32 : vector<16x256xf32>
    %c0_35 = arith.constant 0 : index
    %c256_36 = arith.constant 256 : index
    %35 = vector.load %arg18[%c0_35, %c256_36] : memref<16x1024xf32, #tpu.memory_space<vmem>>, vector<16x256xf32>
    tpu.vector_store %arg18[%c0_35, %c256_36], %34 {strides = array<i32>} : memref<16x1024xf32, #tpu.memory_space<vmem>>, vector<16x256xf32>,
    %36 = vector.extract_strided_slice %1 {offsets = [7, 0], sizes = [16, 32], strides = [1, 1]} : vector<28x32xbf16> to vector<16x32xbf16>
    %c0_37 = arith.constant 0 : index
    %c0_38 = arith.constant 0 : index
    %37 = vector.load %arg9[%c0_37, %c0_38] : memref<32x256xbf16, #tpu.memory_space<vmem>>, vector<32x256xbf16>
    %cst_39 = arith.constant dense<0.000000e+00> : vector<16x256xf32>
    %38 = tpu.matmul %36, %37, %cst_39 {dimension_numbers = #tpu.dot_dimension_numbers<[1], [0], [0], [1], [0, 0, 1, 1], [], []>} : vector<16x32xbf16>, vector<32x256xbf16>, vector<16x256xf32> -> vector<16x256xf32>
    %c0_40 = arith.constant 0 : index
    %c256_41 = arith.constant 256 : index
    %39 = vector.load %arg18[%c0_40, %c256_41] : memref<16x1024xf32, #tpu.memory_space<vmem>>, vector<16x256xf32>
    %40 = arith.addf %39, %38 : vector<16x256xf32>
    %c0_42 = arith.constant 0 : index
    %c256_43 = arith.constant 256 : index
    %41 = vector.load %arg18[%c0_42, %c256_43] : memref<16x1024xf32, #tpu.memory_space<vmem>>, vector<16x256xf32>
    tpu.vector_store %arg18[%c0_42, %c256_43], %40 {strides = array<i32>} : memref<16x1024xf32, #tpu.memory_space<vmem>>, vector<16x256xf32>,
    %42 = vector.extract_strided_slice %1 {offsets = [8, 0], sizes = [16, 32], strides = [1, 1]} : vector<28x32xbf16> to vector<16x32xbf16>
    %c0_44 = arith.constant 0 : index
    %c0_45 = arith.constant 0 : index
    %43 = vector.load %arg10[%c0_44, %c0_45] : memref<32x384xbf16, #tpu.memory_space<vmem>>, vector<32x384xbf16>
    %cst_46 = arith.constant dense<0.000000e+00> : vector<16x384xf32>
    %44 = tpu.matmul %42, %43, %cst_46 {dimension_numbers = #tpu.dot_dimension_numbers<[1], [0], [0], [1], [0, 0, 1, 1], [], []>} : vector<16x32xbf16>, vector<32x384xbf16>, vector<16x384xf32> -> vector<16x384xf32>
    %c0_47 = arith.constant 0 : index
    %c384_48 = arith.constant 384 : index
    %45 = vector.load %arg18[%c0_47, %c384_48] : memref<16x1024xf32, #tpu.memory_space<vmem>>, vector<16x384xf32>
    %46 = arith.addf %45, %44 : vector<16x384xf32>
    %c0_49 = arith.constant 0 : index
    %c384_50 = arith.constant 384 : index
    %47 = vector.load %arg18[%c0_49, %c384_50] : memref<16x1024xf32, #tpu.memory_space<vmem>>, vector<16x384xf32>
    tpu.vector_store %arg18[%c0_49, %c384_50], %46 {strides = array<i32>} : memref<16x1024xf32, #tpu.memory_space<vmem>>, vector<16x384xf32>,
    %48 = vector.extract_strided_slice %1 {offsets = [9, 0], sizes = [16, 32], strides = [1, 1]} : vector<28x32xbf16> to vector<16x32xbf16>
    %c0_51 = arith.constant 0 : index
    %c0_52 = arith.constant 0 : index
    %49 = vector.load %arg11[%c0_51, %c0_52] : memref<32x256xbf16, #tpu.memory_space<vmem>>, vector<32x256xbf16>
    %cst_53 = arith.constant dense<0.000000e+00> : vector<16x256xf32>
    %50 = tpu.matmul %48, %49, %cst_53 {dimension_numbers = #tpu.dot_dimension_numbers<[1], [0], [0], [1], [0, 0, 1, 1], [], []>} : vector<16x32xbf16>, vector<32x256xbf16>, vector<16x256xf32> -> vector<16x256xf32>
    %c0_54 = arith.constant 0 : index
    %c768_55 = arith.constant 768 : index
    %51 = vector.load %arg18[%c0_54, %c768_55] : memref<16x1024xf32, #tpu.memory_space<vmem>>, vector<16x256xf32>
    %52 = arith.addf %51, %50 : vector<16x256xf32>
    %c0_56 = arith.constant 0 : index
    %c768_57 = arith.constant 768 : index
    %53 = vector.load %arg18[%c0_56, %c768_57] : memref<16x1024xf32, #tpu.memory_space<vmem>>, vector<16x256xf32>
    tpu.vector_store %arg18[%c0_56, %c768_57], %52 {strides = array<i32>} : memref<16x1024xf32, #tpu.memory_space<vmem>>, vector<16x256xf32>,
    %54 = vector.extract_strided_slice %1 {offsets = [10, 0], sizes = [16, 32], strides = [1, 1]} : vector<28x32xbf16> to vector<16x32xbf16>
    %c0_58 = arith.constant 0 : index
    %c0_59 = arith.constant 0 : index
    %55 = vector.load %arg12[%c0_58, %c0_59] : memref<32x128xbf16, #tpu.memory_space<vmem>>, vector<32x128xbf16>
    %cst_60 = arith.constant dense<0.000000e+00> : vector<16x128xf32>
    %56 = tpu.matmul %54, %55, %cst_60 {dimension_numbers = #tpu.dot_dimension_numbers<[1], [0], [0], [1], [0, 0, 1, 1], [], []>} : vector<16x32xbf16>, vector<32x128xbf16>, vector<16x128xf32> -> vector<16x128xf32>
    %c0_61 = arith.constant 0 : index
    %c512_62 = arith.constant 512 : index
    %57 = vector.load %arg18[%c0_61, %c512_62] : memref<16x1024xf32, #tpu.memory_space<vmem>>, vector<16x128xf32>
    %58 = arith.addf %57, %56 : vector<16x128xf32>
    %c0_63 = arith.constant 0 : index
    %c512_64 = arith.constant 512 : index
    %59 = vector.load %arg18[%c0_63, %c512_64] : memref<16x1024xf32, #tpu.memory_space<vmem>>, vector<16x128xf32>
    tpu.vector_store %arg18[%c0_63, %c512_64], %58 {strides = array<i32>} : memref<16x1024xf32, #tpu.memory_space<vmem>>, vector<16x128xf32>,
    %60 = vector.extract_strided_slice %1 {offsets = [12, 0], sizes = [16, 32], strides = [1, 1]} : vector<28x32xbf16> to vector<16x32xbf16>
    %c0_65 = arith.constant 0 : index
    %c0_66 = arith.constant 0 : index
    %61 = vector.load %arg13[%c0_65, %c0_66] : memref<32x128xbf16, #tpu.memory_space<vmem>>, vector<32x128xbf16>
    %cst_67 = arith.constant dense<0.000000e+00> : vector<16x128xf32>
    %62 = tpu.matmul %60, %61, %cst_67 {dimension_numbers = #tpu.dot_dimension_numbers<[1], [0], [0], [1], [0, 0, 1, 1], [], []>} : vector<16x32xbf16>, vector<32x128xbf16>, vector<16x128xf32> -> vector<16x128xf32>
    %c0_68 = arith.constant 0 : index
    %c896_69 = arith.constant 896 : index
    %63 = vector.load %arg18[%c0_68, %c896_69] : memref<16x1024xf32, #tpu.memory_space<vmem>>, vector<16x128xf32>
    %64 = arith.addf %63, %62 : vector<16x128xf32>
    %c0_70 = arith.constant 0 : index
    %c896_71 = arith.constant 896 : index
    %65 = vector.load %arg18[%c0_70, %c896_71] : memref<16x1024xf32, #tpu.memory_space<vmem>>, vector<16x128xf32>
    tpu.vector_store %arg18[%c0_70, %c896_71], %64 {strides = array<i32>} : memref<16x1024xf32, #tpu.memory_space<vmem>>, vector<16x128xf32>,
    %c0_72 = arith.constant 0 : index
    %c0_73 = arith.constant 0 : index
    %66 = vector.load %arg18[%c0_72, %c0_73] : memref<16x1024xf32, #tpu.memory_space<vmem>>, vector<16x1024xf32>
    %c0_74 = arith.constant 0 : index
    %c0_75 = arith.constant 0 : index
    %67 = vector.load %arg14[%c0_74, %c0_75] : memref<1x1024xf32, #tpu.memory_space<vmem>>, vector<1x1024xf32>
    %68 = vector.broadcast %67 : vector<1x1024xf32> to vector<16x1024xf32>
    %69 = arith.addf %66, %68 : vector<16x1024xf32>
    %cst_76 = arith.constant 0.000000e+00 : f32
    %70 = vector.broadcast %cst_76 : f32 to vector<16x1024xf32>
    %71 = arith.maximumf %69, %70 : vector<16x1024xf32>
    %72 = arith.truncf %71 : vector<16x1024xf32> to vector<16x1024xbf16>
    %c0_77 = arith.constant 0 : index
    %c0_78 = arith.constant 0 : index
    %73 = vector.load %arg15[%c0_77, %c0_78] : memref<1024x12xbf16, #tpu.memory_space<vmem>>, vector<1024x12xbf16>
    %cst_79 = arith.constant dense<0.000000e+00> : vector<16x12xf32>
    %74 = tpu.matmul %72, %73, %cst_79 {dimension_numbers = #tpu.dot_dimension_numbers<[1], [0], [0], [1], [0, 0, 1, 1], [], []>} : vector<16x1024xbf16>, vector<1024x12xbf16>, vector<16x12xf32> -> vector<16x12xf32>
    %c0_80 = arith.constant 0 : index
    %c0_81 = arith.constant 0 : index
    %75 = vector.load %arg16[%c0_80, %c0_81] : memref<1x12xf32, #tpu.memory_space<vmem>>, vector<1x12xf32>
    %76 = vector.broadcast %75 : vector<1x12xf32> to vector<16x12xf32>
    %77 = arith.addf %74, %76 : vector<16x12xf32>
    %c0_82 = arith.constant 0 : index
    %c0_83 = arith.constant 0 : index
    %c0_84 = arith.constant 0 : index
    %78 = vector.load %arg17[%c0_82, %c0_83, %c0_84] : memref<1x16x12xf32, #tpu.memory_space<vmem>>, vector<1x16x12xf32>
    %79 = vector.shape_cast %78 : vector<1x16x12xf32> to vector<16x12xf32>
    %80 = vector.shape_cast %77 : vector<16x12xf32> to vector<1x16x12xf32>
    tpu.vector_store %arg17[%c0_82, %c0_83, %c0_84], %80 {strides = array<i32>} : memref<1x16x12xf32, #tpu.memory_space<vmem>>, vector<1x16x12xf32>,
    return
  }
  func.func @transform_0(%arg0: i32, %arg1: i32) -> (i32, i32, i32, i32) {
    %c0_i32 = arith.constant 0 : i32
    %c0_i32_0 = arith.constant 0 : i32
    %c0_i32_1 = arith.constant 0 : i32
    return %arg0, %arg1, %c0_i32, %c0_i32_0 : i32, i32, i32, i32
  }
  func.func @transform_1(%arg0: i32, %arg1: i32) -> (i32, i32) {
    %c0_i32 = arith.constant 0 : i32
    %c0_i32_0 = arith.constant 0 : i32
    %c0_i32_1 = arith.constant 0 : i32
    return %c0_i32, %c0_i32_0 : i32, i32
  }
  func.func @transform_2(%arg0: i32, %arg1: i32) -> (i32, i32) {
    %c0_i32 = arith.constant 0 : i32
    %c0_i32_0 = arith.constant 0 : i32
    %c0_i32_1 = arith.constant 0 : i32
    return %c0_i32, %c0_i32_0 : i32, i32
  }
  func.func @transform_3(%arg0: i32, %arg1: i32) -> (i32, i32) {
    %c0_i32 = arith.constant 0 : i32
    %c0_i32_0 = arith.constant 0 : i32
    %c0_i32_1 = arith.constant 0 : i32
    return %c0_i32, %c0_i32_0 : i32, i32
  }
  func.func @transform_4(%arg0: i32, %arg1: i32) -> (i32, i32) {
    %c0_i32 = arith.constant 0 : i32
    %c0_i32_0 = arith.constant 0 : i32
    %c0_i32_1 = arith.constant 0 : i32
    return %c0_i32, %c0_i32_0 : i32, i32
  }
  func.func @transform_5(%arg0: i32, %arg1: i32) -> (i32, i32) {
    %c0_i32 = arith.constant 0 : i32
    %c0_i32_0 = arith.constant 0 : i32
    %c0_i32_1 = arith.constant 0 : i32
    return %c0_i32, %c0_i32_0 : i32, i32
  }
  func.func @transform_6(%arg0: i32, %arg1: i32) -> (i32, i32) {
    %c0_i32 = arith.constant 0 : i32
    %c0_i32_0 = arith.constant 0 : i32
    %c0_i32_1 = arith.constant 0 : i32
    return %c0_i32, %c0_i32_0 : i32, i32
  }
  func.func @transform_7(%arg0: i32, %arg1: i32) -> (i32, i32) {
    %c0_i32 = arith.constant 0 : i32
    %c0_i32_0 = arith.constant 0 : i32
    %c0_i32_1 = arith.constant 0 : i32
    return %c0_i32, %c0_i32_0 : i32, i32
  }
  func.func @transform_8(%arg0: i32, %arg1: i32) -> (i32, i32) {
    %c0_i32 = arith.constant 0 : i32
    %c0_i32_0 = arith.constant 0 : i32
    %c0_i32_1 = arith.constant 0 : i32
    return %c0_i32, %c0_i32_0 : i32, i32
  }
  func.func @transform_9(%arg0: i32, %arg1: i32) -> (i32, i32) {
    %c0_i32 = arith.constant 0 : i32
    %c0_i32_0 = arith.constant 0 : i32
    %c0_i32_1 = arith.constant 0 : i32
    return %c0_i32, %c0_i32_0 : i32, i32
  }
  func.func @transform_10(%arg0: i32, %arg1: i32) -> (i32, i32) {
    %c0_i32 = arith.constant 0 : i32
    %c0_i32_0 = arith.constant 0 : i32
    %c0_i32_1 = arith.constant 0 : i32
    return %c0_i32, %c0_i32_0 : i32, i32
  }
  func.func @transform_11(%arg0: i32, %arg1: i32) -> (i32, i32) {
    %c0_i32 = arith.constant 0 : i32
    %c0_i32_0 = arith.constant 0 : i32
    %c0_i32_1 = arith.constant 0 : i32
    return %c0_i32, %c0_i32_0 : i32, i32
  }
  func.func @transform_12(%arg0: i32, %arg1: i32) -> (i32, i32) {
    %c0_i32 = arith.constant 0 : i32
    %c0_i32_0 = arith.constant 0 : i32
    %c0_i32_1 = arith.constant 0 : i32
    return %c0_i32, %c0_i32_0 : i32, i32
  }
  func.func @transform_13(%arg0: i32, %arg1: i32) -> (i32, i32) {
    %c0_i32 = arith.constant 0 : i32
    %c0_i32_0 = arith.constant 0 : i32
    %c0_i32_1 = arith.constant 0 : i32
    return %c0_i32, %c0_i32_0 : i32, i32
  }
  func.func @transform_14(%arg0: i32, %arg1: i32) -> (i32, i32) {
    %c0_i32 = arith.constant 0 : i32
    %c0_i32_0 = arith.constant 0 : i32
    %c0_i32_1 = arith.constant 0 : i32
    return %c0_i32, %c0_i32_0 : i32, i32
  }
  func.func @transform_15(%arg0: i32, %arg1: i32) -> (i32, i32, i32) {
    %c0_i32 = arith.constant 0 : i32
    %c0_i32_0 = arith.constant 0 : i32
    return %arg0, %arg1, %c0_i32 : i32, i32, i32
  }
}

</mosaic_0001>

<llo_original>
// kernel: summarization.1
$region0: #{summarization.1}
  #allocation0 [shape = 'u32[]', space=smem, size = 0x4, offset = 0x4, fixed_abs, tag = 'smem constant byte address 0x4 - core index']
  #allocation1 [shape = 'u32[144,128]{1,0:T(1,128)}', space=vmem, size = 0x12000, scoped, tag = 'internal scratch']
  #allocation2 [shape = 'f32[16,1024]{1,0:T(8,128)}', space=vmem, size = 0x10000, scoped, tag = 'scratch operand']
  %s0 = inlined_call_operand.vmem [shape: bf16[2,3,28,32], index: 0, kind: input, shape index: {}]
  %s1 = inlined_call_operand.vmem [shape: bf16[32,1024], index: 1, kind: input, shape index: {}]
  %s2 = inlined_call_operand.vmem [shape: bf16[32,128], index: 2, kind: input, shape index: {}]
  %s3 = inlined_call_operand.vmem [shape: bf16[32,128], index: 3, kind: input, shape index: {}]
  %s4 = inlined_call_operand.vmem [shape: bf16[32,256], index: 4, kind: input, shape index: {}]
  %s5 = inlined_call_operand.vmem [shape: bf16[32,384], index: 5, kind: input, shape index: {}]
  %s6 = inlined_call_operand.vmem [shape: bf16[32,256], index: 6, kind: input, shape index: {}]
  %s7 = inlined_call_operand.vmem [shape: bf16[32,256], index: 7, kind: input, shape index: {}]
  %s8 = inlined_call_operand.vmem [shape: bf16[32,384], index: 8, kind: input, shape index: {}]
  %s9 = inlined_call_operand.vmem [shape: bf16[32,256], index: 9, kind: input, shape index: {}]
  %s10 = inlined_call_operand.vmem [shape: bf16[32,128], index: 10, kind: input, shape index: {}]
  %s11 = inlined_call_operand.vmem [shape: bf16[32,128], index: 11, kind: input, shape index: {}]
  %s12 = inlined_call_operand.vmem [shape: f32[1,1024], index: 12, kind: input, shape index: {}]
  %s13 = inlined_call_operand.vmem [shape: bf16[1024,12], index: 13, kind: input, shape index: {}]
  %s14 = inlined_call_operand.vmem [shape: f32[1,12], index: 14, kind: input, shape index: {}]
  %s15 = inlined_call_operand.vmem [shape: f32[2,48,12], index: 15, kind: output, shape index: {}]
  %s16 = sld [smem:[#allocation0]]
  $region93: #{summarization.1} parent=0
    _
  %s18 = ssub.s32 1, %s16
  %s19 = scalar_select 0, %s18, %s16
  loop: start=0, step=1, limit=8
  $region2: #{summarization.1} parent=0 // loop_pre_header
    _
  $region3: #{summarization.1} parent=0 // loop_header
    %s21 = sphi 0, %s25
    %p22 = scmp.ge.s32.totalorder %s21, 8
    %s28 = sphi 0, %s40
    %s29 = sphi 0, %s36
    %s30 = sphi 0, %s28
    %s31 = sphi 0, %s29
    %s32 = sphi 0, %s30
    %s33 = sphi 0, %s31
    %s45 = sphi 0, %s47
    %s48 = sphi 0, %s45
    %s49 = sphi 0, %s48
    %s65 = sphi 0, %s49
    %s69 = sphi 0, %s69
    %s71 = sphi 0, %s69
    %s72 = sphi 0, %s71
    %s86 = sphi 0, %s72
    %s90 = sphi 0, %s90
    %s92 = sphi 0, %s90
    %s93 = sphi 0, %s92
    %s107 = sphi 0, %s93
    %s111 = sphi 0, %s111
    %s113 = sphi 0, %s111
    %s114 = sphi 0, %s113
    %s128 = sphi 0, %s114
    %s132 = sphi 0, %s132
    %s134 = sphi 0, %s132
    %s135 = sphi 0, %s134
    %s149 = sphi 0, %s135
    %s153 = sphi 0, %s153
    %s155 = sphi 0, %s153
    %s156 = sphi 0, %s155
    %s170 = sphi 0, %s156
    %s174 = sphi 0, %s174
    %s176 = sphi 0, %s174
    %s177 = sphi 0, %s176
    %s191 = sphi 0, %s177
    %s195 = sphi 0, %s195
    %s197 = sphi 0, %s195
    %s198 = sphi 0, %s197
    %s212 = sphi 0, %s198
    %s216 = sphi 0, %s216
    %s218 = sphi 0, %s216
    %s219 = sphi 0, %s218
    %s233 = sphi 0, %s219
    %s237 = sphi 0, %s237
    %s239 = sphi 0, %s237
    %s240 = sphi 0, %s239
    %s254 = sphi 0, %s240
    %s258 = sphi 0, %s258
    %s260 = sphi 0, %s258
    %s261 = sphi 0, %s260
    %s275 = sphi 0, %s261
    %s279 = sphi 0, %s279
    %s281 = sphi 0, %s279
    %s282 = sphi 0, %s281
    %s296 = sphi 0, %s282
    %s300 = sphi 0, %s300
    %s302 = sphi 0, %s300
    %s303 = sphi 0, %s302
    %s317 = sphi 0, %s303
    %s321 = sphi 0, %s321
    %s323 = sphi 0, %s321
    %s324 = sphi 0, %s323
    %s338 = sphi 0, %s324
    %s342 = sphi 0, %s342
    %s344 = sphi 0, %s342
    %s345 = sphi 0, %s344
    %s359 = sphi 0, %s345
    %s367 = sphi 0, %s369
    %s370 = sphi 0, %s367
    %s371 = sphi 0, %s370
    %s387 = sphi 0, %s371
  $region4: #{summarization.1} parent=0 // loop_header_branch
    %24 = sbr.rel (%p22) target = $region8
  $region5: #{summarization.1} parent=0 // loop_body
    %s26 = ssub.s32 %s21, 1
    %s27 = ssub.s32 %s21, 2
    %s34 = sadd.s32 1, %s29
    %p35 = scmp.ge.s32.totalorder %s34, 3
    %s36 = scalar_select %p35, 0, %s34
    %s37 = sadd.s32 1, %s28
    %s38 = scalar_select %p35, %s37, %s28
    %p39 = scmp.ge.s32.totalorder %s38, 2
    %s40 = scalar_select %p39, 0, %s38
    %s41 = ssub.s32 %s28, %s40
    %s42 = ssub.s32 %s29, %s36
    %s43 = sor.u32 %s41, %s42
    %p44 = scmp.eq.s32.totalorder %s43, 0
    %s46 = sadd.s32 %s45, 1
    %s47 = scalar_select %p44, %s45, %s46
    %p50 = pneg %p44
    %p51 = scmp.eq.s32.totalorder %s21, 5
    %p52 = por %p50, %p51
    %p53 = scmp.ne.s32.totalorder %s45, %s48
    %p54 = scmp.eq.s32.totalorder %s21, 0
    %p55 = por %p53, %p54
    %p56 = scmp.ne.s32.totalorder %s45, %s48
    %p57 = scmp.eq.s32.totalorder %s26, 5
    %p58 = por %p56, %p57
    %p59 = scmp.ne.s32.totalorder %s48, %s49
    %p60 = scmp.eq.s32.totalorder %s26, 0
    %p61 = por %p59, %p60
    %p62 = scmp.ne.s32.totalorder %s48, %s49
    %p63 = scmp.eq.s32.totalorder %s27, 5
    %p64 = por %p62, %p63
    %p66 = scmp.ne.s32.totalorder %s49, %s65
    %p67 = scmp.eq.s32.totalorder %s27, 0
    %p68 = por %p66, %p67
    %s70 = sadd.s32 %s69, 1
    %p73 = scmp.eq.s32.totalorder %s21, 5
    %p74 = scmp.ne.s32.totalorder %s69, %s71
    %p75 = scmp.eq.s32.totalorder %s21, 0
    %p76 = por %p74, %p75
    %p77 = scmp.ne.s32.totalorder %s69, %s71
    %p78 = scmp.eq.s32.totalorder %s26, 5
    %p79 = por %p77, %p78
    %p80 = scmp.ne.s32.totalorder %s71, %s72
    %p81 = scmp.eq.s32.totalorder %s26, 0
    %p82 = por %p80, %p81
    %p83 = scmp.ne.s32.totalorder %s71, %s72
    %p84 = scmp.eq.s32.totalorder %s27, 5
    %p85 = por %p83, %p84
    %p87 = scmp.ne.s32.totalorder %s72, %s86
    %p88 = scmp.eq.s32.totalorder %s27, 0
    %p89 = por %p87, %p88
    %s91 = sadd.s32 %s90, 1
    %p94 = scmp.eq.s32.totalorder %s21, 5
    %p95 = scmp.ne.s32.totalorder %s90, %s92
    %p96 = scmp.eq.s32.totalorder %s21, 0
    %p97 = por %p95, %p96
    %p98 = scmp.ne.s32.totalorder %s90, %s92
    %p99 = scmp.eq.s32.totalorder %s26, 5
    %p100 = por %p98, %p99
    %p101 = scmp.ne.s32.totalorder %s92, %s93
    %p102 = scmp.eq.s32.totalorder %s26, 0
    %p103 = por %p101, %p102
    %p104 = scmp.ne.s32.totalorder %s92, %s93
    %p105 = scmp.eq.s32.totalorder %s27, 5
    %p106 = por %p104, %p105
    %p108 = scmp.ne.s32.totalorder %s93, %s107
    %p109 = scmp.eq.s32.totalorder %s27, 0
    %p110 = por %p108, %p109
    %s112 = sadd.s32 %s111, 1
    %p115 = scmp.eq.s32.totalorder %s21, 5
    %p116 = scmp.ne.s32.totalorder %s111, %s113
    %p117 = scmp.eq.s32.totalorder %s21, 0
    %p118 = por %p116, %p117
    %p119 = scmp.ne.s32.totalorder %s111, %s113
    %p120 = scmp.eq.s32.totalorder %s26, 5
    %p121 = por %p119, %p120
    %p122 = scmp.ne.s32.totalorder %s113, %s114
    %p123 = scmp.eq.s32.totalorder %s26, 0
    %p124 = por %p122, %p123
    %p125 = scmp.ne.s32.totalorder %s113, %s114
    %p126 = scmp.eq.s32.totalorder %s27, 5
    %p127 = por %p125, %p126
    %p129 = scmp.ne.s32.totalorder %s114, %s128
    %p130 = scmp.eq.s32.totalorder %s27, 0
    %p131 = por %p129, %p130
    %s133 = sadd.s32 %s132, 1
    %p136 = scmp.eq.s32.totalorder %s21, 5
    %p137 = scmp.ne.s32.totalorder %s132, %s134
    %p138 = scmp.eq.s32.totalorder %s21, 0
    %p139 = por %p137, %p138
    %p140 = scmp.ne.s32.totalorder %s132, %s134
    %p141 = scmp.eq.s32.totalorder %s26, 5
    %p142 = por %p140, %p141
    %p143 = scmp.ne.s32.totalorder %s134, %s135
    %p144 = scmp.eq.s32.totalorder %s26, 0
    %p145 = por %p143, %p144
    %p146 = scmp.ne.s32.totalorder %s134, %s135
    %p147 = scmp.eq.s32.totalorder %s27, 5
    %p148 = por %p146, %p147
    %p150 = scmp.ne.s32.totalorder %s135, %s149
    %p151 = scmp.eq.s32.totalorder %s27, 0
    %p152 = por %p150, %p151
    %s154 = sadd.s32 %s153, 1
    %p157 = scmp.eq.s32.totalorder %s21, 5
    %p158 = scmp.ne.s32.totalorder %s153, %s155
    %p159 = scmp.eq.s32.totalorder %s21, 0
    %p160 = por %p158, %p159
    %p161 = scmp.ne.s32.totalorder %s153, %s155
    %p162 = scmp.eq.s32.totalorder %s26, 5
    %p163 = por %p161, %p162
    %p164 = scmp.ne.s32.totalorder %s155, %s156
    %p165 = scmp.eq.s32.totalorder %s26, 0
    %p166 = por %p164, %p165
    %p167 = scmp.ne.s32.totalorder %s155, %s156
    %p168 = scmp.eq.s32.totalorder %s27, 5
    %p169 = por %p167, %p168
    %p171 = scmp.ne.s32.totalorder %s156, %s170
    %p172 = scmp.eq.s32.totalorder %s27, 0
    %p173 = por %p171, %p172
    %s175 = sadd.s32 %s174, 1
    %p178 = scmp.eq.s32.totalorder %s21, 5
    %p179 = scmp.ne.s32.totalorder %s174, %s176
    %p180 = scmp.eq.s32.totalorder %s21, 0
    %p181 = por %p179, %p180
    %p182 = scmp.ne.s32.totalorder %s174, %s176
    %p183 = scmp.eq.s32.totalorder %s26, 5
    %p184 = por %p182, %p183
    %p185 = scmp.ne.s32.totalorder %s176, %s177
    %p186 = scmp.eq.s32.totalorder %s26, 0
    %p187 = por %p185, %p186
    %p188 = scmp.ne.s32.totalorder %s176, %s177
    %p189 = scmp.eq.s32.totalorder %s27, 5
    %p190 = por %p188, %p189
    %p192 = scmp.ne.s32.totalorder %s177, %s191
    %p193 = scmp.eq.s32.totalorder %s27, 0
    %p194 = por %p192, %p193
    %s196 = sadd.s32 %s195, 1
    %p199 = scmp.eq.s32.totalorder %s21, 5
    %p200 = scmp.ne.s32.totalorder %s195, %s197
    %p201 = scmp.eq.s32.totalorder %s21, 0
    %p202 = por %p200, %p201
    %p203 = scmp.ne.s32.totalorder %s195, %s197
    %p204 = scmp.eq.s32.totalorder %s26, 5
    %p205 = por %p203, %p204
    %p206 = scmp.ne.s32.totalorder %s197, %s198
    %p207 = scmp.eq.s32.totalorder %s26, 0
    %p208 = por %p206, %p207
    %p209 = scmp.ne.s32.totalorder %s197, %s198
    %p210 = scmp.eq.s32.totalorder %s27, 5
    %p211 = por %p209, %p210
    %p213 = scmp.ne.s32.totalorder %s198, %s212
    %p214 = scmp.eq.s32.totalorder %s27, 0
    %p215 = por %p213, %p214
    %s217 = sadd.s32 %s216, 1
    %p220 = scmp.eq.s32.totalorder %s21, 5
    %p221 = scmp.ne.s32.totalorder %s216, %s218
    %p222 = scmp.eq.s32.totalorder %s21, 0
    %p223 = por %p221, %p222
    %p224 = scmp.ne.s32.totalorder %s216, %s218
    %p225 = scmp.eq.s32.totalorder %s26, 5
    %p226 = por %p224, %p225
    %p227 = scmp.ne.s32.totalorder %s218, %s219
    %p228 = scmp.eq.s32.totalorder %s26, 0
    %p229 = por %p227, %p228
    %p230 = scmp.ne.s32.totalorder %s218, %s219
    %p231 = scmp.eq.s32.totalorder %s27, 5
    %p232 = por %p230, %p231
    %p234 = scmp.ne.s32.totalorder %s219, %s233
    %p235 = scmp.eq.s32.totalorder %s27, 0
    %p236 = por %p234, %p235
    %s238 = sadd.s32 %s237, 1
    %p241 = scmp.eq.s32.totalorder %s21, 5
    %p242 = scmp.ne.s32.totalorder %s237, %s239
    %p243 = scmp.eq.s32.totalorder %s21, 0
    %p244 = por %p242, %p243
    %p245 = scmp.ne.s32.totalorder %s237, %s239
    %p246 = scmp.eq.s32.totalorder %s26, 5
    %p247 = por %p245, %p246
    %p248 = scmp.ne.s32.totalorder %s239, %s240
    %p249 = scmp.eq.s32.totalorder %s26, 0
    %p250 = por %p248, %p249
    %p251 = scmp.ne.s32.totalorder %s239, %s240
    %p252 = scmp.eq.s32.totalorder %s27, 5
    %p253 = por %p251, %p252
    %p255 = scmp.ne.s32.totalorder %s240, %s254
    %p256 = scmp.eq.s32.totalorder %s27, 0
    %p257 = por %p255, %p256
    %s259 = sadd.s32 %s258, 1
    %p262 = scmp.eq.s32.totalorder %s21, 5
    %p263 = scmp.ne.s32.totalorder %s258, %s260
    %p264 = scmp.eq.s32.totalorder %s21, 0
    %p265 = por %p263, %p264
    %p266 = scmp.ne.s32.totalorder %s258, %s260
    %p267 = scmp.eq.s32.totalorder %s26, 5
    %p268 = por %p266, %p267
    %p269 = scmp.ne.s32.totalorder %s260, %s261
    %p270 = scmp.eq.s32.totalorder %s26, 0
    %p271 = por %p269, %p270
    %p272 = scmp.ne.s32.totalorder %s260, %s261
    %p273 = scmp.eq.s32.totalorder %s27, 5
    %p274 = por %p272, %p273
    %p276 = scmp.ne.s32.totalorder %s261, %s275
    %p277 = scmp.eq.s32.totalorder %s27, 0
    %p278 = por %p276, %p277
    %s280 = sadd.s32 %s279, 1
    %p283 = scmp.eq.s32.totalorder %s21, 5
    %p284 = scmp.ne.s32.totalorder %s279, %s281
    %p285 = scmp.eq.s32.totalorder %s21, 0
    %p286 = por %p284, %p285
    %p287 = scmp.ne.s32.totalorder %s279, %s281
    %p288 = scmp.eq.s32.totalorder %s26, 5
    %p289 = por %p287, %p288
    %p290 = scmp.ne.s32.totalorder %s281, %s282
    %p291 = scmp.eq.s32.totalorder %s26, 0
    %p292 = por %p290, %p291
    %p293 = scmp.ne.s32.totalorder %s281, %s282
    %p294 = scmp.eq.s32.totalorder %s27, 5
    %p295 = por %p293, %p294
    %p297 = scmp.ne.s32.totalorder %s282, %s296
    %p298 = scmp.eq.s32.totalorder %s27, 0
    %p299 = por %p297, %p298
    %s301 = sadd.s32 %s300, 1
    %p304 = scmp.eq.s32.totalorder %s21, 5
    %p305 = scmp.ne.s32.totalorder %s300, %s302
    %p306 = scmp.eq.s32.totalorder %s21, 0
    %p307 = por %p305, %p306
    %p308 = scmp.ne.s32.totalorder %s300, %s302
    %p309 = scmp.eq.s32.totalorder %s26, 5
    %p310 = por %p308, %p309
    %p311 = scmp.ne.s32.totalorder %s302, %s303
    %p312 = scmp.eq.s32.totalorder %s26, 0
    %p313 = por %p311, %p312
    %p314 = scmp.ne.s32.totalorder %s302, %s303
    %p315 = scmp.eq.s32.totalorder %s27, 5
    %p316 = por %p314, %p315
    %p318 = scmp.ne.s32.totalorder %s303, %s317
    %p319 = scmp.eq.s32.totalorder %s27, 0
    %p320 = por %p318, %p319
    %s322 = sadd.s32 %s321, 1
    %p325 = scmp.eq.s32.totalorder %s21, 5
    %p326 = scmp.ne.s32.totalorder %s321, %s323
    %p327 = scmp.eq.s32.totalorder %s21, 0
    %p328 = por %p326, %p327
    %p329 = scmp.ne.s32.totalorder %s321, %s323
    %p330 = scmp.eq.s32.totalorder %s26, 5
    %p331 = por %p329, %p330
    %p332 = scmp.ne.s32.totalorder %s323, %s324
    %p333 = scmp.eq.s32.totalorder %s26, 0
    %p334 = por %p332, %p333
    %p335 = scmp.ne.s32.totalorder %s323, %s324
    %p336 = scmp.eq.s32.totalorder %s27, 5
    %p337 = por %p335, %p336
    %p339 = scmp.ne.s32.totalorder %s324, %s338
    %p340 = scmp.eq.s32.totalorder %s27, 0
    %p341 = por %p339, %p340
    %s343 = sadd.s32 %s342, 1
    %p346 = scmp.eq.s32.totalorder %s21, 5
    %p347 = scmp.ne.s32.totalorder %s342, %s344
    %p348 = scmp.eq.s32.totalorder %s21, 0
    %p349 = por %p347, %p348
    %p350 = scmp.ne.s32.totalorder %s342, %s344
    %p351 = scmp.eq.s32.totalorder %s26, 5
    %p352 = por %p350, %p351
    %p353 = scmp.ne.s32.totalorder %s344, %s345
    %p354 = scmp.eq.s32.totalorder %s26, 0
    %p355 = por %p353, %p354
    %p356 = scmp.ne.s32.totalorder %s344, %s345
    %p357 = scmp.eq.s32.totalorder %s27, 5
    %p358 = por %p356, %p357
    %p360 = scmp.ne.s32.totalorder %s345, %s359
    %p361 = scmp.eq.s32.totalorder %s27, 0
    %p362 = por %p360, %p361
    %s363 = ssub.s32 %s28, %s40
    %s364 = ssub.s32 %s29, %s36
    %s365 = sor.u32 %s363, %s364
    %p366 = scmp.eq.s32.totalorder %s365, 0
    %s368 = sadd.s32 %s367, 1
    %s369 = scalar_select %p366, %s367, %s368
    %p372 = pneg %p366
    %p373 = scmp.eq.s32.totalorder %s21, 5
    %p374 = por %p372, %p373
    %p375 = scmp.ne.s32.totalorder %s367, %s370
    %p376 = scmp.eq.s32.totalorder %s21, 0
    %p377 = por %p375, %p376
    %p378 = scmp.ne.s32.totalorder %s367, %s370
    %p379 = scmp.eq.s32.totalorder %s26, 5
    %p380 = por %p378, %p379
    %p381 = scmp.ne.s32.totalorder %s370, %s371
    %p382 = scmp.eq.s32.totalorder %s26, 0
    %p383 = por %p381, %p382
    %p384 = scmp.ne.s32.totalorder %s370, %s371
    %p385 = scmp.eq.s32.totalorder %s27, 5
    %p386 = por %p384, %p385
    %p388 = scmp.ne.s32.totalorder %s371, %s387
    %p389 = scmp.eq.s32.totalorder %s27, 0
    %p390 = por %p388, %p389
    %p391 = scmp.le.s32.totalorder 1, %s21
    %p392 = scmp.lt.s32.totalorder %s21, 7
    %p393 = pnand %p391, %p392
    %p394 = pneg %p393
    // Predicated region
    $region9: #{summarization.1} parent=5 // pred_check
      _
    $region10: #{summarization.1} parent=5 // pred_check_branch
      %396 = sbr.rel (%p393) target = $region12
    $region11: #{summarization.1} parent=5 // pred_region
      %s397 = ssub.s32 %s21, 1
      // Predicated region
      $region13: #{summarization.1} parent=11 // pred_check
        %p398 = pneg %p82
      $region14: #{summarization.1} parent=11 // pred_check_branch
        %400 = sbr.rel (%p398) target = $region16
      $region15: #{summarization.1} parent=11 // pred_region
        _
      $region16: #{summarization.1} parent=11 // pred_fallthru
        _
      // Predicated region
      $region17: #{summarization.1} parent=11 // pred_check
        %p401 = pneg %p103
      $region18: #{summarization.1} parent=11 // pred_check_branch
        %403 = sbr.rel (%p401) target = $region20
      $region19: #{summarization.1} parent=11 // pred_region
        _
      $region20: #{summarization.1} parent=11 // pred_fallthru
        _
      // Predicated region
      $region21: #{summarization.1} parent=11 // pred_check
        %p404 = pneg %p124
      $region22: #{summarization.1} parent=11 // pred_check_branch
        %406 = sbr.rel (%p404) target = $region24
      $region23: #{summarization.1} parent=11 // pred_region
        _
      $region24: #{summarization.1} parent=11 // pred_fallthru
        _
      // Predicated region
      $region25: #{summarization.1} parent=11 // pred_check
        %p407 = pneg %p145
      $region26: #{summarization.1} parent=11 // pred_check_branch
        %409 = sbr.rel (%p407) target = $region28
      $region27: #{summarization.1} parent=11 // pred_region
        _
      $region28: #{summarization.1} parent=11 // pred_fallthru
        _
      // Predicated region
      $region29: #{summarization.1} parent=11 // pred_check
        %p410 = pneg %p166
      $region30: #{summarization.1} parent=11 // pred_check_branch
        %412 = sbr.rel (%p410) target = $region32
      $region31: #{summarization.1} parent=11 // pred_region
        _
      $region32: #{summarization.1} parent=11 // pred_fallthru
        _
      // Predicated region
      $region33: #{summarization.1} parent=11 // pred_check
        %p413 = pneg %p187
      $region34: #{summarization.1} parent=11 // pred_check_branch
        %415 = sbr.rel (%p413) target = $region36
      $region35: #{summarization.1} parent=11 // pred_region
        _
      $region36: #{summarization.1} parent=11 // pred_fallthru
        _
      // Predicated region
      $region37: #{summarization.1} parent=11 // pred_check
        %p416 = pneg %p208
      $region38: #{summarization.1} parent=11 // pred_check_branch
        %418 = sbr.rel (%p416) target = $region40
      $region39: #{summarization.1} parent=11 // pred_region
        _
      $region40: #{summarization.1} parent=11 // pred_fallthru
        _
      // Predicated region
      $region41: #{summarization.1} parent=11 // pred_check
        %p419 = pneg %p229
      $region42: #{summarization.1} parent=11 // pred_check_branch
        %421 = sbr.rel (%p419) target = $region44
      $region43: #{summarization.1} parent=11 // pred_region
        _
      $region44: #{summarization.1} parent=11 // pred_fallthru
        _
      // Predicated region
      $region45: #{summarization.1} parent=11 // pred_check
        %p422 = pneg %p250
      $region46: #{summarization.1} parent=11 // pred_check_branch
        %424 = sbr.rel (%p422) target = $region48
      $region47: #{summarization.1} parent=11 // pred_region
        _
      $region48: #{summarization.1} parent=11 // pred_fallthru
        _
      // Predicated region
      $region49: #{summarization.1} parent=11 // pred_check
        %p425 = pneg %p271
      $region50: #{summarization.1} parent=11 // pred_check_branch
        %427 = sbr.rel (%p425) target = $region52
      $region51: #{summarization.1} parent=11 // pred_region
        _
      $region52: #{summarization.1} parent=11 // pred_fallthru
        _
      // Predicated region
      $region53: #{summarization.1} parent=11 // pred_check
        %p428 = pneg %p292
      $region54: #{summarization.1} parent=11 // pred_check_branch
        %430 = sbr.rel (%p428) target = $region56
      $region55: #{summarization.1} parent=11 // pred_region
        _
      $region56: #{summarization.1} parent=11 // pred_fallthru
        _
      // Predicated region
      $region57: #{summarization.1} parent=11 // pred_check
        %p431 = pneg %p313
      $region58: #{summarization.1} parent=11 // pred_check_branch
        %433 = sbr.rel (%p431) target = $region60
      $region59: #{summarization.1} parent=11 // pred_region
        _
      $region60: #{summarization.1} parent=11 // pred_fallthru
        _
      // Predicated region
      $region61: #{summarization.1} parent=11 // pred_check
        %p434 = pneg %p334
      $region62: #{summarization.1} parent=11 // pred_check_branch
        %436 = sbr.rel (%p434) target = $region64
      $region63: #{summarization.1} parent=11 // pred_region
        _
      $region64: #{summarization.1} parent=11 // pred_fallthru
        _
      // Predicated region
      $region65: #{summarization.1} parent=11 // pred_check
        %p437 = pneg %p355
      $region66: #{summarization.1} parent=11 // pred_check_branch
        %439 = sbr.rel (%p437) target = $region68
      $region67: #{summarization.1} parent=11 // pred_region
        _
      $region68: #{summarization.1} parent=11 // pred_fallthru
        _
    $region12: #{summarization.1} parent=5 // pred_fallthru
      _
    %p440 = scmp.lt.s32.totalorder %s21, 6
    // Predicated region
    $region69: #{summarization.1} parent=5 // pred_check
      %p441 = pneg %p440
    $region70: #{summarization.1} parent=5 // pred_check_branch
      %443 = sbr.rel (%p441) target = $region72
    $region71: #{summarization.1} parent=5 // pred_region
      // Predicated region
      $region73: #{summarization.1} parent=71 // pred_check
        %p444 = pneg %p55
      $region74: #{summarization.1} parent=71 // pred_check_branch
        %446 = sbr.rel (%p444) target = $region76
      $region75: #{summarization.1} parent=71 // pred_region
        %p447 = scmp.lt.s32.totalorder %s28, 1
        %s448 = scalar_select %p447, %s28, 1
        %p449 = scmp.lt.s32.totalorder %s29, 2
        %s450 = scalar_select %p449, %s29, 2
        %s451 = smul.addr %s450, 4
        %s452 = smul.addr %s448, 12
        %s453 = sadd.s32 %s451, %s452
        %s454 = smul.addr %s453, 4
        %s455 = scalar_lea.vmem %s0, %s454
      $region76: #{summarization.1} parent=71 // pred_fallthru
        _
    $region72: #{summarization.1} parent=5 // pred_fallthru
      _
    %p456 = scmp.le.s32.totalorder 1, %s21
    %p457 = scmp.lt.s32.totalorder %s21, 7
    %p458 = pnand %p456, %p457
    %p459 = pneg %p458
    // Predicated region
    $region77: #{summarization.1} parent=5 // pred_check
      _
    $region78: #{summarization.1} parent=5 // pred_check_branch
      %461 = sbr.rel (%p458) target = $region80
    $region79: #{summarization.1} parent=5 // pred_region
      %s462 = ssub.s32 %s21, 1
      %p463 = scmp.lt.s32.totalorder %s30, 1
      %s464 = scalar_select %p463, %s30, 1
      %p465 = scmp.lt.s32.totalorder %s31, 2
      %s466 = scalar_select %p465, %s31, 2
      %s467 = smul.addr %s466, 4
      %s468 = smul.addr %s464, 12
      %s469 = sadd.s32 %s467, %s468
      %s470 = smul.addr %s469, 4
      %s471 = scalar_lea.vmem %s0, %s470
      %p472 = pneg %p61
      %p473 = pneg %p58
      %p474 = pneg %p82
      %p475 = pneg %p79
      %p476 = pneg %p103
      %p477 = pneg %p100
      %p478 = pneg %p124
      %p479 = pneg %p121
      %p480 = pneg %p145
      %p481 = pneg %p142
      %p482 = pneg %p166
      %p483 = pneg %p163
      %p484 = pneg %p187
      %p485 = pneg %p184
      %p486 = pneg %p208
      %p487 = pneg %p205
      %p488 = pneg %p229
      %p489 = pneg %p226
      %p490 = pneg %p250
      %p491 = pneg %p247
      %p492 = pneg %p271
      %p493 = pneg %p268
      %p494 = pneg %p292
      %p495 = pneg %p289
      %p496 = pneg %p313
      %p497 = pneg %p310
      %p498 = pneg %p334
      %p499 = pneg %p331
      %p500 = pneg %p355
      %p501 = pneg %p352
      %p502 = pneg %p383
      %p503 = pneg %p380
      %s504 = smul.u32 2, %s31
      %p505 = scmp.lt.s32.totalorder %s30, 1
      %s506 = scalar_select %p505, %s30, 1
      %p507 = scmp.lt.s32.totalorder %s504, 5
      %s508 = scalar_select %p507, %s504, 5
      %s509 = smul.addr %s506, 6
      %s510 = sadd.s32 %s508, %s509
      %s511 = smul.addr %s510, 8
      %s512 = scalar_lea.vmem %s15, %s511
      %p513 = scmp.lt.s32.totalorder %s30, 1
      %s514 = scalar_select %p513, %s30, 1
      %p515 = scmp.lt.s32.totalorder %s31, 2
      %s516 = scalar_select %p515, %s31, 2
      %s517 = smul.addr %s516, 4
      %s518 = smul.addr %s514, 12
      %s519 = sadd.s32 %s517, %s518
      %s520 = smul.addr %s519, 4
      %s521 = scalar_lea.vmem %s0, %s520
      %s522 = smul.u32 2, %s31
      %p523 = scmp.lt.s32.totalorder %s30, 1
      %s524 = scalar_select %p523, %s30, 1
      %p525 = scmp.lt.s32.totalorder %s522, 5
      %s526 = scalar_select %p525, %s522, 5
      %s527 = smul.addr %s524, 6
      %s528 = sadd.s32 %s526, %s527
      %s529 = smul.addr %s528, 8
      %s530 = scalar_lea.vmem %s15, %s529
      %s531 = smul.u32 2, %s31
      %v533 = vld [vmem:[%s521] sm:$0xf]
      %v534 = vld [vmem:[%s521 + $0x4] sm:$0xf]
      %v535 = vld [vmem:[%s521 + $0x8] sm:$0xf]
      %v536 = vld [vmem:[%s521 + $0xc] sm:$0x3]
      %v537 = vld [vmem:[%s1] sm:$0xff]
      %v538 = vld [vmem:[%s1 + $0x8] sm:$0xff]
      %v539 = vld [vmem:[%s1 + $0x10] sm:$0xff]
      %v540 = vld [vmem:[%s1 + $0x18] sm:$0xff]
      %v541 = vld [vmem:[%s1 + $0x20] sm:$0xff]
      %v542 = vld [vmem:[%s1 + $0x28] sm:$0xff]
      %v543 = vld [vmem:[%s1 + $0x30] sm:$0xff]
      %v544 = vld [vmem:[%s1 + $0x38] sm:$0xff]
      %v545 = vld [vmem:[%s1 + $0x40] sm:$0xff]
      %v546 = vld [vmem:[%s1 + $0x48] sm:$0xff]
      %v547 = vld [vmem:[%s1 + $0x50] sm:$0xff]
      %v548 = vld [vmem:[%s1 + $0x58] sm:$0xff]
      %v549 = vld [vmem:[%s1 + $0x60] sm:$0xff]
      %v550 = vld [vmem:[%s1 + $0x68] sm:$0xff]
      %v551 = vld [vmem:[%s1 + $0x70] sm:$0xff]
      %v552 = vld [vmem:[%s1 + $0x78] sm:$0xff]
      %v556 = vunpack.c.l.b16 %v533
      %v557 = vunpack.c.l.b16 %v534
      %v558 = vunpack.c.l.b16 %v535
      %v559 = vpack.c.b16 %v557, %v556
      %v560 = vpack.c.b16 %v558, %v558
      %vm561 = vcmask 1044480
      %v562 = vrot.slane %v559, 3
      %v563 = vrot.slane %v560, 3
      %v564 = vsel %vm561, %v562, %v563
      %v581 = vunpack.c.l.b16 %v537
      %v582 = vunpack.c.h.b16 %v537
      %v583 = vunpack.c.l.b16 %v538
      %v584 = vunpack.c.h.b16 %v538
      %v585 = vunpack.c.l.b16 %v539
      %v586 = vunpack.c.h.b16 %v539
      %v587 = vunpack.c.l.b16 %v540
      %v588 = vunpack.c.h.b16 %v540
      %v589 = vunpack.c.l.b16 %v541
      %v590 = vunpack.c.h.b16 %v541
      %v591 = vunpack.c.l.b16 %v542
      %v592 = vunpack.c.h.b16 %v542
      %v593 = vunpack.c.l.b16 %v543
      %v594 = vunpack.c.h.b16 %v543
      %v595 = vunpack.c.l.b16 %v544
      %v596 = vunpack.c.h.b16 %v544
      %v597 = vunpack.c.l.b16 %v545
      %v598 = vunpack.c.h.b16 %v545
      %v599 = vunpack.c.l.b16 %v546
      %v600 = vunpack.c.h.b16 %v546
      %v601 = vunpack.c.l.b16 %v547
      %v602 = vunpack.c.h.b16 %v547
      %v603 = vunpack.c.l.b16 %v548
      %v604 = vunpack.c.h.b16 %v548
      %v605 = vunpack.c.l.b16 %v549
      %v606 = vunpack.c.h.b16 %v549
      %v607 = vunpack.c.l.b16 %v550
      %v608 = vunpack.c.h.b16 %v550
      %v609 = vunpack.c.l.b16 %v551
      %v610 = vunpack.c.h.b16 %v551
      %v611 = vunpack.c.l.b16 %v552
      %v612 = vunpack.c.h.b16 %v552
      %v613 = vpack.c.b16 %v589, %v581
      %v614 = vpack.c.b16 %v590, %v582
      %v615 = vpack.c.b16 %v591, %v583
      %v616 = vpack.c.b16 %v592, %v584
      %v617 = vpack.c.b16 %v593, %v585
      %v618 = vpack.c.b16 %v594, %v586
      %v619 = vpack.c.b16 %v595, %v587
      %v620 = vpack.c.b16 %v596, %v588
      %v621 = vpack.c.b16 %v605, %v597
      %v622 = vpack.c.b16 %v606, %v598
      %v623 = vpack.c.b16 %v607, %v599
      %v624 = vpack.c.b16 %v608, %v600
      %v625 = vpack.c.b16 %v609, %v601
      %v626 = vpack.c.b16 %v610, %v602
      %v627 = vpack.c.b16 %v611, %v603
      %v628 = vpack.c.b16 %v612, %v604
      %vm645 = vcmask 261120
      %v647 = vsel %vm645, %v564, 0
      %649 = vmatprep.subr.bf16.mxu0 0
      %650 = vmatpush1.bf16.msra.mxu0 0
      %651 = vmatprep.subr.bf16.mxu0 0
      %652 = vmatpush1.bf16.msra.mxu0 0
      %653 = vmatprep.subr.bf16.mxu0 0
      %654 = vmatpush1.bf16.msra.mxu0 0
      %655 = vmatprep.subr.bf16.mxu0 0
      %656 = vmatpush1.bf16.msra.mxu0 0
      %657 = vmatprep.subr.bf16.mxu0 0
      %658 = vmatpush1.bf16.msra.mxu0 0
      %659 = vmatprep.subr.bf16.mxu0 0
      %660 = vmatpush1.bf16.msra.mxu0 0
      %661 = vmatprep.subr.bf16.mxu0 %v622
      %662 = vmatpush1.bf16.msra.mxu0 %v621
      %663 = vmatprep.subr.bf16.mxu0 %v614
      %664 = vmatpush1.bf16.msra.mxu0 %v613
      %665 = vmatprep.subr.bf16.mxu0 0
      %666 = vmatpush2.bf16.msra.mxu0 0
      %667 = vmatprep.subr.bf16.mxu0 0
      %668 = vmatpush2.bf16.msra.mxu0 0
      %669 = vmatprep.subr.bf16.mxu0 0
      %670 = vmatpush2.bf16.msra.mxu0 0
      %671 = vmatprep.subr.bf16.mxu0 0
      %672 = vmatpush2.bf16.msra.mxu0 0
      %673 = vmatprep.subr.bf16.mxu0 0
      %674 = vmatpush2.bf16.msra.mxu0 0
      %675 = vmatprep.subr.bf16.mxu0 0
      %676 = vmatpush2.bf16.msra.mxu0 0
      %677 = vmatprep.subr.bf16.mxu0 0
      %678 = vmatpush2.bf16.msra.mxu0 0
      %679 = vmatprep.subr.bf16.mxu0 0
      %680 = vmatpush2.bf16.msra.mxu0 0
      %681 = vmatprep.mubr.bf16.mxu0 0
      %682 = vmatmul.mubr.bf16.gmra.mxu0 %v647
      %v683 = vpop.f32.mrf.mxu0
      %v684 = vadd.f32 0.0, %v683
      %v685 = vpop.f32.mrf.mxu0
      %v686 = vadd.f32 0.0, %v685
      %v687 = vpop.f32.mrf.mxu0
      %v688 = vadd.f32 0.0, %v687
      %v689 = vpop.f32.mrf.mxu0
      %v690 = vadd.f32 0.0, %v689
      %691 = vdwg.mxu0
      %692 = vmatprep.subr.bf16.mxu0 0
      %693 = vmatpush1.bf16.msra.mxu0 0
      %694 = vmatprep.subr.bf16.mxu0 0
      %695 = vmatpush1.bf16.msra.mxu0 0
      %696 = vmatprep.subr.bf16.mxu0 0
      %697 = vmatpush1.bf16.msra.mxu0 0
      %698 = vmatprep.subr.bf16.mxu0 0
      %699 = vmatpush1.bf16.msra.mxu0 0
      %700 = vmatprep.subr.bf16.mxu0 0
      %701 = vmatpush1.bf16.msra.mxu0 0
      %702 = vmatprep.subr.bf16.mxu0 0
      %703 = vmatpush1.bf16.msra.mxu0 0
      %704 = vmatprep.subr.bf16.mxu0 %v624
      %705 = vmatpush1.bf16.msra.mxu0 %v623
      %706 = vmatprep.subr.bf16.mxu0 %v616
      %707 = vmatpush1.bf16.msra.mxu0 %v615
      %708 = vmatprep.subr.bf16.mxu0 0
      %709 = vmatpush2.bf16.msra.mxu0 0
      %710 = vmatprep.subr.bf16.mxu0 0
      %711 = vmatpush2.bf16.msra.mxu0 0
      %712 = vmatprep.subr.bf16.mxu0 0
      %713 = vmatpush2.bf16.msra.mxu0 0
      %714 = vmatprep.subr.bf16.mxu0 0
      %715 = vmatpush2.bf16.msra.mxu0 0
      %716 = vmatprep.subr.bf16.mxu0 0
      %717 = vmatpush2.bf16.msra.mxu0 0
      %718 = vmatprep.subr.bf16.mxu0 0
      %719 = vmatpush2.bf16.msra.mxu0 0
      %720 = vmatprep.subr.bf16.mxu0 0
      %721 = vmatpush2.bf16.msra.mxu0 0
      %722 = vmatprep.subr.bf16.mxu0 0
      %723 = vmatpush2.bf16.msra.mxu0 0
      %724 = vmatprep.mubr.bf16.mxu0 0
      %725 = vmatmul.mubr.bf16.gmra.mxu0 %v647
      %v726 = vpop.f32.mrf.mxu0
      %v727 = vadd.f32 0.0, %v726
      %v728 = vpop.f32.mrf.mxu0
      %v729 = vadd.f32 0.0, %v728
      %v730 = vpop.f32.mrf.mxu0
      %v731 = vadd.f32 0.0, %v730
      %v732 = vpop.f32.mrf.mxu0
      %v733 = vadd.f32 0.0, %v732
      %734 = vdwg.mxu0
      %735 = vmatprep.subr.bf16.mxu0 0
      %736 = vmatpush1.bf16.msra.mxu0 0
      %737 = vmatprep.subr.bf16.mxu0 0
      %738 = vmatpush1.bf16.msra.mxu0 0
      %739 = vmatprep.subr.bf16.mxu0 0
      %740 = vmatpush1.bf16.msra.mxu0 0
      %741 = vmatprep.subr.bf16.mxu0 0
      %742 = vmatpush1.bf16.msra.mxu0 0
      %743 = vmatprep.subr.bf16.mxu0 0
      %744 = vmatpush1.bf16.msra.mxu0 0
      %745 = vmatprep.subr.bf16.mxu0 0
      %746 = vmatpush1.bf16.msra.mxu0 0
      %747 = vmatprep.subr.bf16.mxu0 %v626
      %748 = vmatpush1.bf16.msra.mxu0 %v625
      %749 = vmatprep.subr.bf16.mxu0 %v618
      %750 = vmatpush1.bf16.msra.mxu0 %v617
      %751 = vmatprep.subr.bf16.mxu0 0
      %752 = vmatpush2.bf16.msra.mxu0 0
      %753 = vmatprep.subr.bf16.mxu0 0
      %754 = vmatpush2.bf16.msra.mxu0 0
      %755 = vmatprep.subr.bf16.mxu0 0
      %756 = vmatpush2.bf16.msra.mxu0 0
      %757 = vmatprep.subr.bf16.mxu0 0
      %758 = vmatpush2.bf16.msra.mxu0 0
      %759 = vmatprep.subr.bf16.mxu0 0
      %760 = vmatpush2.bf16.msra.mxu0 0
      %761 = vmatprep.subr.bf16.mxu0 0
      %762 = vmatpush2.bf16.msra.mxu0 0
      %763 = vmatprep.subr.bf16.mxu0 0
      %764 = vmatpush2.bf16.msra.mxu0 0
      %765 = vmatprep.subr.bf16.mxu0 0
      %766 = vmatpush2.bf16.msra.mxu0 0
      %767 = vmatprep.mubr.bf16.mxu0 0
      %768 = vmatmul.mubr.bf16.gmra.mxu0 %v647
      %v769 = vpop.f32.mrf.mxu0
      %v770 = vadd.f32 0.0, %v769
      %v771 = vpop.f32.mrf.mxu0
      %v772 = vadd.f32 0.0, %v771
      %v773 = vpop.f32.mrf.mxu0
      %v774 = vadd.f32 0.0, %v773
      %v775 = vpop.f32.mrf.mxu0
      %v776 = vadd.f32 0.0, %v775
      %777 = vdwg.mxu0
      %778 = vmatprep.subr.bf16.mxu0 0
      %779 = vmatpush1.bf16.msra.mxu0 0
      %780 = vmatprep.subr.bf16.mxu0 0
      %781 = vmatpush1.bf16.msra.mxu0 0
      %782 = vmatprep.subr.bf16.mxu0 0
      %783 = vmatpush1.bf16.msra.mxu0 0
      %784 = vmatprep.subr.bf16.mxu0 0
      %785 = vmatpush1.bf16.msra.mxu0 0
      %786 = vmatprep.subr.bf16.mxu0 0
      %787 = vmatpush1.bf16.msra.mxu0 0
      %788 = vmatprep.subr.bf16.mxu0 0
      %789 = vmatpush1.bf16.msra.mxu0 0
      %790 = vmatprep.subr.bf16.mxu0 %v628
      %791 = vmatpush1.bf16.msra.mxu0 %v627
      %792 = vmatprep.subr.bf16.mxu0 %v620
      %793 = vmatpush1.bf16.msra.mxu0 %v619
      %794 = vmatprep.subr.bf16.mxu0 0
      %795 = vmatpush2.bf16.msra.mxu0 0
      %796 = vmatprep.subr.bf16.mxu0 0
      %797 = vmatpush2.bf16.msra.mxu0 0
      %798 = vmatprep.subr.bf16.mxu0 0
      %799 = vmatpush2.bf16.msra.mxu0 0
      %800 = vmatprep.subr.bf16.mxu0 0
      %801 = vmatpush2.bf16.msra.mxu0 0
      %802 = vmatprep.subr.bf16.mxu0 0
      %803 = vmatpush2.bf16.msra.mxu0 0
      %804 = vmatprep.subr.bf16.mxu0 0
      %805 = vmatpush2.bf16.msra.mxu0 0
      %806 = vmatprep.subr.bf16.mxu0 0
      %807 = vmatpush2.bf16.msra.mxu0 0
      %808 = vmatprep.subr.bf16.mxu0 0
      %809 = vmatpush2.bf16.msra.mxu0 0
      %810 = vmatprep.mubr.bf16.mxu0 0
      %811 = vmatmul.mubr.bf16.gmra.mxu0 %v647
      %v812 = vpop.f32.mrf.mxu0
      %v813 = vadd.f32 0.0, %v812
      %v814 = vpop.f32.mrf.mxu0
      %v815 = vadd.f32 0.0, %v814
      %v816 = vpop.f32.mrf.mxu0
      %v817 = vadd.f32 0.0, %v816
      %v818 = vpop.f32.mrf.mxu0
      %v819 = vadd.f32 0.0, %v818
      %820 = vdwg.mxu0
      %821 = vst [vmem:[#allocation2] sm:$0xff] %v684
      %822 = vst [vmem:[#allocation2 + $0x8] sm:$0xff] %v686
      %823 = vst [vmem:[#allocation2 + $0x10] sm:$0xff] %v727
      %824 = vst [vmem:[#allocation2 + $0x18] sm:$0xff] %v729
      %825 = vst [vmem:[#allocation2 + $0x20] sm:$0xff] %v770
      %826 = vst [vmem:[#allocation2 + $0x28] sm:$0xff] %v772
      %827 = vst [vmem:[#allocation2 + $0x30] sm:$0xff] %v813
      %828 = vst [vmem:[#allocation2 + $0x38] sm:$0xff] %v815
      %829 = vst [vmem:[#allocation2 + $0x40] sm:$0xff] %v688
      %830 = vst [vmem:[#allocation2 + $0x48] sm:$0xff] %v690
      %831 = vst [vmem:[#allocation2 + $0x50] sm:$0xff] %v731
      %832 = vst [vmem:[#allocation2 + $0x58] sm:$0xff] %v733
      %833 = vst [vmem:[#allocation2 + $0x60] sm:$0xff] %v774
      %834 = vst [vmem:[#allocation2 + $0x68] sm:$0xff] %v776
      %835 = vst [vmem:[#allocation2 + $0x70] sm:$0xff] %v817
      %836 = vst [vmem:[#allocation2 + $0x78] sm:$0xff] %v819
      %v837 = vld [vmem:[%s2] sm:$0xf]
      %v838 = vld [vmem:[%s2 + $0x4] sm:$0xf]
      %v839 = vld [vmem:[%s2 + $0x8] sm:$0xf]
      %v840 = vld [vmem:[%s2 + $0xc] sm:$0xf]
      %v845 = vunpack.c.l.b16 %v837
      %v846 = vunpack.c.l.b16 %v838
      %v847 = vunpack.c.l.b16 %v839
      %v848 = vunpack.c.l.b16 %v840
      %v849 = vpack.c.b16 %v846, %v845
      %v850 = vpack.c.b16 %v848, %v847
      %v854 = vsel %vm645, %v559, 0
      %856 = vmatprep.subr.bf16.mxu0 0
      %857 = vmatpush1.bf16.msra.mxu0 0
      %858 = vmatprep.subr.bf16.mxu0 0
      %859 = vmatpush1.bf16.msra.mxu0 0
      %860 = vmatprep.subr.bf16.mxu0 0
      %861 = vmatpush1.bf16.msra.mxu0 0
      %862 = vmatprep.subr.bf16.mxu0 0
      %863 = vmatpush1.bf16.msra.mxu0 0
      %864 = vmatprep.subr.bf16.mxu0 0
      %865 = vmatpush1.bf16.msra.mxu0 0
      %866 = vmatprep.subr.bf16.mxu0 0
      %867 = vmatpush1.bf16.msra.mxu0 0
      %868 = vmatprep.subr.bf16.mxu0 0
      %869 = vmatpush1.bf16.msra.mxu0 %v850
      %870 = vmatprep.subr.bf16.mxu0 0
      %871 = vmatpush1.bf16.msra.mxu0 %v849
      %872 = vmatprep.subr.bf16.mxu0 0
      %873 = vmatpush2.bf16.msra.mxu0 0
      %874 = vmatprep.subr.bf16.mxu0 0
      %875 = vmatpush2.bf16.msra.mxu0 0
      %876 = vmatprep.subr.bf16.mxu0 0
      %877 = vmatpush2.bf16.msra.mxu0 0
      %878 = vmatprep.subr.bf16.mxu0 0
      %879 = vmatpush2.bf16.msra.mxu0 0
      %880 = vmatprep.subr.bf16.mxu0 0
      %881 = vmatpush2.bf16.msra.mxu0 0
      %882 = vmatprep.subr.bf16.mxu0 0
      %883 = vmatpush2.bf16.msra.mxu0 0
      %884 = vmatprep.subr.bf16.mxu0 0
      %885 = vmatpush2.bf16.msra.mxu0 0
      %886 = vmatprep.subr.bf16.mxu0 0
      %887 = vmatpush2.bf16.msra.mxu0 0
      %888 = vmatprep.mubr.bf16.mxu0 0
      %889 = vmatmul.mubr.bf16.gmra.mxu0 %v854
      %v890 = vpop.f32.mrf.mxu0
      %v891 = vadd.f32 0.0, %v890
      %v892 = vpop.f32.mrf.mxu0
      %v893 = vpop.f32.mrf.mxu0
      %v894 = vadd.f32 0.0, %v893
      %v895 = vpop.f32.mrf.mxu0
      %896 = vdwg.mxu0
      %v897 = vld [vmem:[#allocation2 + $0x38] sm:$0xff]
      %v898 = vld [vmem:[#allocation2 + $0x78] sm:$0xff]
      %v899 = vadd.f32 %v897, %v891
      %v900 = vadd.f32 %v898, %v894
      %901 = vst [vmem:[#allocation2 + $0x38] sm:$0xff] %v899
      %902 = vst [vmem:[#allocation2 + $0x78] sm:$0xff] %v900
      %v903 = vld [vmem:[%s3] sm:$0xf]
      %v904 = vld [vmem:[%s3 + $0x4] sm:$0xf]
      %v905 = vld [vmem:[%s3 + $0x8] sm:$0xf]
      %v906 = vld [vmem:[%s3 + $0xc] sm:$0xf]
      %vm907 = vcmask 1046528
      %v908 = vrot.slane %v559, 1
      %v909 = vrot.slane %v560, 1
      %v910 = vsel %vm907, %v908, %v909
      %v915 = vunpack.c.l.b16 %v903
      %v916 = vunpack.c.l.b16 %v904
      %v917 = vunpack.c.l.b16 %v905
      %v918 = vunpack.c.l.b16 %v906
      %v919 = vpack.c.b16 %v916, %v915
      %v920 = vpack.c.b16 %v918, %v917
      %v924 = vsel %vm645, %v910, 0
      %926 = vmatprep.subr.bf16.mxu0 0
      %927 = vmatpush1.bf16.msra.mxu0 0
      %928 = vmatprep.subr.bf16.mxu0 0
      %929 = vmatpush1.bf16.msra.mxu0 0
      %930 = vmatprep.subr.bf16.mxu0 0
      %931 = vmatpush1.bf16.msra.mxu0 0
      %932 = vmatprep.subr.bf16.mxu0 0
      %933 = vmatpush1.bf16.msra.mxu0 0
      %934 = vmatprep.subr.bf16.mxu0 0
      %935 = vmatpush1.bf16.msra.mxu0 0
      %936 = vmatprep.subr.bf16.mxu0 0
      %937 = vmatpush1.bf16.msra.mxu0 0
      %938 = vmatprep.subr.bf16.mxu0 0
      %939 = vmatpush1.bf16.msra.mxu0 %v920
      %940 = vmatprep.subr.bf16.mxu0 0
      %941 = vmatpush1.bf16.msra.mxu0 %v919
      %942 = vmatprep.subr.bf16.mxu0 0
      %943 = vmatpush2.bf16.msra.mxu0 0
      %944 = vmatprep.subr.bf16.mxu0 0
      %945 = vmatpush2.bf16.msra.mxu0 0
      %946 = vmatprep.subr.bf16.mxu0 0
      %947 = vmatpush2.bf16.msra.mxu0 0
      %948 = vmatprep.subr.bf16.mxu0 0
      %949 = vmatpush2.bf16.msra.mxu0 0
      %950 = vmatprep.subr.bf16.mxu0 0
      %951 = vmatpush2.bf16.msra.mxu0 0
      %952 = vmatprep.subr.bf16.mxu0 0
      %953 = vmatpush2.bf16.msra.mxu0 0
      %954 = vmatprep.subr.bf16.mxu0 0
      %955 = vmatpush2.bf16.msra.mxu0 0
      %956 = vmatprep.subr.bf16.mxu0 0
      %957 = vmatpush2.bf16.msra.mxu0 0
      %958 = vmatprep.mubr.bf16.mxu0 0
      %959 = vmatmul.mubr.bf16.gmra.mxu0 %v924
      %v960 = vpop.f32.mrf.mxu0
      %v961 = vadd.f32 0.0, %v960
      %v962 = vpop.f32.mrf.mxu0
      %v963 = vpop.f32.mrf.mxu0
      %v964 = vadd.f32 0.0, %v963
      %v965 = vpop.f32.mrf.mxu0
      %966 = vdwg.mxu0
      %v967 = vld [vmem:[#allocation2 + $0x20] sm:$0xff]
      %v968 = vld [vmem:[#allocation2 + $0x60] sm:$0xff]
      %v969 = vadd.f32 %v967, %v961
      %v970 = vadd.f32 %v968, %v964
      %971 = vst [vmem:[#allocation2 + $0x20] sm:$0xff] %v969
      %972 = vst [vmem:[#allocation2 + $0x60] sm:$0xff] %v970
      %v973 = vld [vmem:[%s4] sm:$0xff]
      %v974 = vld [vmem:[%s4 + $0x8] sm:$0xff]
      %v975 = vld [vmem:[%s4 + $0x10] sm:$0xff]
      %v976 = vld [vmem:[%s4 + $0x18] sm:$0xff]
      %vm977 = vsmask.f32 6400
      %v978 = vshrl.u32 %v559, 16
      %v980 = vrot.slane %v978, 1
      %v981 = vshll.u32 %v559, 16
      %v983 = vrot.slane %v981, 2
      %v984 = vor.u32 %v980, %v983
      %v986 = vshrl.u32 %v560, 16
      %v988 = vrot.slane %v986, 1
      %v989 = vshll.u32 %v560, 16
      %v991 = vrot.slane %v989, 2
      %v992 = vor.u32 %v988, %v991
      %v993 = vsel %vm977, %v984, %v992
      %v998 = vunpack.c.l.b16 %v973
      %v999 = vunpack.c.h.b16 %v973
      %v1000 = vunpack.c.l.b16 %v974
      %v1001 = vunpack.c.h.b16 %v974
      %v1002 = vunpack.c.l.b16 %v975
      %v1003 = vunpack.c.h.b16 %v975
      %v1004 = vunpack.c.l.b16 %v976
      %v1005 = vunpack.c.h.b16 %v976
      %v1006 = vpack.c.b16 %v1000, %v998
      %v1007 = vpack.c.b16 %v1001, %v999
      %v1008 = vpack.c.b16 %v1004, %v1002
      %v1009 = vpack.c.b16 %v1005, %v1003
      %v1015 = vsel %vm645, %v993, 0
      %1017 = vmatprep.subr.bf16.mxu0 0
      %1018 = vmatpush1.bf16.msra.mxu0 0
      %1019 = vmatprep.subr.bf16.mxu0 0
      %1020 = vmatpush1.bf16.msra.mxu0 0
      %1021 = vmatprep.subr.bf16.mxu0 0
      %1022 = vmatpush1.bf16.msra.mxu0 0
      %1023 = vmatprep.subr.bf16.mxu0 0
      %1024 = vmatpush1.bf16.msra.mxu0 0
      %1025 = vmatprep.subr.bf16.mxu0 0
      %1026 = vmatpush1.bf16.msra.mxu0 0
      %1027 = vmatprep.subr.bf16.mxu0 0
      %1028 = vmatpush1.bf16.msra.mxu0 0
      %1029 = vmatprep.subr.bf16.mxu0 %v1009
      %1030 = vmatpush1.bf16.msra.mxu0 %v1008
      %1031 = vmatprep.subr.bf16.mxu0 %v1007
      %1032 = vmatpush1.bf16.msra.mxu0 %v1006
      %1033 = vmatprep.subr.bf16.mxu0 0
      %1034 = vmatpush2.bf16.msra.mxu0 0
      %1035 = vmatprep.subr.bf16.mxu0 0
      %1036 = vmatpush2.bf16.msra.mxu0 0
      %1037 = vmatprep.subr.bf16.mxu0 0
      %1038 = vmatpush2.bf16.msra.mxu0 0
      %1039 = vmatprep.subr.bf16.mxu0 0
      %1040 = vmatpush2.bf16.msra.mxu0 0
      %1041 = vmatprep.subr.bf16.mxu0 0
      %1042 = vmatpush2.bf16.msra.mxu0 0
      %1043 = vmatprep.subr.bf16.mxu0 0
      %1044 = vmatpush2.bf16.msra.mxu0 0
      %1045 = vmatprep.subr.bf16.mxu0 0
      %1046 = vmatpush2.bf16.msra.mxu0 0
      %1047 = vmatprep.subr.bf16.mxu0 0
      %1048 = vmatpush2.bf16.msra.mxu0 0
      %1049 = vmatprep.mubr.bf16.mxu0 0
      %1050 = vmatmul.mubr.bf16.gmra.mxu0 %v1015
      %v1051 = vpop.f32.mrf.mxu0
      %v1052 = vadd.f32 0.0, %v1051
      %v1053 = vpop.f32.mrf.mxu0
      %v1054 = vadd.f32 0.0, %v1053
      %v1055 = vpop.f32.mrf.mxu0
      %v1056 = vadd.f32 0.0, %v1055
      %v1057 = vpop.f32.mrf.mxu0
      %v1058 = vadd.f32 0.0, %v1057
      %1059 = vdwg.mxu0
      %v1060 = vld [vmem:[#allocation2 + $0x30] sm:$0xff]
      %v1061 = vld [vmem:[#allocation2 + $0x38] sm:$0xff]
      %v1062 = vld [vmem:[#allocation2 + $0x70] sm:$0xff]
      %v1063 = vld [vmem:[#allocation2 + $0x78] sm:$0xff]
      %v1064 = vadd.f32 %v1060, %v1052
      %v1065 = vadd.f32 %v1061, %v1054
      %v1066 = vadd.f32 %v1062, %v1056
      %v1067 = vadd.f32 %v1063, %v1058
      %1068 = vst [vmem:[#allocation2 + $0x30] sm:$0xff] %v1064
      %1069 = vst [vmem:[#allocation2 + $0x38] sm:$0xff] %v1065
      %1070 = vst [vmem:[#allocation2 + $0x70] sm:$0xff] %v1066
      %1071 = vst [vmem:[#allocation2 + $0x78] sm:$0xff] %v1067
      %v1072 = vld [vmem:[%s5] sm:$0xff]
      %v1073 = vld [vmem:[%s5 + $0x8] sm:$0xf]
      %v1074 = vld [vmem:[%s5 + $0xc] sm:$0xff]
      %v1075 = vld [vmem:[%s5 + $0x14] sm:$0xf]
      %v1076 = vld [vmem:[%s5 + $0x18] sm:$0xff]
      %v1077 = vld [vmem:[%s5 + $0x20] sm:$0xf]
      %v1078 = vld [vmem:[%s5 + $0x24] sm:$0xff]
      %v1079 = vld [vmem:[%s5 + $0x2c] sm:$0xf]
      %vm1080 = vcmask 1045504
      %v1081 = vrot.slane %v559, 2
      %v1082 = vrot.slane %v560, 2
      %v1083 = vsel %vm1080, %v1081, %v1082
      %v1092 = vunpack.c.l.b16 %v1072
      %v1093 = vunpack.c.h.b16 %v1072
      %v1094 = vunpack.c.l.b16 %v1073
      %v1095 = vunpack.c.l.b16 %v1074
      %v1096 = vunpack.c.h.b16 %v1074
      %v1097 = vunpack.c.l.b16 %v1075
      %v1098 = vunpack.c.l.b16 %v1076
      %v1099 = vunpack.c.h.b16 %v1076
      %v1100 = vunpack.c.l.b16 %v1077
      %v1101 = vunpack.c.l.b16 %v1078
      %v1102 = vunpack.c.h.b16 %v1078
      %v1103 = vunpack.c.l.b16 %v1079
      %v1104 = vpack.c.b16 %v1095, %v1092
      %v1105 = vpack.c.b16 %v1096, %v1093
      %v1106 = vpack.c.b16 %v1097, %v1094
      %v1107 = vpack.c.b16 %v1101, %v1098
      %v1108 = vpack.c.b16 %v1102, %v1099
      %v1109 = vpack.c.b16 %v1103, %v1100
      %v1117 = vsel %vm645, %v1083, 0
      %1119 = vmatprep.subr.bf16.mxu0 0
      %1120 = vmatpush1.bf16.msra.mxu0 0
      %1121 = vmatprep.subr.bf16.mxu0 0
      %1122 = vmatpush1.bf16.msra.mxu0 0
      %1123 = vmatprep.subr.bf16.mxu0 0
      %1124 = vmatpush1.bf16.msra.mxu0 0
      %1125 = vmatprep.subr.bf16.mxu0 0
      %1126 = vmatpush1.bf16.msra.mxu0 0
      %1127 = vmatprep.subr.bf16.mxu0 0
      %1128 = vmatpush1.bf16.msra.mxu0 0
      %1129 = vmatprep.subr.bf16.mxu0 0
      %1130 = vmatpush1.bf16.msra.mxu0 0
      %1131 = vmatprep.subr.bf16.mxu0 %v1108
      %1132 = vmatpush1.bf16.msra.mxu0 %v1107
      %1133 = vmatprep.subr.bf16.mxu0 %v1105
      %1134 = vmatpush1.bf16.msra.mxu0 %v1104
      %1135 = vmatprep.subr.bf16.mxu0 0
      %1136 = vmatpush2.bf16.msra.mxu0 0
      %1137 = vmatprep.subr.bf16.mxu0 0
      %1138 = vmatpush2.bf16.msra.mxu0 0
      %1139 = vmatprep.subr.bf16.mxu0 0
      %1140 = vmatpush2.bf16.msra.mxu0 0
      %1141 = vmatprep.subr.bf16.mxu0 0
      %1142 = vmatpush2.bf16.msra.mxu0 0
      %1143 = vmatprep.subr.bf16.mxu0 0
      %1144 = vmatpush2.bf16.msra.mxu0 0
      %1145 = vmatprep.subr.bf16.mxu0 0
      %1146 = vmatpush2.bf16.msra.mxu0 0
      %1147 = vmatprep.subr.bf16.mxu0 0
      %1148 = vmatpush2.bf16.msra.mxu0 0
      %1149 = vmatprep.subr.bf16.mxu0 0
      %1150 = vmatpush2.bf16.msra.mxu0 0
      %1151 = vmatprep.mubr.bf16.mxu0 0
      %1152 = vmatmul.mubr.bf16.gmra.mxu0 %v1117
      %v1153 = vpop.f32.mrf.mxu0
      %v1154 = vadd.f32 0.0, %v1153
      %v1155 = vpop.f32.mrf.mxu0
      %v1156 = vadd.f32 0.0, %v1155
      %v1157 = vpop.f32.mrf.mxu0
      %v1158 = vadd.f32 0.0, %v1157
      %v1159 = vpop.f32.mrf.mxu0
      %v1160 = vadd.f32 0.0, %v1159
      %1161 = vdwg.mxu0
      %1162 = vmatprep.subr.bf16.mxu0 0
      %1163 = vmatpush1.bf16.msra.mxu0 0
      %1164 = vmatprep.subr.bf16.mxu0 0
      %1165 = vmatpush1.bf16.msra.mxu0 0
      %1166 = vmatprep.subr.bf16.mxu0 0
      %1167 = vmatpush1.bf16.msra.mxu0 0
      %1168 = vmatprep.subr.bf16.mxu0 0
      %1169 = vmatpush1.bf16.msra.mxu0 0
      %1170 = vmatprep.subr.bf16.mxu0 0
      %1171 = vmatpush1.bf16.msra.mxu0 0
      %1172 = vmatprep.subr.bf16.mxu0 0
      %1173 = vmatpush1.bf16.msra.mxu0 0
      %1174 = vmatprep.subr.bf16.mxu0 0
      %1175 = vmatpush1.bf16.msra.mxu0 %v1109
      %1176 = vmatprep.subr.bf16.mxu0 0
      %1177 = vmatpush1.bf16.msra.mxu0 %v1106
      %1178 = vmatprep.subr.bf16.mxu0 0
      %1179 = vmatpush2.bf16.msra.mxu0 0
      %1180 = vmatprep.subr.bf16.mxu0 0
      %1181 = vmatpush2.bf16.msra.mxu0 0
      %1182 = vmatprep.subr.bf16.mxu0 0
      %1183 = vmatpush2.bf16.msra.mxu0 0
      %1184 = vmatprep.subr.bf16.mxu0 0
      %1185 = vmatpush2.bf16.msra.mxu0 0
      %1186 = vmatprep.subr.bf16.mxu0 0
      %1187 = vmatpush2.bf16.msra.mxu0 0
      %1188 = vmatprep.subr.bf16.mxu0 0
      %1189 = vmatpush2.bf16.msra.mxu0 0
      %1190 = vmatprep.subr.bf16.mxu0 0
      %1191 = vmatpush2.bf16.msra.mxu0 0
      %1192 = vmatprep.subr.bf16.mxu0 0
      %1193 = vmatpush2.bf16.msra.mxu0 0
      %1194 = vmatprep.mubr.bf16.mxu0 0
      %1195 = vmatmul.mubr.bf16.gmra.mxu0 %v1117
      %v1196 = vpop.f32.mrf.mxu0
      %v1197 = vadd.f32 0.0, %v1196
      %v1198 = vpop.f32.mrf.mxu0
      %v1199 = vpop.f32.mrf.mxu0
      %v1200 = vadd.f32 0.0, %v1199
      %v1201 = vpop.f32.mrf.mxu0
      %1202 = vdwg.mxu0
      %v1203 = vld [vmem:[#allocation2 + $0x18] sm:$0xff]
      %v1204 = vld [vmem:[#allocation2 + $0x20] sm:$0xff]
      %v1205 = vld [vmem:[#allocation2 + $0x28] sm:$0xff]
      %v1206 = vld [vmem:[#allocation2 + $0x58] sm:$0xff]
      %v1207 = vld [vmem:[#allocation2 + $0x60] sm:$0xff]
      %v1208 = vld [vmem:[#allocation2 + $0x68] sm:$0xff]
      %v1209 = vadd.f32 %v1203, %v1154
      %v1210 = vadd.f32 %v1204, %v1156
      %v1211 = vadd.f32 %v1205, %v1197
      %v1212 = vadd.f32 %v1206, %v1158
      %v1213 = vadd.f32 %v1207, %v1160
      %v1214 = vadd.f32 %v1208, %v1200
      %1215 = vst [vmem:[#allocation2 + $0x18] sm:$0xff] %v1209
      %1216 = vst [vmem:[#allocation2 + $0x20] sm:$0xff] %v1210
      %1217 = vst [vmem:[#allocation2 + $0x28] sm:$0xff] %v1211
      %1218 = vst [vmem:[#allocation2 + $0x58] sm:$0xff] %v1212
      %1219 = vst [vmem:[#allocation2 + $0x60] sm:$0xff] %v1213
      %1220 = vst [vmem:[#allocation2 + $0x68] sm:$0xff] %v1214
      %v1221 = vld [vmem:[%s6] sm:$0xff]
      %v1222 = vld [vmem:[%s6 + $0x8] sm:$0xff]
      %v1223 = vld [vmem:[%s6 + $0x10] sm:$0xff]
      %v1224 = vld [vmem:[%s6 + $0x18] sm:$0xff]
      %vm1225 = vsmask.f32 5376
      %v1226 = vrot.slane %v978, 2
      %v1227 = vrot.slane %v981, 3
      %v1228 = vor.u32 %v1226, %v1227
      %v1229 = vrot.slane %v986, 2
      %v1230 = vrot.slane %v989, 3
      %v1231 = vor.u32 %v1229, %v1230
      %v1232 = vsel %vm1225, %v1228, %v1231
      %v1237 = vunpack.c.l.b16 %v1221
      %v1238 = vunpack.c.h.b16 %v1221
      %v1239 = vunpack.c.l.b16 %v1222
      %v1240 = vunpack.c.h.b16 %v1222
      %v1241 = vunpack.c.l.b16 %v1223
      %v1242 = vunpack.c.h.b16 %v1223
      %v1243 = vunpack.c.l.b16 %v1224
      %v1244 = vunpack.c.h.b16 %v1224
      %v1245 = vpack.c.b16 %v1239, %v1237
      %v1246 = vpack.c.b16 %v1240, %v1238
      %v1247 = vpack.c.b16 %v1243, %v1241
      %v1248 = vpack.c.b16 %v1244, %v1242
      %v1254 = vsel %vm645, %v1232, 0
      %1256 = vmatprep.subr.bf16.mxu0 0
      %1257 = vmatpush1.bf16.msra.mxu0 0
      %1258 = vmatprep.subr.bf16.mxu0 0
      %1259 = vmatpush1.bf16.msra.mxu0 0
      %1260 = vmatprep.subr.bf16.mxu0 0
      %1261 = vmatpush1.bf16.msra.mxu0 0
      %1262 = vmatprep.subr.bf16.mxu0 0
      %1263 = vmatpush1.bf16.msra.mxu0 0
      %1264 = vmatprep.subr.bf16.mxu0 0
      %1265 = vmatpush1.bf16.msra.mxu0 0
      %1266 = vmatprep.subr.bf16.mxu0 0
      %1267 = vmatpush1.bf16.msra.mxu0 0
      %1268 = vmatprep.subr.bf16.mxu0 %v1248
      %1269 = vmatpush1.bf16.msra.mxu0 %v1247
      %1270 = vmatprep.subr.bf16.mxu0 %v1246
      %1271 = vmatpush1.bf16.msra.mxu0 %v1245
      %1272 = vmatprep.subr.bf16.mxu0 0
      %1273 = vmatpush2.bf16.msra.mxu0 0
      %1274 = vmatprep.subr.bf16.mxu0 0
      %1275 = vmatpush2.bf16.msra.mxu0 0
      %1276 = vmatprep.subr.bf16.mxu0 0
      %1277 = vmatpush2.bf16.msra.mxu0 0
      %1278 = vmatprep.subr.bf16.mxu0 0
      %1279 = vmatpush2.bf16.msra.mxu0 0
      %1280 = vmatprep.subr.bf16.mxu0 0
      %1281 = vmatpush2.bf16.msra.mxu0 0
      %1282 = vmatprep.subr.bf16.mxu0 0
      %1283 = vmatpush2.bf16.msra.mxu0 0
      %1284 = vmatprep.subr.bf16.mxu0 0
      %1285 = vmatpush2.bf16.msra.mxu0 0
      %1286 = vmatprep.subr.bf16.mxu0 0
      %1287 = vmatpush2.bf16.msra.mxu0 0
      %1288 = vmatprep.mubr.bf16.mxu0 0
      %1289 = vmatmul.mubr.bf16.gmra.mxu0 %v1254
      %v1290 = vpop.f32.mrf.mxu0
      %v1291 = vadd.f32 0.0, %v1290
      %v1292 = vpop.f32.mrf.mxu0
      %v1293 = vadd.f32 0.0, %v1292
      %v1294 = vpop.f32.mrf.mxu0
      %v1295 = vadd.f32 0.0, %v1294
      %v1296 = vpop.f32.mrf.mxu0
      %v1297 = vadd.f32 0.0, %v1296
      %1298 = vdwg.mxu0
      %v1299 = vld [vmem:[#allocation2 + $0x10] sm:$0xff]
      %v1300 = vld [vmem:[#allocation2 + $0x18] sm:$0xff]
      %v1301 = vld [vmem:[#allocation2 + $0x50] sm:$0xff]
      %v1302 = vld [vmem:[#allocation2 + $0x58] sm:$0xff]
      %v1303 = vadd.f32 %v1299, %v1291
      %v1304 = vadd.f32 %v1300, %v1293
      %v1305 = vadd.f32 %v1301, %v1295
      %v1306 = vadd.f32 %v1302, %v1297
      %1307 = vst [vmem:[#allocation2 + $0x10] sm:$0xff] %v1303
      %1308 = vst [vmem:[#allocation2 + $0x18] sm:$0xff] %v1304
      %1309 = vst [vmem:[#allocation2 + $0x50] sm:$0xff] %v1305
      %1310 = vst [vmem:[#allocation2 + $0x58] sm:$0xff] %v1306
      %v1311 = vld [vmem:[%s7] sm:$0xff]
      %v1312 = vld [vmem:[%s7 + $0x8] sm:$0xff]
      %v1313 = vld [vmem:[%s7 + $0x10] sm:$0xff]
      %v1314 = vld [vmem:[%s7 + $0x18] sm:$0xff]
      %vm1315 = vsmask.f32 4352
      %v1316 = vrot.slane %v978, 3
      %v1317 = vrot.slane %v981, 4
      %v1318 = vor.u32 %v1316, %v1317
      %v1319 = vrot.slane %v986, 3
      %v1320 = vrot.slane %v989, 4
      %v1321 = vor.u32 %v1319, %v1320
      %v1322 = vsel %vm1315, %v1318, %v1321
      %v1327 = vunpack.c.l.b16 %v1311
      %v1328 = vunpack.c.h.b16 %v1311
      %v1329 = vunpack.c.l.b16 %v1312
      %v1330 = vunpack.c.h.b16 %v1312
      %v1331 = vunpack.c.l.b16 %v1313
      %v1332 = vunpack.c.h.b16 %v1313
      %v1333 = vunpack.c.l.b16 %v1314
      %v1334 = vunpack.c.h.b16 %v1314
      %v1335 = vpack.c.b16 %v1329, %v1327
      %v1336 = vpack.c.b16 %v1330, %v1328
      %v1337 = vpack.c.b16 %v1333, %v1331
      %v1338 = vpack.c.b16 %v1334, %v1332
      %v1344 = vsel %vm645, %v1322, 0
      %1346 = vmatprep.subr.bf16.mxu0 0
      %1347 = vmatpush1.bf16.msra.mxu0 0
      %1348 = vmatprep.subr.bf16.mxu0 0
      %1349 = vmatpush1.bf16.msra.mxu0 0
      %1350 = vmatprep.subr.bf16.mxu0 0
      %1351 = vmatpush1.bf16.msra.mxu0 0
      %1352 = vmatprep.subr.bf16.mxu0 0
      %1353 = vmatpush1.bf16.msra.mxu0 0
      %1354 = vmatprep.subr.bf16.mxu0 0
      %1355 = vmatpush1.bf16.msra.mxu0 0
      %1356 = vmatprep.subr.bf16.mxu0 0
      %1357 = vmatpush1.bf16.msra.mxu0 0
      %1358 = vmatprep.subr.bf16.mxu0 %v1338
      %1359 = vmatpush1.bf16.msra.mxu0 %v1337
      %1360 = vmatprep.subr.bf16.mxu0 %v1336
      %1361 = vmatpush1.bf16.msra.mxu0 %v1335
      %1362 = vmatprep.subr.bf16.mxu0 0
      %1363 = vmatpush2.bf16.msra.mxu0 0
      %1364 = vmatprep.subr.bf16.mxu0 0
      %1365 = vmatpush2.bf16.msra.mxu0 0
      %1366 = vmatprep.subr.bf16.mxu0 0
      %1367 = vmatpush2.bf16.msra.mxu0 0
      %1368 = vmatprep.subr.bf16.mxu0 0
      %1369 = vmatpush2.bf16.msra.mxu0 0
      %1370 = vmatprep.subr.bf16.mxu0 0
      %1371 = vmatpush2.bf16.msra.mxu0 0
      %1372 = vmatprep.subr.bf16.mxu0 0
      %1373 = vmatpush2.bf16.msra.mxu0 0
      %1374 = vmatprep.subr.bf16.mxu0 0
      %1375 = vmatpush2.bf16.msra.mxu0 0
      %1376 = vmatprep.subr.bf16.mxu0 0
      %1377 = vmatpush2.bf16.msra.mxu0 0
      %1378 = vmatprep.mubr.bf16.mxu0 0
      %1379 = vmatmul.mubr.bf16.gmra.mxu0 %v1344
      %v1380 = vpop.f32.mrf.mxu0
      %v1381 = vadd.f32 0.0, %v1380
      %v1382 = vpop.f32.mrf.mxu0
      %v1383 = vadd.f32 0.0, %v1382
      %v1384 = vpop.f32.mrf.mxu0
      %v1385 = vadd.f32 0.0, %v1384
      %v1386 = vpop.f32.mrf.mxu0
      %v1387 = vadd.f32 0.0, %v1386
      %1388 = vdwg.mxu0
      %v1389 = vld [vmem:[#allocation2 + $0x10] sm:$0xff]
      %v1390 = vld [vmem:[#allocation2 + $0x18] sm:$0xff]
      %v1391 = vld [vmem:[#allocation2 + $0x50] sm:$0xff]
      %v1392 = vld [vmem:[#allocation2 + $0x58] sm:$0xff]
      %v1393 = vadd.f32 %v1389, %v1381
      %v1394 = vadd.f32 %v1390, %v1383
      %v1395 = vadd.f32 %v1391, %v1385
      %v1396 = vadd.f32 %v1392, %v1387
      %1397 = vst [vmem:[#allocation2 + $0x10] sm:$0xff] %v1393
      %1398 = vst [vmem:[#allocation2 + $0x18] sm:$0xff] %v1394
      %1399 = vst [vmem:[#allocation2 + $0x50] sm:$0xff] %v1395
      %1400 = vst [vmem:[#allocation2 + $0x58] sm:$0xff] %v1396
      %v1401 = vld [vmem:[%s8] sm:$0xff]
      %v1402 = vld [vmem:[%s8 + $0x8] sm:$0xf]
      %v1403 = vld [vmem:[%s8 + $0xc] sm:$0xff]
      %v1404 = vld [vmem:[%s8 + $0x14] sm:$0xf]
      %v1405 = vld [vmem:[%s8 + $0x18] sm:$0xff]
      %v1406 = vld [vmem:[%s8 + $0x20] sm:$0xf]
      %v1407 = vld [vmem:[%s8 + $0x24] sm:$0xff]
      %v1408 = vld [vmem:[%s8 + $0x2c] sm:$0xf]
      %v1409 = vpack.c.b16 %v558, %v557
      %v1418 = vunpack.c.l.b16 %v1401
      %v1419 = vunpack.c.h.b16 %v1401
      %v1420 = vunpack.c.l.b16 %v1402
      %v1421 = vunpack.c.l.b16 %v1403
      %v1422 = vunpack.c.h.b16 %v1403
      %v1423 = vunpack.c.l.b16 %v1404
      %v1424 = vunpack.c.l.b16 %v1405
      %v1425 = vunpack.c.h.b16 %v1405
      %v1426 = vunpack.c.l.b16 %v1406
      %v1427 = vunpack.c.l.b16 %v1407
      %v1428 = vunpack.c.h.b16 %v1407
      %v1429 = vunpack.c.l.b16 %v1408
      %v1430 = vpack.c.b16 %v1421, %v1418
      %v1431 = vpack.c.b16 %v1422, %v1419
      %v1432 = vpack.c.b16 %v1423, %v1420
      %v1433 = vpack.c.b16 %v1427, %v1424
      %v1434 = vpack.c.b16 %v1428, %v1425
      %v1435 = vpack.c.b16 %v1429, %v1426
      %v1443 = vsel %vm645, %v1409, 0
      %1445 = vmatprep.subr.bf16.mxu0 0
      %1446 = vmatpush1.bf16.msra.mxu0 0
      %1447 = vmatprep.subr.bf16.mxu0 0
      %1448 = vmatpush1.bf16.msra.mxu0 0
      %1449 = vmatprep.subr.bf16.mxu0 0
      %1450 = vmatpush1.bf16.msra.mxu0 0
      %1451 = vmatprep.subr.bf16.mxu0 0
      %1452 = vmatpush1.bf16.msra.mxu0 0
      %1453 = vmatprep.subr.bf16.mxu0 0
      %1454 = vmatpush1.bf16.msra.mxu0 0
      %1455 = vmatprep.subr.bf16.mxu0 0
      %1456 = vmatpush1.bf16.msra.mxu0 0
      %1457 = vmatprep.subr.bf16.mxu0 %v1434
      %1458 = vmatpush1.bf16.msra.mxu0 %v1433
      %1459 = vmatprep.subr.bf16.mxu0 %v1431
      %1460 = vmatpush1.bf16.msra.mxu0 %v1430
      %1461 = vmatprep.subr.bf16.mxu0 0
      %1462 = vmatpush2.bf16.msra.mxu0 0
      %1463 = vmatprep.subr.bf16.mxu0 0
      %1464 = vmatpush2.bf16.msra.mxu0 0
      %1465 = vmatprep.subr.bf16.mxu0 0
      %1466 = vmatpush2.bf16.msra.mxu0 0
      %1467 = vmatprep.subr.bf16.mxu0 0
      %1468 = vmatpush2.bf16.msra.mxu0 0
      %1469 = vmatprep.subr.bf16.mxu0 0
      %1470 = vmatpush2.bf16.msra.mxu0 0
      %1471 = vmatprep.subr.bf16.mxu0 0
      %1472 = vmatpush2.bf16.msra.mxu0 0
      %1473 = vmatprep.subr.bf16.mxu0 0
      %1474 = vmatpush2.bf16.msra.mxu0 0
      %1475 = vmatprep.subr.bf16.mxu0 0
      %1476 = vmatpush2.bf16.msra.mxu0 0
      %1477 = vmatprep.mubr.bf16.mxu0 0
      %1478 = vmatmul.mubr.bf16.gmra.mxu0 %v1443
      %v1479 = vpop.f32.mrf.mxu0
      %v1480 = vadd.f32 0.0, %v1479
      %v1481 = vpop.f32.mrf.mxu0
      %v1482 = vadd.f32 0.0, %v1481
      %v1483 = vpop.f32.mrf.mxu0
      %v1484 = vadd.f32 0.0, %v1483
      %v1485 = vpop.f32.mrf.mxu0
      %v1486 = vadd.f32 0.0, %v1485
      %1487 = vdwg.mxu0
      %1488 = vmatprep.subr.bf16.mxu0 0
      %1489 = vmatpush1.bf16.msra.mxu0 0
      %1490 = vmatprep.subr.bf16.mxu0 0
      %1491 = vmatpush1.bf16.msra.mxu0 0
      %1492 = vmatprep.subr.bf16.mxu0 0
      %1493 = vmatpush1.bf16.msra.mxu0 0
      %1494 = vmatprep.subr.bf16.mxu0 0
      %1495 = vmatpush1.bf16.msra.mxu0 0
      %1496 = vmatprep.subr.bf16.mxu0 0
      %1497 = vmatpush1.bf16.msra.mxu0 0
      %1498 = vmatprep.subr.bf16.mxu0 0
      %1499 = vmatpush1.bf16.msra.mxu0 0
      %1500 = vmatprep.subr.bf16.mxu0 0
      %1501 = vmatpush1.bf16.msra.mxu0 %v1435
      %1502 = vmatprep.subr.bf16.mxu0 0
      %1503 = vmatpush1.bf16.msra.mxu0 %v1432
      %1504 = vmatprep.subr.bf16.mxu0 0
      %1505 = vmatpush2.bf16.msra.mxu0 0
      %1506 = vmatprep.subr.bf16.mxu0 0
      %1507 = vmatpush2.bf16.msra.mxu0 0
      %1508 = vmatprep.subr.bf16.mxu0 0
      %1509 = vmatpush2.bf16.msra.mxu0 0
      %1510 = vmatprep.subr.bf16.mxu0 0
      %1511 = vmatpush2.bf16.msra.mxu0 0
      %1512 = vmatprep.subr.bf16.mxu0 0
      %1513 = vmatpush2.bf16.msra.mxu0 0
      %1514 = vmatprep.subr.bf16.mxu0 0
      %1515 = vmatpush2.bf16.msra.mxu0 0
      %1516 = vmatprep.subr.bf16.mxu0 0
      %1517 = vmatpush2.bf16.msra.mxu0 0
      %1518 = vmatprep.subr.bf16.mxu0 0
      %1519 = vmatpush2.bf16.msra.mxu0 0
      %1520 = vmatprep.mubr.bf16.mxu0 0
      %1521 = vmatmul.mubr.bf16.gmra.mxu0 %v1443
      %v1522 = vpop.f32.mrf.mxu0
      %v1523 = vadd.f32 0.0, %v1522
      %v1524 = vpop.f32.mrf.mxu0
      %v1525 = vpop.f32.mrf.mxu0
      %v1526 = vadd.f32 0.0, %v1525
      %v1527 = vpop.f32.mrf.mxu0
      %1528 = vdwg.mxu0
      %v1529 = vld [vmem:[#allocation2 + $0x18] sm:$0xff]
      %v1530 = vld [vmem:[#allocation2 + $0x20] sm:$0xff]
      %v1531 = vld [vmem:[#allocation2 + $0x28] sm:$0xff]
      %v1532 = vld [vmem:[#allocation2 + $0x58] sm:$0xff]
      %v1533 = vld [vmem:[#allocation2 + $0x60] sm:$0xff]
      %v1534 = vld [vmem:[#allocation2 + $0x68] sm:$0xff]
      %v1535 = vadd.f32 %v1529, %v1480
      %v1536 = vadd.f32 %v1530, %v1482
      %v1537 = vadd.f32 %v1531, %v1523
      %v1538 = vadd.f32 %v1532, %v1484
      %v1539 = vadd.f32 %v1533, %v1486
      %v1540 = vadd.f32 %v1534, %v1526
      %1541 = vst [vmem:[#allocation2 + $0x18] sm:$0xff] %v1535
      %1542 = vst [vmem:[#allocation2 + $0x20] sm:$0xff] %v1536
      %1543 = vst [vmem:[#allocation2 + $0x28] sm:$0xff] %v1537
      %1544 = vst [vmem:[#allocation2 + $0x58] sm:$0xff] %v1538
      %1545 = vst [vmem:[#allocation2 + $0x60] sm:$0xff] %v1539
      %1546 = vst [vmem:[#allocation2 + $0x68] sm:$0xff] %v1540
      %v1547 = vld [vmem:[%s9] sm:$0xff]
      %v1548 = vld [vmem:[%s9 + $0x8] sm:$0xff]
      %v1549 = vld [vmem:[%s9 + $0x10] sm:$0xff]
      %v1550 = vld [vmem:[%s9 + $0x18] sm:$0xff]
      %v1552 = vunpack.c.l.b16 %v536
      %v1553 = vpack.c.b16 %v1552, %v1552
      %vm1554 = vsmask.f32 7424
      %v1555 = vshrl.u32 %v1409, 16
      %v1557 = vshll.u32 %v1409, 16
      %v1559 = vrot.slane %v1557, 1
      %v1560 = vor.u32 %v1555, %v1559
      %v1562 = vshll.u32 %v1553, 16
      %v1564 = vrot.slane %v1562, 1
      %v1565 = vsel %vm1554, %v1560, %v1564
      %v1570 = vunpack.c.l.b16 %v1547
      %v1571 = vunpack.c.h.b16 %v1547
      %v1572 = vunpack.c.l.b16 %v1548
      %v1573 = vunpack.c.h.b16 %v1548
      %v1574 = vunpack.c.l.b16 %v1549
      %v1575 = vunpack.c.h.b16 %v1549
      %v1576 = vunpack.c.l.b16 %v1550
      %v1577 = vunpack.c.h.b16 %v1550
      %v1578 = vpack.c.b16 %v1572, %v1570
      %v1579 = vpack.c.b16 %v1573, %v1571
      %v1580 = vpack.c.b16 %v1576, %v1574
      %v1581 = vpack.c.b16 %v1577, %v1575
      %v1587 = vsel %vm645, %v1565, 0
      %1589 = vmatprep.subr.bf16.mxu0 0
      %1590 = vmatpush1.bf16.msra.mxu0 0
      %1591 = vmatprep.subr.bf16.mxu0 0
      %1592 = vmatpush1.bf16.msra.mxu0 0
      %1593 = vmatprep.subr.bf16.mxu0 0
      %1594 = vmatpush1.bf16.msra.mxu0 0
      %1595 = vmatprep.subr.bf16.mxu0 0
      %1596 = vmatpush1.bf16.msra.mxu0 0
      %1597 = vmatprep.subr.bf16.mxu0 0
      %1598 = vmatpush1.bf16.msra.mxu0 0
      %1599 = vmatprep.subr.bf16.mxu0 0
      %1600 = vmatpush1.bf16.msra.mxu0 0
      %1601 = vmatprep.subr.bf16.mxu0 %v1581
      %1602 = vmatpush1.bf16.msra.mxu0 %v1580
      %1603 = vmatprep.subr.bf16.mxu0 %v1579
      %1604 = vmatpush1.bf16.msra.mxu0 %v1578
      %1605 = vmatprep.subr.bf16.mxu0 0
      %1606 = vmatpush2.bf16.msra.mxu0 0
      %1607 = vmatprep.subr.bf16.mxu0 0
      %1608 = vmatpush2.bf16.msra.mxu0 0
      %1609 = vmatprep.subr.bf16.mxu0 0
      %1610 = vmatpush2.bf16.msra.mxu0 0
      %1611 = vmatprep.subr.bf16.mxu0 0
      %1612 = vmatpush2.bf16.msra.mxu0 0
      %1613 = vmatprep.subr.bf16.mxu0 0
      %1614 = vmatpush2.bf16.msra.mxu0 0
      %1615 = vmatprep.subr.bf16.mxu0 0
      %1616 = vmatpush2.bf16.msra.mxu0 0
      %1617 = vmatprep.subr.bf16.mxu0 0
      %1618 = vmatpush2.bf16.msra.mxu0 0
      %1619 = vmatprep.subr.bf16.mxu0 0
      %1620 = vmatpush2.bf16.msra.mxu0 0
      %1621 = vmatprep.mubr.bf16.mxu0 0
      %1622 = vmatmul.mubr.bf16.gmra.mxu0 %v1587
      %v1623 = vpop.f32.mrf.mxu0
      %v1624 = vadd.f32 0.0, %v1623
      %v1625 = vpop.f32.mrf.mxu0
      %v1626 = vadd.f32 0.0, %v1625
      %v1627 = vpop.f32.mrf.mxu0
      %v1628 = vadd.f32 0.0, %v1627
      %v1629 = vpop.f32.mrf.mxu0
      %v1630 = vadd.f32 0.0, %v1629
      %1631 = vdwg.mxu0
      %v1632 = vld [vmem:[#allocation2 + $0x30] sm:$0xff]
      %v1633 = vld [vmem:[#allocation2 + $0x38] sm:$0xff]
      %v1634 = vld [vmem:[#allocation2 + $0x70] sm:$0xff]
      %v1635 = vld [vmem:[#allocation2 + $0x78] sm:$0xff]
      %v1636 = vadd.f32 %v1632, %v1624
      %v1637 = vadd.f32 %v1633, %v1626
      %v1638 = vadd.f32 %v1634, %v1628
      %v1639 = vadd.f32 %v1635, %v1630
      %1640 = vst [vmem:[#allocation2 + $0x30] sm:$0xff] %v1636
      %1641 = vst [vmem:[#allocation2 + $0x38] sm:$0xff] %v1637
      %1642 = vst [vmem:[#allocation2 + $0x70] sm:$0xff] %v1638
      %1643 = vst [vmem:[#allocation2 + $0x78] sm:$0xff] %v1639
      %v1644 = vld [vmem:[%s10] sm:$0xf]
      %v1645 = vld [vmem:[%s10 + $0x4] sm:$0xf]
      %v1646 = vld [vmem:[%s10 + $0x8] sm:$0xf]
      %v1647 = vld [vmem:[%s10 + $0xc] sm:$0xf]
      %v1648 = vrot.slane %v1409, 1
      %v1649 = vrot.slane %v1553, 1
      %v1650 = vsel %vm907, %v1648, %v1649
      %v1655 = vunpack.c.l.b16 %v1644
      %v1656 = vunpack.c.l.b16 %v1645
      %v1657 = vunpack.c.l.b16 %v1646
      %v1658 = vunpack.c.l.b16 %v1647
      %v1659 = vpack.c.b16 %v1656, %v1655
      %v1660 = vpack.c.b16 %v1658, %v1657
      %v1664 = vsel %vm645, %v1650, 0
      %1666 = vmatprep.subr.bf16.mxu0 0
      %1667 = vmatpush1.bf16.msra.mxu0 0
      %1668 = vmatprep.subr.bf16.mxu0 0
      %1669 = vmatpush1.bf16.msra.mxu0 0
      %1670 = vmatprep.subr.bf16.mxu0 0
      %1671 = vmatpush1.bf16.msra.mxu0 0
      %1672 = vmatprep.subr.bf16.mxu0 0
      %1673 = vmatpush1.bf16.msra.mxu0 0
      %1674 = vmatprep.subr.bf16.mxu0 0
      %1675 = vmatpush1.bf16.msra.mxu0 0
      %1676 = vmatprep.subr.bf16.mxu0 0
      %1677 = vmatpush1.bf16.msra.mxu0 0
      %1678 = vmatprep.subr.bf16.mxu0 0
      %1679 = vmatpush1.bf16.msra.mxu0 %v1660
      %1680 = vmatprep.subr.bf16.mxu0 0
      %1681 = vmatpush1.bf16.msra.mxu0 %v1659
      %1682 = vmatprep.subr.bf16.mxu0 0
      %1683 = vmatpush2.bf16.msra.mxu0 0
      %1684 = vmatprep.subr.bf16.mxu0 0
      %1685 = vmatpush2.bf16.msra.mxu0 0
      %1686 = vmatprep.subr.bf16.mxu0 0
      %1687 = vmatpush2.bf16.msra.mxu0 0
      %1688 = vmatprep.subr.bf16.mxu0 0
      %1689 = vmatpush2.bf16.msra.mxu0 0
      %1690 = vmatprep.subr.bf16.mxu0 0
      %1691 = vmatpush2.bf16.msra.mxu0 0
      %1692 = vmatprep.subr.bf16.mxu0 0
      %1693 = vmatpush2.bf16.msra.mxu0 0
      %1694 = vmatprep.subr.bf16.mxu0 0
      %1695 = vmatpush2.bf16.msra.mxu0 0
      %1696 = vmatprep.subr.bf16.mxu0 0
      %1697 = vmatpush2.bf16.msra.mxu0 0
      %1698 = vmatprep.mubr.bf16.mxu0 0
      %1699 = vmatmul.mubr.bf16.gmra.mxu0 %v1664
      %v1700 = vpop.f32.mrf.mxu0
      %v1701 = vadd.f32 0.0, %v1700
      %v1702 = vpop.f32.mrf.mxu0
      %v1703 = vpop.f32.mrf.mxu0
      %v1704 = vadd.f32 0.0, %v1703
      %v1705 = vpop.f32.mrf.mxu0
      %1706 = vdwg.mxu0
      %v1707 = vld [vmem:[#allocation2 + $0x20] sm:$0xff]
      %v1708 = vld [vmem:[#allocation2 + $0x60] sm:$0xff]
      %v1709 = vadd.f32 %v1707, %v1701
      %v1710 = vadd.f32 %v1708, %v1704
      %1711 = vst [vmem:[#allocation2 + $0x20] sm:$0xff] %v1709
      %1712 = vst [vmem:[#allocation2 + $0x60] sm:$0xff] %v1710
      %v1713 = vld [vmem:[%s11] sm:$0xf]
      %v1714 = vld [vmem:[%s11 + $0x4] sm:$0xf]
      %v1715 = vld [vmem:[%s11 + $0x8] sm:$0xf]
      %v1716 = vld [vmem:[%s11 + $0xc] sm:$0xf]
      %v1717 = vrot.slane %v1409, 2
      %v1718 = vrot.slane %v1553, 2
      %v1719 = vsel %vm1080, %v1717, %v1718
      %v1724 = vunpack.c.l.b16 %v1713
      %v1725 = vunpack.c.l.b16 %v1714
      %v1726 = vunpack.c.l.b16 %v1715
      %v1727 = vunpack.c.l.b16 %v1716
      %v1728 = vpack.c.b16 %v1725, %v1724
      %v1729 = vpack.c.b16 %v1727, %v1726
      %v1733 = vsel %vm645, %v1719, 0
      %1735 = vmatprep.subr.bf16.mxu0 0
      %1736 = vmatpush1.bf16.msra.mxu0 0
      %1737 = vmatprep.subr.bf16.mxu0 0
      %1738 = vmatpush1.bf16.msra.mxu0 0
      %1739 = vmatprep.subr.bf16.mxu0 0
      %1740 = vmatpush1.bf16.msra.mxu0 0
      %1741 = vmatprep.subr.bf16.mxu0 0
      %1742 = vmatpush1.bf16.msra.mxu0 0
      %1743 = vmatprep.subr.bf16.mxu0 0
      %1744 = vmatpush1.bf16.msra.mxu0 0
      %1745 = vmatprep.subr.bf16.mxu0 0
      %1746 = vmatpush1.bf16.msra.mxu0 0
      %1747 = vmatprep.subr.bf16.mxu0 0
      %1748 = vmatpush1.bf16.msra.mxu0 %v1729
      %1749 = vmatprep.subr.bf16.mxu0 0
      %1750 = vmatpush1.bf16.msra.mxu0 %v1728
      %1751 = vmatprep.subr.bf16.mxu0 0
      %1752 = vmatpush2.bf16.msra.mxu0 0
      %1753 = vmatprep.subr.bf16.mxu0 0
      %1754 = vmatpush2.bf16.msra.mxu0 0
      %1755 = vmatprep.subr.bf16.mxu0 0
      %1756 = vmatpush2.bf16.msra.mxu0 0
      %1757 = vmatprep.subr.bf16.mxu0 0
      %1758 = vmatpush2.bf16.msra.mxu0 0
      %1759 = vmatprep.subr.bf16.mxu0 0
      %1760 = vmatpush2.bf16.msra.mxu0 0
      %1761 = vmatprep.subr.bf16.mxu0 0
      %1762 = vmatpush2.bf16.msra.mxu0 0
      %1763 = vmatprep.subr.bf16.mxu0 0
      %1764 = vmatpush2.bf16.msra.mxu0 0
      %1765 = vmatprep.subr.bf16.mxu0 0
      %1766 = vmatpush2.bf16.msra.mxu0 0
      %1767 = vmatprep.mubr.bf16.mxu0 0
      %1768 = vmatmul.mubr.bf16.gmra.mxu0 %v1733
      %v1769 = vpop.f32.mrf.mxu0
      %v1770 = vadd.f32 0.0, %v1769
      %v1771 = vpop.f32.mrf.mxu0
      %v1772 = vpop.f32.mrf.mxu0
      %v1773 = vadd.f32 0.0, %v1772
      %v1774 = vpop.f32.mrf.mxu0
      %1775 = vdwg.mxu0
      %v1776 = vld [vmem:[#allocation2 + $0x38] sm:$0xff]
      %v1777 = vld [vmem:[#allocation2 + $0x78] sm:$0xff]
      %v1778 = vadd.f32 %v1776, %v1770
      %v1779 = vadd.f32 %v1777, %v1773
      %1780 = vst [vmem:[#allocation2 + $0x38] sm:$0xff] %v1778
      %1781 = vst [vmem:[#allocation2 + $0x78] sm:$0xff] %v1779
      %v1782 = vld [vmem:[#allocation2] sm:$0xff]
      %v1783 = vld [vmem:[#allocation2 + $0x8] sm:$0xff]
      %v1784 = vld [vmem:[#allocation2 + $0x10] sm:$0xff]
      %v1785 = vld [vmem:[#allocation2 + $0x18] sm:$0xff]
      %v1786 = vld [vmem:[#allocation2 + $0x20] sm:$0xff]
      %v1787 = vld [vmem:[#allocation2 + $0x28] sm:$0xff]
      %v1788 = vld [vmem:[#allocation2 + $0x30] sm:$0xff]
      %v1789 = vld [vmem:[#allocation2 + $0x38] sm:$0xff]
      %v1790 = vld [vmem:[#allocation2 + $0x40] sm:$0xff]
      %v1791 = vld [vmem:[#allocation2 + $0x48] sm:$0xff]
      %v1792 = vld [vmem:[#allocation2 + $0x50] sm:$0xff]
      %v1793 = vld [vmem:[#allocation2 + $0x58] sm:$0xff]
      %v1794 = vld [vmem:[#allocation2 + $0x60] sm:$0xff]
      %v1795 = vld [vmem:[#allocation2 + $0x68] sm:$0xff]
      %v1796 = vld [vmem:[#allocation2 + $0x70] sm:$0xff]
      %v1797 = vld [vmem:[#allocation2 + $0x78] sm:$0xff]
      %v1798 = vld [vmem:[%s12] sm:$0xff]
      %v1800 = vlaneseq
      %v1801 = vshrl.u32 %v1800, 7
      %v1802 = vsub.s32 0, %v1801
      %v1803 = vrot.slane %v1798, %v1802
      %v1804 = vlaneseq
      %v1805 = vshrl.u32 %v1804, 7
      %v1806 = vsub.s32 1, %v1805
      %v1807 = vrot.slane %v1798, %v1806
      %v1808 = vlaneseq
      %v1809 = vshrl.u32 %v1808, 7
      %v1810 = vsub.s32 2, %v1809
      %v1811 = vrot.slane %v1798, %v1810
      %v1812 = vlaneseq
      %v1813 = vshrl.u32 %v1812, 7
      %v1814 = vsub.s32 3, %v1813
      %v1815 = vrot.slane %v1798, %v1814
      %v1816 = vlaneseq
      %v1817 = vshrl.u32 %v1816, 7
      %v1818 = vsub.s32 4, %v1817
      %v1819 = vrot.slane %v1798, %v1818
      %v1820 = vlaneseq
      %v1821 = vshrl.u32 %v1820, 7
      %v1822 = vsub.s32 5, %v1821
      %v1823 = vrot.slane %v1798, %v1822
      %v1824 = vlaneseq
      %v1825 = vshrl.u32 %v1824, 7
      %v1826 = vsub.s32 6, %v1825
      %v1827 = vrot.slane %v1798, %v1826
      %v1828 = vlaneseq
      %v1829 = vshrl.u32 %v1828, 7
      %v1830 = vsub.s32 7, %v1829
      %v1831 = vrot.slane %v1798, %v1830
      %v1840 = vadd.f32 %v1782, %v1803
      %v1841 = vadd.f32 %v1783, %v1807
      %v1842 = vadd.f32 %v1784, %v1811
      %v1843 = vadd.f32 %v1785, %v1815
      %v1844 = vadd.f32 %v1786, %v1819
      %v1845 = vadd.f32 %v1787, %v1823
      %v1846 = vadd.f32 %v1788, %v1827
      %v1847 = vadd.f32 %v1789, %v1831
      %v1848 = vadd.f32 %v1790, %v1803
      %v1849 = vadd.f32 %v1791, %v1807
      %v1850 = vadd.f32 %v1792, %v1811
      %v1851 = vadd.f32 %v1793, %v1815
      %v1852 = vadd.f32 %v1794, %v1819
      %v1853 = vadd.f32 %v1795, %v1823
      %v1854 = vadd.f32 %v1796, %v1827
      %v1855 = vadd.f32 %v1797, %v1831
      %v1856 = vmax.f32 %v1840, 0.0
      %v1857 = vmax.f32 %v1841, 0.0
      %v1858 = vmax.f32 %v1842, 0.0
      %v1859 = vmax.f32 %v1843, 0.0
      %v1860 = vmax.f32 %v1844, 0.0
      %v1861 = vmax.f32 %v1845, 0.0
      %v1862 = vmax.f32 %v1846, 0.0
      %v1863 = vmax.f32 %v1847, 0.0
      %v1864 = vmax.f32 %v1848, 0.0
      %v1865 = vmax.f32 %v1849, 0.0
      %v1866 = vmax.f32 %v1850, 0.0
      %v1867 = vmax.f32 %v1851, 0.0
      %v1868 = vmax.f32 %v1852, 0.0
      %v1869 = vmax.f32 %v1853, 0.0
      %v1870 = vmax.f32 %v1854, 0.0
      %v1871 = vmax.f32 %v1855, 0.0
      %v1872 = vpack.c.bf16 %v1864, %v1856
      %v1873 = vpack.c.bf16 %v1865, %v1857
      %v1874 = vpack.c.bf16 %v1866, %v1858
      %v1875 = vpack.c.bf16 %v1867, %v1859
      %v1876 = vpack.c.bf16 %v1868, %v1860
      %v1877 = vpack.c.bf16 %v1869, %v1861
      %v1878 = vpack.c.bf16 %v1870, %v1862
      %v1879 = vpack.c.bf16 %v1871, %v1863
      %v1880 = vld [vmem:[%s13] sm:$0xf]
      %v1881 = vld [vmem:[%s13 + $0x4] sm:$0xf]
      %v1882 = vld [vmem:[%s13 + $0x8] sm:$0xf]
      %v1883 = vld [vmem:[%s13 + $0xc] sm:$0xf]
      %v1884 = vld [vmem:[%s13 + $0x10] sm:$0xf]
      %v1885 = vld [vmem:[%s13 + $0x14] sm:$0xf]
      %v1886 = vld [vmem:[%s13 + $0x18] sm:$0xf]
      %v1887 = vld [vmem:[%s13 + $0x1c] sm:$0xf]
      %v1888 = vld [vmem:[%s13 + $0x20] sm:$0xf]
      %v1889 = vld [vmem:[%s13 + $0x24] sm:$0xf]
      %v1890 = vld [vmem:[%s13 + $0x28] sm:$0xf]
      %v1891 = vld [vmem:[%s13 + $0x2c] sm:$0xf]
      %v1892 = vld [vmem:[%s13 + $0x30] sm:$0xf]
      %v1893 = vld [vmem:[%s13 + $0x34] sm:$0xf]
      %v1894 = vld [vmem:[%s13 + $0x38] sm:$0xf]
      %v1895 = vld [vmem:[%s13 + $0x3c] sm:$0xf]
      %v1896 = vld [vmem:[%s13 + $0x40] sm:$0xf]
      %v1897 = vld [vmem:[%s13 + $0x44] sm:$0xf]
      %v1898 = vld [vmem:[%s13 + $0x48] sm:$0xf]
      %v1899 = vld [vmem:[%s13 + $0x4c] sm:$0xf]
      %v1900 = vld [vmem:[%s13 + $0x50] sm:$0xf]
      %v1901 = vld [vmem:[%s13 + $0x54] sm:$0xf]
      %v1902 = vld [vmem:[%s13 + $0x58] sm:$0xf]
      %v1903 = vld [vmem:[%s13 + $0x5c] sm:$0xf]
      %v1904 = vld [vmem:[%s13 + $0x60] sm:$0xf]
      %v1905 = vld [vmem:[%s13 + $0x64] sm:$0xf]
      %v1906 = vld [vmem:[%s13 + $0x68] sm:$0xf]
      %v1907 = vld [vmem:[%s13 + $0x6c] sm:$0xf]
      %v1908 = vld [vmem:[%s13 + $0x70] sm:$0xf]
      %v1909 = vld [vmem:[%s13 + $0x74] sm:$0xf]
      %v1910 = vld [vmem:[%s13 + $0x78] sm:$0xf]
      %v1911 = vld [vmem:[%s13 + $0x7c] sm:$0xf]
      %v1912 = vld [vmem:[%s13 + $0x80] sm:$0xf]
      %v1913 = vld [vmem:[%s13 + $0x84] sm:$0xf]
      %v1914 = vld [vmem:[%s13 + $0x88] sm:$0xf]
      %v1915 = vld [vmem:[%s13 + $0x8c] sm:$0xf]
      %v1916 = vld [vmem:[%s13 + $0x90] sm:$0xf]
      %v1917 = vld [vmem:[%s13 + $0x94] sm:$0xf]
      %v1918 = vld [vmem:[%s13 + $0x98] sm:$0xf]
      %v1919 = vld [vmem:[%s13 + $0x9c] sm:$0xf]
      %v1920 = vld [vmem:[%s13 + $0xa0] sm:$0xf]
      %v1921 = vld [vmem:[%s13 + $0xa4] sm:$0xf]
      %v1922 = vld [vmem:[%s13 + $0xa8] sm:$0xf]
      %v1923 = vld [vmem:[%s13 + $0xac] sm:$0xf]
      %v1924 = vld [vmem:[%s13 + $0xb0] sm:$0xf]
      %v1925 = vld [vmem:[%s13 + $0xb4] sm:$0xf]
      %v1926 = vld [vmem:[%s13 + $0xb8] sm:$0xf]
      %v1927 = vld [vmem:[%s13 + $0xbc] sm:$0xf]
      %v1928 = vld [vmem:[%s13 + $0xc0] sm:$0xf]
      %v1929 = vld [vmem:[%s13 + $0xc4] sm:$0xf]
      %v1930 = vld [vmem:[%s13 + $0xc8] sm:$0xf]
      %v1931 = vld [vmem:[%s13 + $0xcc] sm:$0xf]
      %v1932 = vld [vmem:[%s13 + $0xd0] sm:$0xf]
      %v1933 = vld [vmem:[%s13 + $0xd4] sm:$0xf]
      %v1934 = vld [vmem:[%s13 + $0xd8] sm:$0xf]
      %v1935 = vld [vmem:[%s13 + $0xdc] sm:$0xf]
      %v1936 = vld [vmem:[%s13 + $0xe0] sm:$0xf]
      %v1937 = vld [vmem:[%s13 + $0xe4] sm:$0xf]
      %v1938 = vld [vmem:[%s13 + $0xe8] sm:$0xf]
      %v1939 = vld [vmem:[%s13 + $0xec] sm:$0xf]
      %v1940 = vld [vmem:[%s13 + $0xf0] sm:$0xf]
      %v1941 = vld [vmem:[%s13 + $0xf4] sm:$0xf]
      %v1942 = vld [vmem:[%s13 + $0xf8] sm:$0xf]
      %v1943 = vld [vmem:[%s13 + $0xfc] sm:$0xf]
      %v1944 = vld [vmem:[%s13 + $0x100] sm:$0xf]
      %v1945 = vld [vmem:[%s13 + $0x104] sm:$0xf]
      %v1946 = vld [vmem:[%s13 + $0x108] sm:$0xf]
      %v1947 = vld [vmem:[%s13 + $0x10c] sm:$0xf]
      %v1948 = vld [vmem:[%s13 + $0x110] sm:$0xf]
      %v1949 = vld [vmem:[%s13 + $0x114] sm:$0xf]
      %v1950 = vld [vmem:[%s13 + $0x118] sm:$0xf]
      %v1951 = vld [vmem:[%s13 + $0x11c] sm:$0xf]
      %v1952 = vld [vmem:[%s13 + $0x120] sm:$0xf]
      %v1953 = vld [vmem:[%s13 + $0x124] sm:$0xf]
      %v1954 = vld [vmem:[%s13 + $0x128] sm:$0xf]
      %v1955 = vld [vmem:[%s13 + $0x12c] sm:$0xf]
      %v1956 = vld [vmem:[%s13 + $0x130] sm:$0xf]
      %v1957 = vld [vmem:[%s13 + $0x134] sm:$0xf]
      %v1958 = vld [vmem:[%s13 + $0x138] sm:$0xf]
      %v1959 = vld [vmem:[%s13 + $0x13c] sm:$0xf]
      %v1960 = vld [vmem:[%s13 + $0x140] sm:$0xf]
      %v1961 = vld [vmem:[%s13 + $0x144] sm:$0xf]
      %v1962 = vld [vmem:[%s13 + $0x148] sm:$0xf]
      %v1963 = vld [vmem:[%s13 + $0x14c] sm:$0xf]
      %v1964 = vld [vmem:[%s13 + $0x150] sm:$0xf]
      %v1965 = vld [vmem:[%s13 + $0x154] sm:$0xf]
      %v1966 = vld [vmem:[%s13 + $0x158] sm:$0xf]
      %v1967 = vld [vmem:[%s13 + $0x15c] sm:$0xf]
      %v1968 = vld [vmem:[%s13 + $0x160] sm:$0xf]
      %v1969 = vld [vmem:[%s13 + $0x164] sm:$0xf]
      %v1970 = vld [vmem:[%s13 + $0x168] sm:$0xf]
      %v1971 = vld [vmem:[%s13 + $0x16c] sm:$0xf]
      %v1972 = vld [vmem:[%s13 + $0x170] sm:$0xf]
      %v1973 = vld [vmem:[%s13 + $0x174] sm:$0xf]
      %v1974 = vld [vmem:[%s13 + $0x178] sm:$0xf]
      %v1975 = vld [vmem:[%s13 + $0x17c] sm:$0xf]
      %v1976 = vld [vmem:[%s13 + $0x180] sm:$0xf]
      %v1977 = vld [vmem:[%s13 + $0x184] sm:$0xf]
      %v1978 = vld [vmem:[%s13 + $0x188] sm:$0xf]
      %v1979 = vld [vmem:[%s13 + $0x18c] sm:$0xf]
      %v1980 = vld [vmem:[%s13 + $0x190] sm:$0xf]
      %v1981 = vld [vmem:[%s13 + $0x194] sm:$0xf]
      %v1982 = vld [vmem:[%s13 + $0x198] sm:$0xf]
      %v1983 = vld [vmem:[%s13 + $0x19c] sm:$0xf]
      %v1984 = vld [vmem:[%s13 + $0x1a0] sm:$0xf]
      %v1985 = vld [vmem:[%s13 + $0x1a4] sm:$0xf]
      %v1986 = vld [vmem:[%s13 + $0x1a8] sm:$0xf]
      %v1987 = vld [vmem:[%s13 + $0x1ac] sm:$0xf]
      %v1988 = vld [vmem:[%s13 + $0x1b0] sm:$0xf]
      %v1989 = vld [vmem:[%s13 + $0x1b4] sm:$0xf]
      %v1990 = vld [vmem:[%s13 + $0x1b8] sm:$0xf]
      %v1991 = vld [vmem:[%s13 + $0x1bc] sm:$0xf]
      %v1992 = vld [vmem:[%s13 + $0x1c0] sm:$0xf]
      %v1993 = vld [vmem:[%s13 + $0x1c4] sm:$0xf]
      %v1994 = vld [vmem:[%s13 + $0x1c8] sm:$0xf]
      %v1995 = vld [vmem:[%s13 + $0x1cc] sm:$0xf]
      %v1996 = vld [vmem:[%s13 + $0x1d0] sm:$0xf]
      %v1997 = vld [vmem:[%s13 + $0x1d4] sm:$0xf]
      %v1998 = vld [vmem:[%s13 + $0x1d8] sm:$0xf]
      %v1999 = vld [vmem:[%s13 + $0x1dc] sm:$0xf]
      %v2000 = vld [vmem:[%s13 + $0x1e0] sm:$0xf]
      %v2001 = vld [vmem:[%s13 + $0x1e4] sm:$0xf]
      %v2002 = vld [vmem:[%s13 + $0x1e8] sm:$0xf]
      %v2003 = vld [vmem:[%s13 + $0x1ec] sm:$0xf]
      %v2004 = vld [vmem:[%s13 + $0x1f0] sm:$0xf]
      %v2005 = vld [vmem:[%s13 + $0x1f4] sm:$0xf]
      %v2006 = vld [vmem:[%s13 + $0x1f8] sm:$0xf]
      %v2007 = vld [vmem:[%s13 + $0x1fc] sm:$0xf]
      %v2008 = vld [vmem:[%s14] sm:$0x1]
      %v2010 = vlaneseq
      %v2011 = vshrl.u32 %v2010, 7
      %v2012 = vsub.s32 0, %v2011
      %v2013 = vrot.slane %v2008, %v2012
      %v2143 = vunpack.c.l.b16 %v1880
      %v2144 = vunpack.c.l.b16 %v1881
      %v2145 = vunpack.c.l.b16 %v1882
      %v2146 = vunpack.c.l.b16 %v1883
      %v2147 = vunpack.c.l.b16 %v1884
      %v2148 = vunpack.c.l.b16 %v1885
      %v2149 = vunpack.c.l.b16 %v1886
      %v2150 = vunpack.c.l.b16 %v1887
      %v2151 = vunpack.c.l.b16 %v1888
      %v2152 = vunpack.c.l.b16 %v1889
      %v2153 = vunpack.c.l.b16 %v1890
      %v2154 = vunpack.c.l.b16 %v1891
      %v2155 = vunpack.c.l.b16 %v1892
      %v2156 = vunpack.c.l.b16 %v1893
      %v2157 = vunpack.c.l.b16 %v1894
      %v2158 = vunpack.c.l.b16 %v1895
      %v2159 = vunpack.c.l.b16 %v1896
      %v2160 = vunpack.c.l.b16 %v1897
      %v2161 = vunpack.c.l.b16 %v1898
      %v2162 = vunpack.c.l.b16 %v1899
      %v2163 = vunpack.c.l.b16 %v1900
      %v2164 = vunpack.c.l.b16 %v1901
      %v2165 = vunpack.c.l.b16 %v1902
      %v2166 = vunpack.c.l.b16 %v1903
      %v2167 = vunpack.c.l.b16 %v1904
      %v2168 = vunpack.c.l.b16 %v1905
      %v2169 = vunpack.c.l.b16 %v1906
      %v2170 = vunpack.c.l.b16 %v1907
      %v2171 = vunpack.c.l.b16 %v1908
      %v2172 = vunpack.c.l.b16 %v1909
      %v2173 = vunpack.c.l.b16 %v1910
      %v2174 = vunpack.c.l.b16 %v1911
      %v2175 = vunpack.c.l.b16 %v1912
      %v2176 = vunpack.c.l.b16 %v1913
      %v2177 = vunpack.c.l.b16 %v1914
      %v2178 = vunpack.c.l.b16 %v1915
      %v2179 = vunpack.c.l.b16 %v1916
      %v2180 = vunpack.c.l.b16 %v1917
      %v2181 = vunpack.c.l.b16 %v1918
      %v2182 = vunpack.c.l.b16 %v1919
      %v2183 = vunpack.c.l.b16 %v1920
      %v2184 = vunpack.c.l.b16 %v1921
      %v2185 = vunpack.c.l.b16 %v1922
      %v2186 = vunpack.c.l.b16 %v1923
      %v2187 = vunpack.c.l.b16 %v1924
      %v2188 = vunpack.c.l.b16 %v1925
      %v2189 = vunpack.c.l.b16 %v1926
      %v2190 = vunpack.c.l.b16 %v1927
      %v2191 = vunpack.c.l.b16 %v1928
      %v2192 = vunpack.c.l.b16 %v1929
      %v2193 = vunpack.c.l.b16 %v1930
      %v2194 = vunpack.c.l.b16 %v1931
      %v2195 = vunpack.c.l.b16 %v1932
      %v2196 = vunpack.c.l.b16 %v1933
      %v2197 = vunpack.c.l.b16 %v1934
      %v2198 = vunpack.c.l.b16 %v1935
      %v2199 = vunpack.c.l.b16 %v1936
      %v2200 = vunpack.c.l.b16 %v1937
      %v2201 = vunpack.c.l.b16 %v1938
      %v2202 = vunpack.c.l.b16 %v1939
      %v2203 = vunpack.c.l.b16 %v1940
      %v2204 = vunpack.c.l.b16 %v1941
      %v2205 = vunpack.c.l.b16 %v1942
      %v2206 = vunpack.c.l.b16 %v1943
      %v2207 = vunpack.c.l.b16 %v1944
      %v2208 = vunpack.c.l.b16 %v1945
      %v2209 = vunpack.c.l.b16 %v1946
      %v2210 = vunpack.c.l.b16 %v1947
      %v2211 = vunpack.c.l.b16 %v1948
      %v2212 = vunpack.c.l.b16 %v1949
      %v2213 = vunpack.c.l.b16 %v1950
      %v2214 = vunpack.c.l.b16 %v1951
      %v2215 = vunpack.c.l.b16 %v1952
      %v2216 = vunpack.c.l.b16 %v1953
      %v2217 = vunpack.c.l.b16 %v1954
      %v2218 = vunpack.c.l.b16 %v1955
      %v2219 = vunpack.c.l.b16 %v1956
      %v2220 = vunpack.c.l.b16 %v1957
      %v2221 = vunpack.c.l.b16 %v1958
      %v2222 = vunpack.c.l.b16 %v1959
      %v2223 = vunpack.c.l.b16 %v1960
      %v2224 = vunpack.c.l.b16 %v1961
      %v2225 = vunpack.c.l.b16 %v1962
      %v2226 = vunpack.c.l.b16 %v1963
      %v2227 = vunpack.c.l.b16 %v1964
      %v2228 = vunpack.c.l.b16 %v1965
      %v2229 = vunpack.c.l.b16 %v1966
      %v2230 = vunpack.c.l.b16 %v1967
      %v2231 = vunpack.c.l.b16 %v1968
      %v2232 = vunpack.c.l.b16 %v1969
      %v2233 = vunpack.c.l.b16 %v1970
      %v2234 = vunpack.c.l.b16 %v1971
      %v2235 = vunpack.c.l.b16 %v1972
      %v2236 = vunpack.c.l.b16 %v1973
      %v2237 = vunpack.c.l.b16 %v1974
      %v2238 = vunpack.c.l.b16 %v1975
      %v2239 = vunpack.c.l.b16 %v1976
      %v2240 = vunpack.c.l.b16 %v1977
      %v2241 = vunpack.c.l.b16 %v1978
      %v2242 = vunpack.c.l.b16 %v1979
      %v2243 = vunpack.c.l.b16 %v1980
      %v2244 = vunpack.c.l.b16 %v1981
      %v2245 = vunpack.c.l.b16 %v1982
      %v2246 = vunpack.c.l.b16 %v1983
      %v2247 = vunpack.c.l.b16 %v1984
      %v2248 = vunpack.c.l.b16 %v1985
      %v2249 = vunpack.c.l.b16 %v1986
      %v2250 = vunpack.c.l.b16 %v1987
      %v2251 = vunpack.c.l.b16 %v1988
      %v2252 = vunpack.c.l.b16 %v1989
      %v2253 = vunpack.c.l.b16 %v1990
      %v2254 = vunpack.c.l.b16 %v1991
      %v2255 = vunpack.c.l.b16 %v1992
      %v2256 = vunpack.c.l.b16 %v1993
      %v2257 = vunpack.c.l.b16 %v1994
      %v2258 = vunpack.c.l.b16 %v1995
      %v2259 = vunpack.c.l.b16 %v1996
      %v2260 = vunpack.c.l.b16 %v1997
      %v2261 = vunpack.c.l.b16 %v1998
      %v2262 = vunpack.c.l.b16 %v1999
      %v2263 = vunpack.c.l.b16 %v2000
      %v2264 = vunpack.c.l.b16 %v2001
      %v2265 = vunpack.c.l.b16 %v2002
      %v2266 = vunpack.c.l.b16 %v2003
      %v2267 = vunpack.c.l.b16 %v2004
      %v2268 = vunpack.c.l.b16 %v2005
      %v2269 = vunpack.c.l.b16 %v2006
      %v2270 = vunpack.c.l.b16 %v2007
      %v2271 = vpack.c.b16 %v2144, %v2143
      %v2272 = vpack.c.b16 %v2146, %v2145
      %v2273 = vpack.c.b16 %v2148, %v2147
      %v2274 = vpack.c.b16 %v2150, %v2149
      %v2275 = vpack.c.b16 %v2152, %v2151
      %v2276 = vpack.c.b16 %v2154, %v2153
      %v2277 = vpack.c.b16 %v2156, %v2155
      %v2278 = vpack.c.b16 %v2158, %v2157
      %v2279 = vpack.c.b16 %v2160, %v2159
      %v2280 = vpack.c.b16 %v2162, %v2161
      %v2281 = vpack.c.b16 %v2164, %v2163
      %v2282 = vpack.c.b16 %v2166, %v2165
      %v2283 = vpack.c.b16 %v2168, %v2167
      %v2284 = vpack.c.b16 %v2170, %v2169
      %v2285 = vpack.c.b16 %v2172, %v2171
      %v2286 = vpack.c.b16 %v2174, %v2173
      %v2287 = vpack.c.b16 %v2176, %v2175
      %v2288 = vpack.c.b16 %v2178, %v2177
      %v2289 = vpack.c.b16 %v2180, %v2179
      %v2290 = vpack.c.b16 %v2182, %v2181
      %v2291 = vpack.c.b16 %v2184, %v2183
      %v2292 = vpack.c.b16 %v2186, %v2185
      %v2293 = vpack.c.b16 %v2188, %v2187
      %v2294 = vpack.c.b16 %v2190, %v2189
      %v2295 = vpack.c.b16 %v2192, %v2191
      %v2296 = vpack.c.b16 %v2194, %v2193
      %v2297 = vpack.c.b16 %v2196, %v2195
      %v2298 = vpack.c.b16 %v2198, %v2197
      %v2299 = vpack.c.b16 %v2200, %v2199
      %v2300 = vpack.c.b16 %v2202, %v2201
      %v2301 = vpack.c.b16 %v2204, %v2203
      %v2302 = vpack.c.b16 %v2206, %v2205
      %v2303 = vpack.c.b16 %v2208, %v2207
      %v2304 = vpack.c.b16 %v2210, %v2209
      %v2305 = vpack.c.b16 %v2212, %v2211
      %v2306 = vpack.c.b16 %v2214, %v2213
      %v2307 = vpack.c.b16 %v2216, %v2215
      %v2308 = vpack.c.b16 %v2218, %v2217
      %v2309 = vpack.c.b16 %v2220, %v2219
      %v2310 = vpack.c.b16 %v2222, %v2221
      %v2311 = vpack.c.b16 %v2224, %v2223
      %v2312 = vpack.c.b16 %v2226, %v2225
      %v2313 = vpack.c.b16 %v2228, %v2227
      %v2314 = vpack.c.b16 %v2230, %v2229
      %v2315 = vpack.c.b16 %v2232, %v2231
      %v2316 = vpack.c.b16 %v2234, %v2233
      %v2317 = vpack.c.b16 %v2236, %v2235
      %v2318 = vpack.c.b16 %v2238, %v2237
      %v2319 = vpack.c.b16 %v2240, %v2239
      %v2320 = vpack.c.b16 %v2242, %v2241
      %v2321 = vpack.c.b16 %v2244, %v2243
      %v2322 = vpack.c.b16 %v2246, %v2245
      %v2323 = vpack.c.b16 %v2248, %v2247
      %v2324 = vpack.c.b16 %v2250, %v2249
      %v2325 = vpack.c.b16 %v2252, %v2251
      %v2326 = vpack.c.b16 %v2254, %v2253
      %v2327 = vpack.c.b16 %v2256, %v2255
      %v2328 = vpack.c.b16 %v2258, %v2257
      %v2329 = vpack.c.b16 %v2260, %v2259
      %v2330 = vpack.c.b16 %v2262, %v2261
      %v2331 = vpack.c.b16 %v2264, %v2263
      %v2332 = vpack.c.b16 %v2266, %v2265
      %v2333 = vpack.c.b16 %v2268, %v2267
      %v2334 = vpack.c.b16 %v2270, %v2269
      %2399 = vmatprep.subr.bf16.mxu0 0
      %2400 = vmatpush1.bf16.msra.mxu0 %v2278
      %2401 = vmatprep.subr.bf16.mxu0 0
      %2402 = vmatpush1.bf16.msra.mxu0 %v2277
      %2403 = vmatprep.subr.bf16.mxu0 0
      %2404 = vmatpush1.bf16.msra.mxu0 %v2276
      %2405 = vmatprep.subr.bf16.mxu0 0
      %2406 = vmatpush1.bf16.msra.mxu0 %v2275
      %2407 = vmatprep.subr.bf16.mxu0 0
      %2408 = vmatpush1.bf16.msra.mxu0 %v2274
      %2409 = vmatprep.subr.bf16.mxu0 0
      %2410 = vmatpush1.bf16.msra.mxu0 %v2273
      %2411 = vmatprep.subr.bf16.mxu0 0
      %2412 = vmatpush1.bf16.msra.mxu0 %v2272
      %2413 = vmatprep.subr.bf16.mxu0 0
      %2414 = vmatpush1.bf16.msra.mxu0 %v2271
      %2415 = vmatprep.subr.bf16.mxu0 0
      %2416 = vmatpush2.bf16.msra.mxu0 %v2286
      %2417 = vmatprep.subr.bf16.mxu0 0
      %2418 = vmatpush2.bf16.msra.mxu0 %v2285
      %2419 = vmatprep.subr.bf16.mxu0 0
      %2420 = vmatpush2.bf16.msra.mxu0 %v2284
      %2421 = vmatprep.subr.bf16.mxu0 0
      %2422 = vmatpush2.bf16.msra.mxu0 %v2283
      %2423 = vmatprep.subr.bf16.mxu0 0
      %2424 = vmatpush2.bf16.msra.mxu0 %v2282
      %2425 = vmatprep.subr.bf16.mxu0 0
      %2426 = vmatpush2.bf16.msra.mxu0 %v2281
      %2427 = vmatprep.subr.bf16.mxu0 0
      %2428 = vmatpush2.bf16.msra.mxu0 %v2280
      %2429 = vmatprep.subr.bf16.mxu0 0
      %2430 = vmatpush2.bf16.msra.mxu0 %v2279
      %2431 = vmatprep.mubr.bf16.mxu0 %v1873
      %2432 = vmatmul.mubr.bf16.gmra.mxu0 %v1872
      %v2433 = vpop.f32.mrf.mxu0
      %v2434 = vadd.f32 %v2013, %v2433
      %v2435 = vpop.f32.mrf.mxu0
      %v2436 = vpop.f32.mrf.mxu0
      %v2437 = vadd.f32 %v2013, %v2436
      %v2438 = vpop.f32.mrf.mxu0
      %2439 = vdwg.mxu0
      %2440 = vmatprep.subr.bf16.mxu0 0
      %2441 = vmatpush1.bf16.msra.mxu0 %v2294
      %2442 = vmatprep.subr.bf16.mxu0 0
      %2443 = vmatpush1.bf16.msra.mxu0 %v2293
      %2444 = vmatprep.subr.bf16.mxu0 0
      %2445 = vmatpush1.bf16.msra.mxu0 %v2292
      %2446 = vmatprep.subr.bf16.mxu0 0
      %2447 = vmatpush1.bf16.msra.mxu0 %v2291
      %2448 = vmatprep.subr.bf16.mxu0 0
      %2449 = vmatpush1.bf16.msra.mxu0 %v2290
      %2450 = vmatprep.subr.bf16.mxu0 0
      %2451 = vmatpush1.bf16.msra.mxu0 %v2289
      %2452 = vmatprep.subr.bf16.mxu0 0
      %2453 = vmatpush1.bf16.msra.mxu0 %v2288
      %2454 = vmatprep.subr.bf16.mxu0 0
      %2455 = vmatpush1.bf16.msra.mxu0 %v2287
      %2456 = vmatprep.subr.bf16.mxu0 0
      %2457 = vmatpush2.bf16.msra.mxu0 %v2302
      %2458 = vmatprep.subr.bf16.mxu0 0
      %2459 = vmatpush2.bf16.msra.mxu0 %v2301
      %2460 = vmatprep.subr.bf16.mxu0 0
      %2461 = vmatpush2.bf16.msra.mxu0 %v2300
      %2462 = vmatprep.subr.bf16.mxu0 0
      %2463 = vmatpush2.bf16.msra.mxu0 %v2299
      %2464 = vmatprep.subr.bf16.mxu0 0
      %2465 = vmatpush2.bf16.msra.mxu0 %v2298
      %2466 = vmatprep.subr.bf16.mxu0 0
      %2467 = vmatpush2.bf16.msra.mxu0 %v2297
      %2468 = vmatprep.subr.bf16.mxu0 0
      %2469 = vmatpush2.bf16.msra.mxu0 %v2296
      %2470 = vmatprep.subr.bf16.mxu0 0
      %2471 = vmatpush2.bf16.msra.mxu0 %v2295
      %2472 = vmatprep.mubr.bf16.mxu0 %v1875
      %2473 = vmatmul.mubr.bf16.gmra.mxu0 %v1874
      %v2474 = vpop.f32.mrf.mxu0
      %v2475 = vadd.f32 %v2434, %v2474
      %v2476 = vpop.f32.mrf.mxu0
      %v2477 = vpop.f32.mrf.mxu0
      %v2478 = vadd.f32 %v2437, %v2477
      %v2479 = vpop.f32.mrf.mxu0
      %2480 = vdwg.mxu0
      %2481 = vmatprep.subr.bf16.mxu0 0
      %2482 = vmatpush1.bf16.msra.mxu0 %v2310
      %2483 = vmatprep.subr.bf16.mxu0 0
      %2484 = vmatpush1.bf16.msra.mxu0 %v2309
      %2485 = vmatprep.subr.bf16.mxu0 0
      %2486 = vmatpush1.bf16.msra.mxu0 %v2308
      %2487 = vmatprep.subr.bf16.mxu0 0
      %2488 = vmatpush1.bf16.msra.mxu0 %v2307
      %2489 = vmatprep.subr.bf16.mxu0 0
      %2490 = vmatpush1.bf16.msra.mxu0 %v2306
      %2491 = vmatprep.subr.bf16.mxu0 0
      %2492 = vmatpush1.bf16.msra.mxu0 %v2305
      %2493 = vmatprep.subr.bf16.mxu0 0
      %2494 = vmatpush1.bf16.msra.mxu0 %v2304
      %2495 = vmatprep.subr.bf16.mxu0 0
      %2496 = vmatpush1.bf16.msra.mxu0 %v2303
      %2497 = vmatprep.subr.bf16.mxu0 0
      %2498 = vmatpush2.bf16.msra.mxu0 %v2318
      %2499 = vmatprep.subr.bf16.mxu0 0
      %2500 = vmatpush2.bf16.msra.mxu0 %v2317
      %2501 = vmatprep.subr.bf16.mxu0 0
      %2502 = vmatpush2.bf16.msra.mxu0 %v2316
      %2503 = vmatprep.subr.bf16.mxu0 0
      %2504 = vmatpush2.bf16.msra.mxu0 %v2315
      %2505 = vmatprep.subr.bf16.mxu0 0
      %2506 = vmatpush2.bf16.msra.mxu0 %v2314
      %2507 = vmatprep.subr.bf16.mxu0 0
      %2508 = vmatpush2.bf16.msra.mxu0 %v2313
      %2509 = vmatprep.subr.bf16.mxu0 0
      %2510 = vmatpush2.bf16.msra.mxu0 %v2312
      %2511 = vmatprep.subr.bf16.mxu0 0
      %2512 = vmatpush2.bf16.msra.mxu0 %v2311
      %2513 = vmatprep.mubr.bf16.mxu0 %v1877
      %2514 = vmatmul.mubr.bf16.gmra.mxu0 %v1876
      %v2515 = vpop.f32.mrf.mxu0
      %v2516 = vadd.f32 %v2475, %v2515
      %v2517 = vpop.f32.mrf.mxu0
      %v2518 = vpop.f32.mrf.mxu0
      %v2519 = vadd.f32 %v2478, %v2518
      %v2520 = vpop.f32.mrf.mxu0
      %2521 = vdwg.mxu0
      %2522 = vmatprep.subr.bf16.mxu0 0
      %2523 = vmatpush1.bf16.msra.mxu0 %v2326
      %2524 = vmatprep.subr.bf16.mxu0 0
      %2525 = vmatpush1.bf16.msra.mxu0 %v2325
      %2526 = vmatprep.subr.bf16.mxu0 0
      %2527 = vmatpush1.bf16.msra.mxu0 %v2324
      %2528 = vmatprep.subr.bf16.mxu0 0
      %2529 = vmatpush1.bf16.msra.mxu0 %v2323
      %2530 = vmatprep.subr.bf16.mxu0 0
      %2531 = vmatpush1.bf16.msra.mxu0 %v2322
      %2532 = vmatprep.subr.bf16.mxu0 0
      %2533 = vmatpush1.bf16.msra.mxu0 %v2321
      %2534 = vmatprep.subr.bf16.mxu0 0
      %2535 = vmatpush1.bf16.msra.mxu0 %v2320
      %2536 = vmatprep.subr.bf16.mxu0 0
      %2537 = vmatpush1.bf16.msra.mxu0 %v2319
      %2538 = vmatprep.subr.bf16.mxu0 0
      %2539 = vmatpush2.bf16.msra.mxu0 %v2334
      %2540 = vmatprep.subr.bf16.mxu0 0
      %2541 = vmatpush2.bf16.msra.mxu0 %v2333
      %2542 = vmatprep.subr.bf16.mxu0 0
      %2543 = vmatpush2.bf16.msra.mxu0 %v2332
      %2544 = vmatprep.subr.bf16.mxu0 0
      %2545 = vmatpush2.bf16.msra.mxu0 %v2331
      %2546 = vmatprep.subr.bf16.mxu0 0
      %2547 = vmatpush2.bf16.msra.mxu0 %v2330
      %2548 = vmatprep.subr.bf16.mxu0 0
      %2549 = vmatpush2.bf16.msra.mxu0 %v2329
      %2550 = vmatprep.subr.bf16.mxu0 0
      %2551 = vmatpush2.bf16.msra.mxu0 %v2328
      %2552 = vmatprep.subr.bf16.mxu0 0
      %2553 = vmatpush2.bf16.msra.mxu0 %v2327
      %2554 = vmatprep.mubr.bf16.mxu0 %v1879
      %2555 = vmatmul.mubr.bf16.gmra.mxu0 %v1878
      %v2556 = vpop.f32.mrf.mxu0
      %v2557 = vadd.f32 %v2516, %v2556
      %v2558 = vpop.f32.mrf.mxu0
      %v2559 = vpop.f32.mrf.mxu0
      %v2560 = vadd.f32 %v2519, %v2559
      %v2561 = vpop.f32.mrf.mxu0
      %2562 = vdwg.mxu0
      %vm2563 = vcmask 97280
      %2564 = vst.msk [vmem:[%s530] sm:$0xff] %vm2563, %v2557
      %2565 = vst.msk [vmem:[%s530 + $0x8] sm:$0xff] %vm2563, %v2560
      %s2566 = smul.u32 2, %s31
      %p2567 = scmp.lt.s32.totalorder %s30, 1
      %s2568 = scalar_select %p2567, %s30, 1
      %p2569 = scmp.lt.s32.totalorder %s2566, 5
      %s2570 = scalar_select %p2569, %s2566, 5
      %s2571 = smul.addr %s2568, 6
      %s2572 = sadd.s32 %s2570, %s2571
      %s2573 = smul.addr %s2572, 8
      %s2574 = scalar_lea.vmem %s15, %s2573
      // Predicated region
      $region81: #{summarization.1} parent=79 // pred_check
        %p2575 = pneg %p380
      $region82: #{summarization.1} parent=79 // pred_check_branch
        %2577 = sbr.rel (%p2575) target = $region84
      $region83: #{summarization.1} parent=79 // pred_region
        %s2578 = smul.u32 2, %s31
      $region84: #{summarization.1} parent=79 // pred_fallthru
        _
    $region80: #{summarization.1} parent=5 // pred_fallthru
      _
    %p2579 = scmp.le.s32.totalorder 2, %s21
    // Predicated region
    $region85: #{summarization.1} parent=5 // pred_check
      %p2580 = pneg %p2579
    $region86: #{summarization.1} parent=5 // pred_check_branch
      %2582 = sbr.rel (%p2580) target = $region88
    $region87: #{summarization.1} parent=5 // pred_region
      %s2583 = ssub.s32 %s21, 2
      // Predicated region
      $region89: #{summarization.1} parent=87 // pred_check
        %p2584 = pneg %p386
      $region90: #{summarization.1} parent=87 // pred_check_branch
        %2586 = sbr.rel (%p2584) target = $region92
      $region91: #{summarization.1} parent=87 // pred_region
        %s2587 = smul.u32 2, %s33
        %p2588 = scmp.lt.s32.totalorder %s32, 1
        %s2589 = scalar_select %p2588, %s32, 1
        %p2590 = scmp.lt.s32.totalorder %s2587, 5
        %s2591 = scalar_select %p2590, %s2587, 5
        %s2592 = smul.addr %s2589, 6
        %s2593 = sadd.s32 %s2591, %s2592
        %s2594 = smul.addr %s2593, 8
        %s2595 = scalar_lea.vmem %s15, %s2594
      $region92: #{summarization.1} parent=87 // pred_fallthru
        _
    $region88: #{summarization.1} parent=5 // pred_fallthru
      _
  $region6: #{summarization.1} parent=0 // loop_footer
    %s25 = sadd.s32 1, %s21
  $region7: #{summarization.1} parent=0 // loop_footer_branch
    %20 = sbr.rel target = $region3
  $region8: #{summarization.1} parent=0 // loop_exit
    _

// kernel: summarization.1
$region0: #{summarization.1}
  #allocation0 [shape = 'u32[]', space=smem, size = 0x4, offset = 0x4, fixed_abs, tag = 'smem constant byte address 0x4 - core index']
  #allocation1 [shape = 'u32[144,128]{1,0:T(1,128)}', space=vmem, size = 0x12000, scoped, tag = 'internal scratch']
  #allocation2 [shape = 'f32[16,1024]{1,0:T(8,128)}', space=vmem, size = 0x10000, scoped, tag = 'scratch operand']
  %s0 = inlined_call_operand.vmem [shape: bf16[2,3,28,32], index: 0, kind: input, shape index: {}]
  %s1 = inlined_call_operand.vmem [shape: bf16[32,1024], index: 1, kind: input, shape index: {}]
  %s2 = inlined_call_operand.vmem [shape: bf16[32,128], index: 2, kind: input, shape index: {}]
  %s3 = inlined_call_operand.vmem [shape: bf16[32,128], index: 3, kind: input, shape index: {}]
  %s4 = inlined_call_operand.vmem [shape: bf16[32,256], index: 4, kind: input, shape index: {}]
  %s5 = inlined_call_operand.vmem [shape: bf16[32,384], index: 5, kind: input, shape index: {}]
  %s6 = inlined_call_operand.vmem [shape: bf16[32,256], index: 6, kind: input, shape index: {}]
  %s7 = inlined_call_operand.vmem [shape: bf16[32,256], index: 7, kind: input, shape index: {}]
  %s8 = inlined_call_operand.vmem [shape: bf16[32,384], index: 8, kind: input, shape index: {}]
  %s9 = inlined_call_operand.vmem [shape: bf16[32,256], index: 9, kind: input, shape index: {}]
  %s10 = inlined_call_operand.vmem [shape: bf16[32,128], index: 10, kind: input, shape index: {}]
  %s11 = inlined_call_operand.vmem [shape: bf16[32,128], index: 11, kind: input, shape index: {}]
  %s12 = inlined_call_operand.vmem [shape: f32[1,1024], index: 12, kind: input, shape index: {}]
  %s13 = inlined_call_operand.vmem [shape: bf16[1024,12], index: 13, kind: input, shape index: {}]
  %s14 = inlined_call_operand.vmem [shape: f32[1,12], index: 14, kind: input, shape index: {}]
  %s15 = inlined_call_operand.vmem [shape: f32[2,48,12], index: 15, kind: output, shape index: {}]
  %s16 = sld [smem:[#allocation0]]
  $region93: #{summarization.1} parent=0
    _
  %s18 = ssub.s32 1, %s16
  %s19 = scalar_select 0, %s18, %s16
  loop: start=0, step=1, limit=8
  $region2: #{summarization.1} parent=0 // loop_pre_header
    _
  $region3: #{summarization.1} parent=0 // loop_header
    %s21 = sphi 0, %s25
    %p22 = scmp.ge.s32.totalorder %s21, 8
    %s28 = sphi 0, %s40
    %s29 = sphi 0, %s36
    %s30 = sphi 0, %s28
    %s31 = sphi 0, %s29
    %s32 = sphi 0, %s30
    %s33 = sphi 0, %s31
    %s45 = sphi 0, %s47
    %s48 = sphi 0, %s45
    %s49 = sphi 0, %s48
    %s65 = sphi 0, %s49
    %s69 = sphi 0, %s69
    %s71 = sphi 0, %s69
    %s72 = sphi 0, %s71
    %s86 = sphi 0, %s72
    %s90 = sphi 0, %s90
    %s92 = sphi 0, %s90
    %s93 = sphi 0, %s92
    %s107 = sphi 0, %s93
    %s111 = sphi 0, %s111
    %s113 = sphi 0, %s111
    %s114 = sphi 0, %s113
    %s128 = sphi 0, %s114
    %s132 = sphi 0, %s132
    %s134 = sphi 0, %s132
    %s135 = sphi 0, %s134
    %s149 = sphi 0, %s135
    %s153 = sphi 0, %s153
    %s155 = sphi 0, %s153
    %s156 = sphi 0, %s155
    %s170 = sphi 0, %s156
    %s174 = sphi 0, %s174
    %s176 = sphi 0, %s174
    %s177 = sphi 0, %s176
    %s191 = sphi 0, %s177
    %s195 = sphi 0, %s195
    %s197 = sphi 0, %s195
    %s198 = sphi 0, %s197
    %s212 = sphi 0, %s198
    %s216 = sphi 0, %s216
    %s218 = sphi 0, %s216
    %s219 = sphi 0, %s218
    %s233 = sphi 0, %s219
    %s237 = sphi 0, %s237
    %s239 = sphi 0, %s237
    %s240 = sphi 0, %s239
    %s254 = sphi 0, %s240
    %s258 = sphi 0, %s258
    %s260 = sphi 0, %s258
    %s261 = sphi 0, %s260
    %s275 = sphi 0, %s261
    %s279 = sphi 0, %s279
    %s281 = sphi 0, %s279
    %s282 = sphi 0, %s281
    %s296 = sphi 0, %s282
    %s300 = sphi 0, %s300
    %s302 = sphi 0, %s300
    %s303 = sphi 0, %s302
    %s317 = sphi 0, %s303
    %s321 = sphi 0, %s321
    %s323 = sphi 0, %s321
    %s324 = sphi 0, %s323
    %s338 = sphi 0, %s324
    %s342 = sphi 0, %s342
    %s344 = sphi 0, %s342
    %s345 = sphi 0, %s344
    %s359 = sphi 0, %s345
    %s367 = sphi 0, %s369
    %s370 = sphi 0, %s367
    %s371 = sphi 0, %s370
    %s387 = sphi 0, %s371
  $region4: #{summarization.1} parent=0 // loop_header_branch
    %24 = sbr.rel (%p22) target = $region8
  $region5: #{summarization.1} parent=0 // loop_body
    %s26 = ssub.s32 %s21, 1
    %s27 = ssub.s32 %s21, 2
    %s34 = sadd.s32 1, %s29
    %p35 = scmp.ge.s32.totalorder %s34, 3
    %s36 = scalar_select %p35, 0, %s34
    %s37 = sadd.s32 1, %s28
    %s38 = scalar_select %p35, %s37, %s28
    %p39 = scmp.ge.s32.totalorder %s38, 2
    %s40 = scalar_select %p39, 0, %s38
    %s41 = ssub.s32 %s28, %s40
    %s42 = ssub.s32 %s29, %s36
    %s43 = sor.u32 %s41, %s42
    %p44 = scmp.eq.s32.totalorder %s43, 0
    %s46 = sadd.s32 %s45, 1
    %s47 = scalar_select %p44, %s45, %s46
    %p50 = pneg %p44
    %p51 = scmp.eq.s32.totalorder %s21, 5
    %p52 = por %p50, %p51
    %p53 = scmp.ne.s32.totalorder %s45, %s48
    %p54 = scmp.eq.s32.totalorder %s21, 0
    %p55 = por %p53, %p54
    %p56 = scmp.ne.s32.totalorder %s45, %s48
    %p57 = scmp.eq.s32.totalorder %s26, 5
    %p58 = por %p56, %p57
    %p59 = scmp.ne.s32.totalorder %s48, %s49
    %p60 = scmp.eq.s32.totalorder %s26, 0
    %p61 = por %p59, %p60
    %p62 = scmp.ne.s32.totalorder %s48, %s49
    %p63 = scmp.eq.s32.totalorder %s27, 5
    %p64 = por %p62, %p63
    %p66 = scmp.ne.s32.totalorder %s49, %s65
    %p67 = scmp.eq.s32.totalorder %s27, 0
    %p68 = por %p66, %p67
    %s70 = sadd.s32 %s69, 1
    %p73 = scmp.eq.s32.totalorder %s21, 5
    %p74 = scmp.ne.s32.totalorder %s69, %s71
    %p75 = scmp.eq.s32.totalorder %s21, 0
    %p76 = por %p74, %p75
    %p77 = scmp.ne.s32.totalorder %s69, %s71
    %p78 = scmp.eq.s32.totalorder %s26, 5
    %p79 = por %p77, %p78
    %p80 = scmp.ne.s32.totalorder %s71, %s72
    %p81 = scmp.eq.s32.totalorder %s26, 0
    %p82 = por %p80, %p81
    %p83 = scmp.ne.s32.totalorder %s71, %s72
    %p84 = scmp.eq.s32.totalorder %s27, 5
    %p85 = por %p83, %p84
    %p87 = scmp.ne.s32.totalorder %s72, %s86
    %p88 = scmp.eq.s32.totalorder %s27, 0
    %p89 = por %p87, %p88
    %s91 = sadd.s32 %s90, 1
    %p94 = scmp.eq.s32.totalorder %s21, 5
    %p95 = scmp.ne.s32.totalorder %s90, %s92
    %p96 = scmp.eq.s32.totalorder %s21, 0
    %p97 = por %p95, %p96
    %p98 = scmp.ne.s32.totalorder %s90, %s92
    %p99 = scmp.eq.s32.totalorder %s26, 5
    %p100 = por %p98, %p99
    %p101 = scmp.ne.s32.totalorder %s92, %s93
    %p102 = scmp.eq.s32.totalorder %s26, 0
    %p103 = por %p101, %p102
    %p104 = scmp.ne.s32.totalorder %s92, %s93
    %p105 = scmp.eq.s32.totalorder %s27, 5
    %p106 = por %p104, %p105
    %p108 = scmp.ne.s32.totalorder %s93, %s107
    %p109 = scmp.eq.s32.totalorder %s27, 0
    %p110 = por %p108, %p109
    %s112 = sadd.s32 %s111, 1
    %p115 = scmp.eq.s32.totalorder %s21, 5
    %p116 = scmp.ne.s32.totalorder %s111, %s113
    %p117 = scmp.eq.s32.totalorder %s21, 0
    %p118 = por %p116, %p117
    %p119 = scmp.ne.s32.totalorder %s111, %s113
    %p120 = scmp.eq.s32.totalorder %s26, 5
    %p121 = por %p119, %p120
    %p122 = scmp.ne.s32.totalorder %s113, %s114
    %p123 = scmp.eq.s32.totalorder %s26, 0
    %p124 = por %p122, %p123
    %p125 = scmp.ne.s32.totalorder %s113, %s114
    %p126 = scmp.eq.s32.totalorder %s27, 5
    %p127 = por %p125, %p126
    %p129 = scmp.ne.s32.totalorder %s114, %s128
    %p130 = scmp.eq.s32.totalorder %s27, 0
    %p131 = por %p129, %p130
    %s133 = sadd.s32 %s132, 1
    %p136 = scmp.eq.s32.totalorder %s21, 5
    %p137 = scmp.ne.s32.totalorder %s132, %s134
    %p138 = scmp.eq.s32.totalorder %s21, 0
    %p139 = por %p137, %p138
    %p140 = scmp.ne.s32.totalorder %s132, %s134
    %p141 = scmp.eq.s32.totalorder %s26, 5
    %p142 = por %p140, %p141
    %p143 = scmp.ne.s32.totalorder %s134, %s135
    %p144 = scmp.eq.s32.totalorder %s26, 0
    %p145 = por %p143, %p144
    %p146 = scmp.ne.s32.totalorder %s134, %s135
    %p147 = scmp.eq.s32.totalorder %s27, 5
    %p148 = por %p146, %p147
    %p150 = scmp.ne.s32.totalorder %s135, %s149
    %p151 = scmp.eq.s32.totalorder %s27, 0
    %p152 = por %p150, %p151
    %s154 = sadd.s32 %s153, 1
    %p157 = scmp.eq.s32.totalorder %s21, 5
    %p158 = scmp.ne.s32.totalorder %s153, %s155
    %p159 = scmp.eq.s32.totalorder %s21, 0
    %p160 = por %p158, %p159
    %p161 = scmp.ne.s32.totalorder %s153, %s155
    %p162 = scmp.eq.s32.totalorder %s26, 5
    %p163 = por %p161, %p162
    %p164 = scmp.ne.s32.totalorder %s155, %s156
    %p165 = scmp.eq.s32.totalorder %s26, 0
    %p166 = por %p164, %p165
    %p167 = scmp.ne.s32.totalorder %s155, %s156
    %p168 = scmp.eq.s32.totalorder %s27, 5
    %p169 = por %p167, %p168
    %p171 = scmp.ne.s32.totalorder %s156, %s170
    %p172 = scmp.eq.s32.totalorder %s27, 0
    %p173 = por %p171, %p172
    %s175 = sadd.s32 %s174, 1
    %p178 = scmp.eq.s32.totalorder %s21, 5
    %p179 = scmp.ne.s32.totalorder %s174, %s176
    %p180 = scmp.eq.s32.totalorder %s21, 0
    %p181 = por %p179, %p180
    %p182 = scmp.ne.s32.totalorder %s174, %s176
    %p183 = scmp.eq.s32.totalorder %s26, 5
    %p184 = por %p182, %p183
    %p185 = scmp.ne.s32.totalorder %s176, %s177
    %p186 = scmp.eq.s32.totalorder %s26, 0
    %p187 = por %p185, %p186
    %p188 = scmp.ne.s32.totalorder %s176, %s177
    %p189 = scmp.eq.s32.totalorder %s27, 5
    %p190 = por %p188, %p189
    %p192 = scmp.ne.s32.totalorder %s177, %s191
    %p193 = scmp.eq.s32.totalorder %s27, 0
    %p194 = por %p192, %p193
    %s196 = sadd.s32 %s195, 1
    %p199 = scmp.eq.s32.totalorder %s21, 5
    %p200 = scmp.ne.s32.totalorder %s195, %s197
    %p201 = scmp.eq.s32.totalorder %s21, 0
    %p202 = por %p200, %p201
    %p203 = scmp.ne.s32.totalorder %s195, %s197
    %p204 = scmp.eq.s32.totalorder %s26, 5
    %p205 = por %p203, %p204
    %p206 = scmp.ne.s32.totalorder %s197, %s198
    %p207 = scmp.eq.s32.totalorder %s26, 0
    %p208 = por %p206, %p207
    %p209 = scmp.ne.s32.totalorder %s197, %s198
    %p210 = scmp.eq.s32.totalorder %s27, 5
    %p211 = por %p209, %p210
    %p213 = scmp.ne.s32.totalorder %s198, %s212
    %p214 = scmp.eq.s32.totalorder %s27, 0
    %p215 = por %p213, %p214
    %s217 = sadd.s32 %s216, 1
    %p220 = scmp.eq.s32.totalorder %s21, 5
    %p221 = scmp.ne.s32.totalorder %s216, %s218
    %p222 = scmp.eq.s32.totalorder %s21, 0
    %p223 = por %p221, %p222
    %p224 = scmp.ne.s32.totalorder %s216, %s218
    %p225 = scmp.eq.s32.totalorder %s26, 5
    %p226 = por %p224, %p225
    %p227 = scmp.ne.s32.totalorder %s218, %s219
    %p228 = scmp.eq.s32.totalorder %s26, 0
    %p229 = por %p227, %p228
    %p230 = scmp.ne.s32.totalorder %s218, %s219
    %p231 = scmp.eq.s32.totalorder %s27, 5
    %p232 = por %p230, %p231
    %p234 = scmp.ne.s32.totalorder %s219, %s233
    %p235 = scmp.eq.s32.totalorder %s27, 0
    %p236 = por %p234, %p235
    %s238 = sadd.s32 %s237, 1
    %p241 = scmp.eq.s32.totalorder %s21, 5
    %p242 = scmp.ne.s32.totalorder %s237, %s239
    %p243 = scmp.eq.s32.totalorder %s21, 0
    %p244 = por %p242, %p243
    %p245 = scmp.ne.s32.totalorder %s237, %s239
    %p246 = scmp.eq.s32.totalorder %s26, 5
    %p247 = por %p245, %p246
    %p248 = scmp.ne.s32.totalorder %s239, %s240
    %p249 = scmp.eq.s32.totalorder %s26, 0
    %p250 = por %p248, %p249
    %p251 = scmp.ne.s32.totalorder %s239, %s240
    %p252 = scmp.eq.s32.totalorder %s27, 5
    %p253 = por %p251, %p252
    %p255 = scmp.ne.s32.totalorder %s240, %s254
    %p256 = scmp.eq.s32.totalorder %s27, 0
    %p257 = por %p255, %p256
    %s259 = sadd.s32 %s258, 1
    %p262 = scmp.eq.s32.totalorder %s21, 5
    %p263 = scmp.ne.s32.totalorder %s258, %s260
    %p264 = scmp.eq.s32.totalorder %s21, 0
    %p265 = por %p263, %p264
    %p266 = scmp.ne.s32.totalorder %s258, %s260
    %p267 = scmp.eq.s32.totalorder %s26, 5
    %p268 = por %p266, %p267
    %p269 = scmp.ne.s32.totalorder %s260, %s261
    %p270 = scmp.eq.s32.totalorder %s26, 0
    %p271 = por %p269, %p270
    %p272 = scmp.ne.s32.totalorder %s260, %s261
    %p273 = scmp.eq.s32.totalorder %s27, 5
    %p274 = por %p272, %p273
    %p276 = scmp.ne.s32.totalorder %s261, %s275
    %p277 = scmp.eq.s32.totalorder %s27, 0
    %p278 = por %p276, %p277
    %s280 = sadd.s32 %s279, 1
    %p283 = scmp.eq.s32.totalorder %s21, 5
    %p284 = scmp.ne.s32.totalorder %s279, %s281
    %p285 = scmp.eq.s32.totalorder %s21, 0
    %p286 = por %p284, %p285
    %p287 = scmp.ne.s32.totalorder %s279, %s281
    %p288 = scmp.eq.s32.totalorder %s26, 5
    %p289 = por %p287, %p288
    %p290 = scmp.ne.s32.totalorder %s281, %s282
    %p291 = scmp.eq.s32.totalorder %s26, 0
    %p292 = por %p290, %p291
    %p293 = scmp.ne.s32.totalorder %s281, %s282
    %p294 = scmp.eq.s32.totalorder %s27, 5
    %p295 = por %p293, %p294
    %p297 = scmp.ne.s32.totalorder %s282, %s296
    %p298 = scmp.eq.s32.totalorder %s27, 0
    %p299 = por %p297, %p298
    %s301 = sadd.s32 %s300, 1
    %p304 = scmp.eq.s32.totalorder %s21, 5
    %p305 = scmp.ne.s32.totalorder %s300, %s302
    %p306 = scmp.eq.s32.totalorder %s21, 0
    %p307 = por %p305, %p306
    %p308 = scmp.ne.s32.totalorder %s300, %s302
    %p309 = scmp.eq.s32.totalorder %s26, 5
    %p310 = por %p308, %p309
    %p311 = scmp.ne.s32.totalorder %s302, %s303
    %p312 = scmp.eq.s32.totalorder %s26, 0
    %p313 = por %p311, %p312
    %p314 = scmp.ne.s32.totalorder %s302, %s303
    %p315 = scmp.eq.s32.totalorder %s27, 5
    %p316 = por %p314, %p315
    %p318 = scmp.ne.s32.totalorder %s303, %s317
    %p319 = scmp.eq.s32.totalorder %s27, 0
    %p320 = por %p318, %p319
    %s322 = sadd.s32 %s321, 1
    %p325 = scmp.eq.s32.totalorder %s21, 5
    %p326 = scmp.ne.s32.totalorder %s321, %s323
    %p327 = scmp.eq.s32.totalorder %s21, 0
    %p328 = por %p326, %p327
    %p329 = scmp.ne.s32.totalorder %s321, %s323
    %p330 = scmp.eq.s32.totalorder %s26, 5
    %p331 = por %p329, %p330
    %p332 = scmp.ne.s32.totalorder %s323, %s324
    %p333 = scmp.eq.s32.totalorder %s26, 0
    %p334 = por %p332, %p333
    %p335 = scmp.ne.s32.totalorder %s323, %s324
    %p336 = scmp.eq.s32.totalorder %s27, 5
    %p337 = por %p335, %p336
    %p339 = scmp.ne.s32.totalorder %s324, %s338
    %p340 = scmp.eq.s32.totalorder %s27, 0
    %p341 = por %p339, %p340
    %s343 = sadd.s32 %s342, 1
    %p346 = scmp.eq.s32.totalorder %s21, 5
    %p347 = scmp.ne.s32.totalorder %s342, %s344
    %p348 = scmp.eq.s32.totalorder %s21, 0
    %p349 = por %p347, %p348
    %p350 = scmp.ne.s32.totalorder %s342, %s344
    %p351 = scmp.eq.s32.totalorder %s26, 5
    %p352 = por %p350, %p351
    %p353 = scmp.ne.s32.totalorder %s344, %s345
    %p354 = scmp.eq.s32.totalorder %s26, 0
    %p355 = por %p353, %p354
    %p356 = scmp.ne.s32.totalorder %s344, %s345
    %p357 = scmp.eq.s32.totalorder %s27, 5
    %p358 = por %p356, %p357
    %p360 = scmp.ne.s32.totalorder %s345, %s359
    %p361 = scmp.eq.s32.totalorder %s27, 0
    %p362 = por %p360, %p361
    %s363 = ssub.s32 %s28, %s40
    %s364 = ssub.s32 %s29, %s36
    %s365 = sor.u32 %s363, %s364
    %p366 = scmp.eq.s32.totalorder %s365, 0
    %s368 = sadd.s32 %s367, 1
    %s369 = scalar_select %p366, %s367, %s368
    %p372 = pneg %p366
    %p373 = scmp.eq.s32.totalorder %s21, 5
    %p374 = por %p372, %p373
    %p375 = scmp.ne.s32.totalorder %s367, %s370
    %p376 = scmp.eq.s32.totalorder %s21, 0
    %p377 = por %p375, %p376
    %p378 = scmp.ne.s32.totalorder %s367, %s370
    %p379 = scmp.eq.s32.totalorder %s26, 5
    %p380 = por %p378, %p379
    %p381 = scmp.ne.s32.totalorder %s370, %s371
    %p382 = scmp.eq.s32.totalorder %s26, 0
    %p383 = por %p381, %p382
    %p384 = scmp.ne.s32.totalorder %s370, %s371
    %p385 = scmp.eq.s32.totalorder %s27, 5
    %p386 = por %p384, %p385
    %p388 = scmp.ne.s32.totalorder %s371, %s387
    %p389 = scmp.eq.s32.totalorder %s27, 0
    %p390 = por %p388, %p389
    %p391 = scmp.le.s32.totalorder 1, %s21
    %p392 = scmp.lt.s32.totalorder %s21, 7
    %p393 = pnand %p391, %p392
    %p394 = pneg %p393
    // Predicated region
    $region9: #{summarization.1} parent=5 // pred_check
      _
    $region10: #{summarization.1} parent=5 // pred_check_branch
      %396 = sbr.rel (%p393) target = $region12
    $region11: #{summarization.1} parent=5 // pred_region
      %s397 = ssub.s32 %s21, 1
      // Predicated region
      $region13: #{summarization.1} parent=11 // pred_check
        %p398 = pneg %p82
      $region14: #{summarization.1} parent=11 // pred_check_branch
        %400 = sbr.rel (%p398) target = $region16
      $region15: #{summarization.1} parent=11 // pred_region
        _
      $region16: #{summarization.1} parent=11 // pred_fallthru
        _
      // Predicated region
      $region17: #{summarization.1} parent=11 // pred_check
        %p401 = pneg %p103
      $region18: #{summarization.1} parent=11 // pred_check_branch
        %403 = sbr.rel (%p401) target = $region20
      $region19: #{summarization.1} parent=11 // pred_region
        _
      $region20: #{summarization.1} parent=11 // pred_fallthru
        _
      // Predicated region
      $region21: #{summarization.1} parent=11 // pred_check
        %p404 = pneg %p124
      $region22: #{summarization.1} parent=11 // pred_check_branch
        %406 = sbr.rel (%p404) target = $region24
      $region23: #{summarization.1} parent=11 // pred_region
        _
      $region24: #{summarization.1} parent=11 // pred_fallthru
        _
      // Predicated region
      $region25: #{summarization.1} parent=11 // pred_check
        %p407 = pneg %p145
      $region26: #{summarization.1} parent=11 // pred_check_branch
        %409 = sbr.rel (%p407) target = $region28
      $region27: #{summarization.1} parent=11 // pred_region
        _
      $region28: #{summarization.1} parent=11 // pred_fallthru
        _
      // Predicated region
      $region29: #{summarization.1} parent=11 // pred_check
        %p410 = pneg %p166
      $region30: #{summarization.1} parent=11 // pred_check_branch
        %412 = sbr.rel (%p410) target = $region32
      $region31: #{summarization.1} parent=11 // pred_region
        _
      $region32: #{summarization.1} parent=11 // pred_fallthru
        _
      // Predicated region
      $region33: #{summarization.1} parent=11 // pred_check
        %p413 = pneg %p187
      $region34: #{summarization.1} parent=11 // pred_check_branch
        %415 = sbr.rel (%p413) target = $region36
      $region35: #{summarization.1} parent=11 // pred_region
        _
      $region36: #{summarization.1} parent=11 // pred_fallthru
        _
      // Predicated region
      $region37: #{summarization.1} parent=11 // pred_check
        %p416 = pneg %p208
      $region38: #{summarization.1} parent=11 // pred_check_branch
        %418 = sbr.rel (%p416) target = $region40
      $region39: #{summarization.1} parent=11 // pred_region
        _
      $region40: #{summarization.1} parent=11 // pred_fallthru
        _
      // Predicated region
      $region41: #{summarization.1} parent=11 // pred_check
        %p419 = pneg %p229
      $region42: #{summarization.1} parent=11 // pred_check_branch
        %421 = sbr.rel (%p419) target = $region44
      $region43: #{summarization.1} parent=11 // pred_region
        _
      $region44: #{summarization.1} parent=11 // pred_fallthru
        _
      // Predicated region
      $region45: #{summarization.1} parent=11 // pred_check
        %p422 = pneg %p250
      $region46: #{summarization.1} parent=11 // pred_check_branch
        %424 = sbr.rel (%p422) target = $region48
      $region47: #{summarization.1} parent=11 // pred_region
        _
      $region48: #{summarization.1} parent=11 // pred_fallthru
        _
      // Predicated region
      $region49: #{summarization.1} parent=11 // pred_check
        %p425 = pneg %p271
      $region50: #{summarization.1} parent=11 // pred_check_branch
        %427 = sbr.rel (%p425) target = $region52
      $region51: #{summarization.1} parent=11 // pred_region
        _
      $region52: #{summarization.1} parent=11 // pred_fallthru
        _
      // Predicated region
      $region53: #{summarization.1} parent=11 // pred_check
        %p428 = pneg %p292
      $region54: #{summarization.1} parent=11 // pred_check_branch
        %430 = sbr.rel (%p428) target = $region56
      $region55: #{summarization.1} parent=11 // pred_region
        _
      $region56: #{summarization.1} parent=11 // pred_fallthru
        _
      // Predicated region
      $region57: #{summarization.1} parent=11 // pred_check
        %p431 = pneg %p313
      $region58: #{summarization.1} parent=11 // pred_check_branch
        %433 = sbr.rel (%p431) target = $region60
      $region59: #{summarization.1} parent=11 // pred_region
        _
      $region60: #{summarization.1} parent=11 // pred_fallthru
        _
      // Predicated region
      $region61: #{summarization.1} parent=11 // pred_check
        %p434 = pneg %p334
      $region62: #{summarization.1} parent=11 // pred_check_branch
        %436 = sbr.rel (%p434) target = $region64
      $region63: #{summarization.1} parent=11 // pred_region
        _
      $region64: #{summarization.1} parent=11 // pred_fallthru
        _
      // Predicated region
      $region65: #{summarization.1} parent=11 // pred_check
        %p437 = pneg %p355
      $region66: #{summarization.1} parent=11 // pred_check_branch
        %439 = sbr.rel (%p437) target = $region68
      $region67: #{summarization.1} parent=11 // pred_region
        _
      $region68: #{summarization.1} parent=11 // pred_fallthru
        _
    $region12: #{summarization.1} parent=5 // pred_fallthru
      _
    %p440 = scmp.lt.s32.totalorder %s21, 6
    // Predicated region
    $region69: #{summarization.1} parent=5 // pred_check
      %p441 = pneg %p440
    $region70: #{summarization.1} parent=5 // pred_check_branch
      %443 = sbr.rel (%p441) target = $region72
    $region71: #{summarization.1} parent=5 // pred_region
      // Predicated region
      $region73: #{summarization.1} parent=71 // pred_check
        %p444 = pneg %p55
      $region74: #{summarization.1} parent=71 // pred_check_branch
        %446 = sbr.rel (%p444) target = $region76
      $region75: #{summarization.1} parent=71 // pred_region
        %p447 = scmp.lt.s32.totalorder %s28, 1
        %s448 = scalar_select %p447, %s28, 1
        %p449 = scmp.lt.s32.totalorder %s29, 2
        %s450 = scalar_select %p449, %s29, 2
        %s451 = smul.addr %s450, 4
        %s452 = smul.addr %s448, 12
        %s453 = sadd.s32 %s451, %s452
        %s454 = smul.addr %s453, 4
        %s455 = scalar_lea.vmem %s0, %s454
      $region76: #{summarization.1} parent=71 // pred_fallthru
        _
    $region72: #{summarization.1} parent=5 // pred_fallthru
      _
    %p456 = scmp.le.s32.totalorder 1, %s21
    %p457 = scmp.lt.s32.totalorder %s21, 7
    %p458 = pnand %p456, %p457
    %p459 = pneg %p458
    // Predicated region
    $region77: #{summarization.1} parent=5 // pred_check
      _
    $region78: #{summarization.1} parent=5 // pred_check_branch
      %461 = sbr.rel (%p458) target = $region80
    $region79: #{summarization.1} parent=5 // pred_region
      %s462 = ssub.s32 %s21, 1
      %p463 = scmp.lt.s32.totalorder %s30, 1
      %s464 = scalar_select %p463, %s30, 1
      %p465 = scmp.lt.s32.totalorder %s31, 2
      %s466 = scalar_select %p465, %s31, 2
      %s467 = smul.addr %s466, 4
      %s468 = smul.addr %s464, 12
      %s469 = sadd.s32 %s467, %s468
      %s470 = smul.addr %s469, 4
      %s471 = scalar_lea.vmem %s0, %s470
      %p472 = pneg %p61
      %p473 = pneg %p58
      %p474 = pneg %p82
      %p475 = pneg %p79
      %p476 = pneg %p103
      %p477 = pneg %p100
      %p478 = pneg %p124
      %p479 = pneg %p121
      %p480 = pneg %p145
      %p481 = pneg %p142
      %p482 = pneg %p166
      %p483 = pneg %p163
      %p484 = pneg %p187
      %p485 = pneg %p184
      %p486 = pneg %p208
      %p487 = pneg %p205
      %p488 = pneg %p229
      %p489 = pneg %p226
      %p490 = pneg %p250
      %p491 = pneg %p247
      %p492 = pneg %p271
      %p493 = pneg %p268
      %p494 = pneg %p292
      %p495 = pneg %p289
      %p496 = pneg %p313
      %p497 = pneg %p310
      %p498 = pneg %p334
      %p499 = pneg %p331
      %p500 = pneg %p355
      %p501 = pneg %p352
      %p502 = pneg %p383
      %p503 = pneg %p380
      %s504 = smul.u32 2, %s31
      %p505 = scmp.lt.s32.totalorder %s30, 1
      %s506 = scalar_select %p505, %s30, 1
      %p507 = scmp.lt.s32.totalorder %s504, 5
      %s508 = scalar_select %p507, %s504, 5
      %s509 = smul.addr %s506, 6
      %s510 = sadd.s32 %s508, %s509
      %s511 = smul.addr %s510, 8
      %s512 = scalar_lea.vmem %s15, %s511
      %p513 = scmp.lt.s32.totalorder %s30, 1
      %s514 = scalar_select %p513, %s30, 1
      %p515 = scmp.lt.s32.totalorder %s31, 2
      %s516 = scalar_select %p515, %s31, 2
      %s517 = smul.addr %s516, 4
      %s518 = smul.addr %s514, 12
      %s519 = sadd.s32 %s517, %s518
      %s520 = smul.addr %s519, 4
      %s521 = scalar_lea.vmem %s0, %s520
      %s522 = smul.u32 2, %s31
      %p523 = scmp.lt.s32.totalorder %s30, 1
      %s524 = scalar_select %p523, %s30, 1
      %p525 = scmp.lt.s32.totalorder %s522, 5
      %s526 = scalar_select %p525, %s522, 5
      %s527 = smul.addr %s524, 6
      %s528 = sadd.s32 %s526, %s527
      %s529 = smul.addr %s528, 8
      %s530 = scalar_lea.vmem %s15, %s529
      %s531 = smul.u32 2, %s31
      %v533 = vld [vmem:[%s521] sm:$0xf]
      %v534 = vld [vmem:[%s521 + $0x4] sm:$0xf]
      %v535 = vld [vmem:[%s521 + $0x8] sm:$0xf]
      %v536 = vld [vmem:[%s521 + $0xc] sm:$0x3]
      %v537 = vld [vmem:[%s1] sm:$0xff]
      %v538 = vld [vmem:[%s1 + $0x8] sm:$0xff]
      %v539 = vld [vmem:[%s1 + $0x10] sm:$0xff]
      %v540 = vld [vmem:[%s1 + $0x18] sm:$0xff]
      %v541 = vld [vmem:[%s1 + $0x20] sm:$0xff]
      %v542 = vld [vmem:[%s1 + $0x28] sm:$0xff]
      %v543 = vld [vmem:[%s1 + $0x30] sm:$0xff]
      %v544 = vld [vmem:[%s1 + $0x38] sm:$0xff]
      %v545 = vld [vmem:[%s1 + $0x40] sm:$0xff]
      %v546 = vld [vmem:[%s1 + $0x48] sm:$0xff]
      %v547 = vld [vmem:[%s1 + $0x50] sm:$0xff]
      %v548 = vld [vmem:[%s1 + $0x58] sm:$0xff]
      %v549 = vld [vmem:[%s1 + $0x60] sm:$0xff]
      %v550 = vld [vmem:[%s1 + $0x68] sm:$0xff]
      %v551 = vld [vmem:[%s1 + $0x70] sm:$0xff]
      %v552 = vld [vmem:[%s1 + $0x78] sm:$0xff]
      %v556 = vunpack.c.l.b16 %v533
      %v557 = vunpack.c.l.b16 %v534
      %v558 = vunpack.c.l.b16 %v535
      %v559 = vpack.c.b16 %v557, %v556
      %v560 = vpack.c.b16 %v558, %v558
      %vm561 = vcmask 1044480
      %v562 = vrot.slane %v559, 3
      %v563 = vrot.slane %v560, 3
      %v564 = vsel %vm561, %v562, %v563
      %v581 = vunpack.c.l.b16 %v537
      %v582 = vunpack.c.h.b16 %v537
      %v583 = vunpack.c.l.b16 %v538
      %v584 = vunpack.c.h.b16 %v538
      %v585 = vunpack.c.l.b16 %v539
      %v586 = vunpack.c.h.b16 %v539
      %v587 = vunpack.c.l.b16 %v540
      %v588 = vunpack.c.h.b16 %v540
      %v589 = vunpack.c.l.b16 %v541
      %v590 = vunpack.c.h.b16 %v541
      %v591 = vunpack.c.l.b16 %v542
      %v592 = vunpack.c.h.b16 %v542
      %v593 = vunpack.c.l.b16 %v543
      %v594 = vunpack.c.h.b16 %v543
      %v595 = vunpack.c.l.b16 %v544
      %v596 = vunpack.c.h.b16 %v544
      %v597 = vunpack.c.l.b16 %v545
      %v598 = vunpack.c.h.b16 %v545
      %v599 = vunpack.c.l.b16 %v546
      %v600 = vunpack.c.h.b16 %v546
      %v601 = vunpack.c.l.b16 %v547
      %v602 = vunpack.c.h.b16 %v547
      %v603 = vunpack.c.l.b16 %v548
      %v604 = vunpack.c.h.b16 %v548
      %v605 = vunpack.c.l.b16 %v549
      %v606 = vunpack.c.h.b16 %v549
      %v607 = vunpack.c.l.b16 %v550
      %v608 = vunpack.c.h.b16 %v550
      %v609 = vunpack.c.l.b16 %v551
      %v610 = vunpack.c.h.b16 %v551
      %v611 = vunpack.c.l.b16 %v552
      %v612 = vunpack.c.h.b16 %v552
      %v613 = vpack.c.b16 %v589, %v581
      %v614 = vpack.c.b16 %v590, %v582
      %v615 = vpack.c.b16 %v591, %v583
      %v616 = vpack.c.b16 %v592, %v584
      %v617 = vpack.c.b16 %v593, %v585
      %v618 = vpack.c.b16 %v594, %v586
      %v619 = vpack.c.b16 %v595, %v587
      %v620 = vpack.c.b16 %v596, %v588
      %v621 = vpack.c.b16 %v605, %v597
      %v622 = vpack.c.b16 %v606, %v598
      %v623 = vpack.c.b16 %v607, %v599
      %v624 = vpack.c.b16 %v608, %v600
      %v625 = vpack.c.b16 %v609, %v601
      %v626 = vpack.c.b16 %v610, %v602
      %v627 = vpack.c.b16 %v611, %v603
      %v628 = vpack.c.b16 %v612, %v604
      %vm645 = vcmask 261120
      %v647 = vsel %vm645, %v564, 0
      %649 = vmatprep.subr.bf16.mxu0 0
      %650 = vmatpush1.bf16.msra.mxu0 0
      %651 = vmatprep.subr.bf16.mxu0 0
      %652 = vmatpush1.bf16.msra.mxu0 0
      %653 = vmatprep.subr.bf16.mxu0 0
      %654 = vmatpush1.bf16.msra.mxu0 0
      %655 = vmatprep.subr.bf16.mxu0 0
      %656 = vmatpush1.bf16.msra.mxu0 0
      %657 = vmatprep.subr.bf16.mxu0 0
      %658 = vmatpush1.bf16.msra.mxu0 0
      %659 = vmatprep.subr.bf16.mxu0 0
      %660 = vmatpush1.bf16.msra.mxu0 0
      %661 = vmatprep.subr.bf16.mxu0 %v622
      %662 = vmatpush1.bf16.msra.mxu0 %v621
      %663 = vmatprep.subr.bf16.mxu0 %v614
      %664 = vmatpush1.bf16.msra.mxu0 %v613
      %665 = vmatprep.subr.bf16.mxu0 0
      %666 = vmatpush2.bf16.msra.mxu0 0
      %667 = vmatprep.subr.bf16.mxu0 0
      %668 = vmatpush2.bf16.msra.mxu0 0
      %669 = vmatprep.subr.bf16.mxu0 0
      %670 = vmatpush2.bf16.msra.mxu0 0
      %671 = vmatprep.subr.bf16.mxu0 0
      %672 = vmatpush2.bf16.msra.mxu0 0
      %673 = vmatprep.subr.bf16.mxu0 0
      %674 = vmatpush2.bf16.msra.mxu0 0
      %675 = vmatprep.subr.bf16.mxu0 0
      %676 = vmatpush2.bf16.msra.mxu0 0
      %677 = vmatprep.subr.bf16.mxu0 0
      %678 = vmatpush2.bf16.msra.mxu0 0
      %679 = vmatprep.subr.bf16.mxu0 0
      %680 = vmatpush2.bf16.msra.mxu0 0
      %681 = vmatprep.mubr.bf16.mxu0 0
      %682 = vmatmul.mubr.bf16.gmra.mxu0 %v647
      %v683 = vpop.f32.mrf.mxu0
      %v684 = vadd.f32 0.0, %v683
      %v685 = vpop.f32.mrf.mxu0
      %v686 = vadd.f32 0.0, %v685
      %v687 = vpop.f32.mrf.mxu0
      %v688 = vadd.f32 0.0, %v687
      %v689 = vpop.f32.mrf.mxu0
      %v690 = vadd.f32 0.0, %v689
      %691 = vdwg.mxu0
      %692 = vmatprep.subr.bf16.mxu0 0
      %693 = vmatpush1.bf16.msra.mxu0 0
      %694 = vmatprep.subr.bf16.mxu0 0
      %695 = vmatpush1.bf16.msra.mxu0 0
      %696 = vmatprep.subr.bf16.mxu0 0
      %697 = vmatpush1.bf16.msra.mxu0 0
      %698 = vmatprep.subr.bf16.mxu0 0
      %699 = vmatpush1.bf16.msra.mxu0 0
      %700 = vmatprep.subr.bf16.mxu0 0
      %701 = vmatpush1.bf16.msra.mxu0 0
      %702 = vmatprep.subr.bf16.mxu0 0
      %703 = vmatpush1.bf16.msra.mxu0 0
      %704 = vmatprep.subr.bf16.mxu0 %v624
      %705 = vmatpush1.bf16.msra.mxu0 %v623
      %706 = vmatprep.subr.bf16.mxu0 %v616
      %707 = vmatpush1.bf16.msra.mxu0 %v615
      %708 = vmatprep.subr.bf16.mxu0 0
      %709 = vmatpush2.bf16.msra.mxu0 0
      %710 = vmatprep.subr.bf16.mxu0 0
      %711 = vmatpush2.bf16.msra.mxu0 0
      %712 = vmatprep.subr.bf16.mxu0 0
      %713 = vmatpush2.bf16.msra.mxu0 0
      %714 = vmatprep.subr.bf16.mxu0 0
      %715 = vmatpush2.bf16.msra.mxu0 0
      %716 = vmatprep.subr.bf16.mxu0 0
      %717 = vmatpush2.bf16.msra.mxu0 0
      %718 = vmatprep.subr.bf16.mxu0 0
      %719 = vmatpush2.bf16.msra.mxu0 0
      %720 = vmatprep.subr.bf16.mxu0 0
      %721 = vmatpush2.bf16.msra.mxu0 0
      %722 = vmatprep.subr.bf16.mxu0 0
      %723 = vmatpush2.bf16.msra.mxu0 0
      %724 = vmatprep.mubr.bf16.mxu0 0
      %725 = vmatmul.mubr.bf16.gmra.mxu0 %v647
      %v726 = vpop.f32.mrf.mxu0
      %v727 = vadd.f32 0.0, %v726
      %v728 = vpop.f32.mrf.mxu0
      %v729 = vadd.f32 0.0, %v728
      %v730 = vpop.f32.mrf.mxu0
      %v731 = vadd.f32 0.0, %v730
      %v732 = vpop.f32.mrf.mxu0
      %v733 = vadd.f32 0.0, %v732
      %734 = vdwg.mxu0
      %735 = vmatprep.subr.bf16.mxu0 0
      %736 = vmatpush1.bf16.msra.mxu0 0
      %737 = vmatprep.subr.bf16.mxu0 0
      %738 = vmatpush1.bf16.msra.mxu0 0
      %739 = vmatprep.subr.bf16.mxu0 0
      %740 = vmatpush1.bf16.msra.mxu0 0
      %741 = vmatprep.subr.bf16.mxu0 0
      %742 = vmatpush1.bf16.msra.mxu0 0
      %743 = vmatprep.subr.bf16.mxu0 0
      %744 = vmatpush1.bf16.msra.mxu0 0
      %745 = vmatprep.subr.bf16.mxu0 0
      %746 = vmatpush1.bf16.msra.mxu0 0
      %747 = vmatprep.subr.bf16.mxu0 %v626
      %748 = vmatpush1.bf16.msra.mxu0 %v625
      %749 = vmatprep.subr.bf16.mxu0 %v618
      %750 = vmatpush1.bf16.msra.mxu0 %v617
      %751 = vmatprep.subr.bf16.mxu0 0
      %752 = vmatpush2.bf16.msra.mxu0 0
      %753 = vmatprep.subr.bf16.mxu0 0
      %754 = vmatpush2.bf16.msra.mxu0 0
      %755 = vmatprep.subr.bf16.mxu0 0
      %756 = vmatpush2.bf16.msra.mxu0 0
      %757 = vmatprep.subr.bf16.mxu0 0
      %758 = vmatpush2.bf16.msra.mxu0 0
      %759 = vmatprep.subr.bf16.mxu0 0
      %760 = vmatpush2.bf16.msra.mxu0 0
      %761 = vmatprep.subr.bf16.mxu0 0
      %762 = vmatpush2.bf16.msra.mxu0 0
      %763 = vmatprep.subr.bf16.mxu0 0
      %764 = vmatpush2.bf16.msra.mxu0 0
      %765 = vmatprep.subr.bf16.mxu0 0
      %766 = vmatpush2.bf16.msra.mxu0 0
      %767 = vmatprep.mubr.bf16.mxu0 0
      %768 = vmatmul.mubr.bf16.gmra.mxu0 %v647
      %v769 = vpop.f32.mrf.mxu0
      %v770 = vadd.f32 0.0, %v769
      %v771 = vpop.f32.mrf.mxu0
      %v772 = vadd.f32 0.0, %v771
      %v773 = vpop.f32.mrf.mxu0
      %v774 = vadd.f32 0.0, %v773
      %v775 = vpop.f32.mrf.mxu0
      %v776 = vadd.f32 0.0, %v775
      %777 = vdwg.mxu0
      %778 = vmatprep.subr.bf16.mxu0 0
      %779 = vmatpush1.bf16.msra.mxu0 0
      %780 = vmatprep.subr.bf16.mxu0 0
      %781 = vmatpush1.bf16.msra.mxu0 0
      %782 = vmatprep.subr.bf16.mxu0 0
      %783 = vmatpush1.bf16.msra.mxu0 0
      %784 = vmatprep.subr.bf16.mxu0 0
      %785 = vmatpush1.bf16.msra.mxu0 0
      %786 = vmatprep.subr.bf16.mxu0 0
      %787 = vmatpush1.bf16.msra.mxu0 0
      %788 = vmatprep.subr.bf16.mxu0 0
      %789 = vmatpush1.bf16.msra.mxu0 0
      %790 = vmatprep.subr.bf16.mxu0 %v628
      %791 = vmatpush1.bf16.msra.mxu0 %v627
      %792 = vmatprep.subr.bf16.mxu0 %v620
      %793 = vmatpush1.bf16.msra.mxu0 %v619
      %794 = vmatprep.subr.bf16.mxu0 0
      %795 = vmatpush2.bf16.msra.mxu0 0
      %796 = vmatprep.subr.bf16.mxu0 0
      %797 = vmatpush2.bf16.msra.mxu0 0
      %798 = vmatprep.subr.bf16.mxu0 0
      %799 = vmatpush2.bf16.msra.mxu0 0
      %800 = vmatprep.subr.bf16.mxu0 0
      %801 = vmatpush2.bf16.msra.mxu0 0
      %802 = vmatprep.subr.bf16.mxu0 0
      %803 = vmatpush2.bf16.msra.mxu0 0
      %804 = vmatprep.subr.bf16.mxu0 0
      %805 = vmatpush2.bf16.msra.mxu0 0
      %806 = vmatprep.subr.bf16.mxu0 0
      %807 = vmatpush2.bf16.msra.mxu0 0
      %808 = vmatprep.subr.bf16.mxu0 0
      %809 = vmatpush2.bf16.msra.mxu0 0
      %810 = vmatprep.mubr.bf16.mxu0 0
      %811 = vmatmul.mubr.bf16.gmra.mxu0 %v647
      %v812 = vpop.f32.mrf.mxu0
      %v813 = vadd.f32 0.0, %v812
      %v814 = vpop.f32.mrf.mxu0
      %v815 = vadd.f32 0.0, %v814
      %v816 = vpop.f32.mrf.mxu0
      %v817 = vadd.f32 0.0, %v816
      %v818 = vpop.f32.mrf.mxu0
      %v819 = vadd.f32 0.0, %v818
      %820 = vdwg.mxu0
      %821 = vst [vmem:[#allocation2] sm:$0xff] %v684
      %822 = vst [vmem:[#allocation2 + $0x8] sm:$0xff] %v686
      %823 = vst [vmem:[#allocation2 + $0x10] sm:$0xff] %v727
      %824 = vst [vmem:[#allocation2 + $0x18] sm:$0xff] %v729
      %825 = vst [vmem:[#allocation2 + $0x20] sm:$0xff] %v770
      %826 = vst [vmem:[#allocation2 + $0x28] sm:$0xff] %v772
      %827 = vst [vmem:[#allocation2 + $0x30] sm:$0xff] %v813
      %828 = vst [vmem:[#allocation2 + $0x38] sm:$0xff] %v815
      %829 = vst [vmem:[#allocation2 + $0x40] sm:$0xff] %v688
      %830 = vst [vmem:[#allocation2 + $0x48] sm:$0xff] %v690
      %831 = vst [vmem:[#allocation2 + $0x50] sm:$0xff] %v731
      %832 = vst [vmem:[#allocation2 + $0x58] sm:$0xff] %v733
      %833 = vst [vmem:[#allocation2 + $0x60] sm:$0xff] %v774
      %834 = vst [vmem:[#allocation2 + $0x68] sm:$0xff] %v776
      %835 = vst [vmem:[#allocation2 + $0x70] sm:$0xff] %v817
      %836 = vst [vmem:[#allocation2 + $0x78] sm:$0xff] %v819
      %v837 = vld [vmem:[%s2] sm:$0xf]
      %v838 = vld [vmem:[%s2 + $0x4] sm:$0xf]
      %v839 = vld [vmem:[%s2 + $0x8] sm:$0xf]
      %v840 = vld [vmem:[%s2 + $0xc] sm:$0xf]
      %v845 = vunpack.c.l.b16 %v837
      %v846 = vunpack.c.l.b16 %v838
      %v847 = vunpack.c.l.b16 %v839
      %v848 = vunpack.c.l.b16 %v840
      %v849 = vpack.c.b16 %v846, %v845
      %v850 = vpack.c.b16 %v848, %v847
      %v854 = vsel %vm645, %v559, 0
      %856 = vmatprep.subr.bf16.mxu0 0
      %857 = vmatpush1.bf16.msra.mxu0 0
      %858 = vmatprep.subr.bf16.mxu0 0
      %859 = vmatpush1.bf16.msra.mxu0 0
      %860 = vmatprep.subr.bf16.mxu0 0
      %861 = vmatpush1.bf16.msra.mxu0 0
      %862 = vmatprep.subr.bf16.mxu0 0
      %863 = vmatpush1.bf16.msra.mxu0 0
      %864 = vmatprep.subr.bf16.mxu0 0
      %865 = vmatpush1.bf16.msra.mxu0 0
      %866 = vmatprep.subr.bf16.mxu0 0
      %867 = vmatpush1.bf16.msra.mxu0 0
      %868 = vmatprep.subr.bf16.mxu0 0
      %869 = vmatpush1.bf16.msra.mxu0 %v850
      %870 = vmatprep.subr.bf16.mxu0 0
      %871 = vmatpush1.bf16.msra.mxu0 %v849
      %872 = vmatprep.subr.bf16.mxu0 0
      %873 = vmatpush2.bf16.msra.mxu0 0
      %874 = vmatprep.subr.bf16.mxu0 0
      %875 = vmatpush2.bf16.msra.mxu0 0
      %876 = vmatprep.subr.bf16.mxu0 0
      %877 = vmatpush2.bf16.msra.mxu0 0
      %878 = vmatprep.subr.bf16.mxu0 0
      %879 = vmatpush2.bf16.msra.mxu0 0
      %880 = vmatprep.subr.bf16.mxu0 0
      %881 = vmatpush2.bf16.msra.mxu0 0
      %882 = vmatprep.subr.bf16.mxu0 0
      %883 = vmatpush2.bf16.msra.mxu0 0
      %884 = vmatprep.subr.bf16.mxu0 0
      %885 = vmatpush2.bf16.msra.mxu0 0
      %886 = vmatprep.subr.bf16.mxu0 0
      %887 = vmatpush2.bf16.msra.mxu0 0
      %888 = vmatprep.mubr.bf16.mxu0 0
      %889 = vmatmul.mubr.bf16.gmra.mxu0 %v854
      %v890 = vpop.f32.mrf.mxu0
      %v891 = vadd.f32 0.0, %v890
      %v892 = vpop.f32.mrf.mxu0
      %v893 = vpop.f32.mrf.mxu0
      %v894 = vadd.f32 0.0, %v893
      %v895 = vpop.f32.mrf.mxu0
      %896 = vdwg.mxu0
      %v897 = vld [vmem:[#allocation2 + $0x38] sm:$0xff]
      %v898 = vld [vmem:[#allocation2 + $0x78] sm:$0xff]
      %v899 = vadd.f32 %v897, %v891
      %v900 = vadd.f32 %v898, %v894
      %901 = vst [vmem:[#allocation2 + $0x38] sm:$0xff] %v899
      %902 = vst [vmem:[#allocation2 + $0x78] sm:$0xff] %v900
      %v903 = vld [vmem:[%s3] sm:$0xf]
      %v904 = vld [vmem:[%s3 + $0x4] sm:$0xf]
      %v905 = vld [vmem:[%s3 + $0x8] sm:$0xf]
      %v906 = vld [vmem:[%s3 + $0xc] sm:$0xf]
      %vm907 = vcmask 1046528
      %v908 = vrot.slane %v559, 1
      %v909 = vrot.slane %v560, 1
      %v910 = vsel %vm907, %v908, %v909
      %v915 = vunpack.c.l.b16 %v903
      %v916 = vunpack.c.l.b16 %v904
      %v917 = vunpack.c.l.b16 %v905
      %v918 = vunpack.c.l.b16 %v906
      %v919 = vpack.c.b16 %v916, %v915
      %v920 = vpack.c.b16 %v918, %v917
      %v924 = vsel %vm645, %v910, 0
      %926 = vmatprep.subr.bf16.mxu0 0
      %927 = vmatpush1.bf16.msra.mxu0 0
      %928 = vmatprep.subr.bf16.mxu0 0
      %929 = vmatpush1.bf16.msra.mxu0 0
      %930 = vmatprep.subr.bf16.mxu0 0
      %931 = vmatpush1.bf16.msra.mxu0 0
      %932 = vmatprep.subr.bf16.mxu0 0
      %933 = vmatpush1.bf16.msra.mxu0 0
      %934 = vmatprep.subr.bf16.mxu0 0
      %935 = vmatpush1.bf16.msra.mxu0 0
      %936 = vmatprep.subr.bf16.mxu0 0
      %937 = vmatpush1.bf16.msra.mxu0 0
      %938 = vmatprep.subr.bf16.mxu0 0
      %939 = vmatpush1.bf16.msra.mxu0 %v920
      %940 = vmatprep.subr.bf16.mxu0 0
      %941 = vmatpush1.bf16.msra.mxu0 %v919
      %942 = vmatprep.subr.bf16.mxu0 0
      %943 = vmatpush2.bf16.msra.mxu0 0
      %944 = vmatprep.subr.bf16.mxu0 0
      %945 = vmatpush2.bf16.msra.mxu0 0
      %946 = vmatprep.subr.bf16.mxu0 0
      %947 = vmatpush2.bf16.msra.mxu0 0
      %948 = vmatprep.subr.bf16.mxu0 0
      %949 = vmatpush2.bf16.msra.mxu0 0
      %950 = vmatprep.subr.bf16.mxu0 0
      %951 = vmatpush2.bf16.msra.mxu0 0
      %952 = vmatprep.subr.bf16.mxu0 0
      %953 = vmatpush2.bf16.msra.mxu0 0
      %954 = vmatprep.subr.bf16.mxu0 0
      %955 = vmatpush2.bf16.msra.mxu0 0
      %956 = vmatprep.subr.bf16.mxu0 0
      %957 = vmatpush2.bf16.msra.mxu0 0
      %958 = vmatprep.mubr.bf16.mxu0 0
      %959 = vmatmul.mubr.bf16.gmra.mxu0 %v924
      %v960 = vpop.f32.mrf.mxu0
      %v961 = vadd.f32 0.0, %v960
      %v962 = vpop.f32.mrf.mxu0
      %v963 = vpop.f32.mrf.mxu0
      %v964 = vadd.f32 0.0, %v963
      %v965 = vpop.f32.mrf.mxu0
      %966 = vdwg.mxu0
      %v967 = vld [vmem:[#allocation2 + $0x20] sm:$0xff]
      %v968 = vld [vmem:[#allocation2 + $0x60] sm:$0xff]
      %v969 = vadd.f32 %v967, %v961
      %v970 = vadd.f32 %v968, %v964
      %971 = vst [vmem:[#allocation2 + $0x20] sm:$0xff] %v969
      %972 = vst [vmem:[#allocation2 + $0x60] sm:$0xff] %v970
      %v973 = vld [vmem:[%s4] sm:$0xff]
      %v974 = vld [vmem:[%s4 + $0x8] sm:$0xff]
      %v975 = vld [vmem:[%s4 + $0x10] sm:$0xff]
      %v976 = vld [vmem:[%s4 + $0x18] sm:$0xff]
      %vm977 = vsmask.f32 6400
      %v978 = vshrl.u32 %v559, 16
      %v980 = vrot.slane %v978, 1
      %v981 = vshll.u32 %v559, 16
      %v983 = vrot.slane %v981, 2
      %v984 = vor.u32 %v980, %v983
      %v986 = vshrl.u32 %v560, 16
      %v988 = vrot.slane %v986, 1
      %v989 = vshll.u32 %v560, 16
      %v991 = vrot.slane %v989, 2
      %v992 = vor.u32 %v988, %v991
      %v993 = vsel %vm977, %v984, %v992
      %v998 = vunpack.c.l.b16 %v973
      %v999 = vunpack.c.h.b16 %v973
      %v1000 = vunpack.c.l.b16 %v974
      %v1001 = vunpack.c.h.b16 %v974
      %v1002 = vunpack.c.l.b16 %v975
      %v1003 = vunpack.c.h.b16 %v975
      %v1004 = vunpack.c.l.b16 %v976
      %v1005 = vunpack.c.h.b16 %v976
      %v1006 = vpack.c.b16 %v1000, %v998
      %v1007 = vpack.c.b16 %v1001, %v999
      %v1008 = vpack.c.b16 %v1004, %v1002
      %v1009 = vpack.c.b16 %v1005, %v1003
      %v1015 = vsel %vm645, %v993, 0
      %1017 = vmatprep.subr.bf16.mxu0 0
      %1018 = vmatpush1.bf16.msra.mxu0 0
      %1019 = vmatprep.subr.bf16.mxu0 0
      %1020 = vmatpush1.bf16.msra.mxu0 0
      %1021 = vmatprep.subr.bf16.mxu0 0
      %1022 = vmatpush1.bf16.msra.mxu0 0
      %1023 = vmatprep.subr.bf16.mxu0 0
      %1024 = vmatpush1.bf16.msra.mxu0 0
      %1025 = vmatprep.subr.bf16.mxu0 0
      %1026 = vmatpush1.bf16.msra.mxu0 0
      %1027 = vmatprep.subr.bf16.mxu0 0
      %1028 = vmatpush1.bf16.msra.mxu0 0
      %1029 = vmatprep.subr.bf16.mxu0 %v1009
      %1030 = vmatpush1.bf16.msra.mxu0 %v1008
      %1031 = vmatprep.subr.bf16.mxu0 %v1007
      %1032 = vmatpush1.bf16.msra.mxu0 %v1006
      %1033 = vmatprep.subr.bf16.mxu0 0
      %1034 = vmatpush2.bf16.msra.mxu0 0
      %1035 = vmatprep.subr.bf16.mxu0 0
      %1036 = vmatpush2.bf16.msra.mxu0 0
      %1037 = vmatprep.subr.bf16.mxu0 0
      %1038 = vmatpush2.bf16.msra.mxu0 0
      %1039 = vmatprep.subr.bf16.mxu0 0
      %1040 = vmatpush2.bf16.msra.mxu0 0
      %1041 = vmatprep.subr.bf16.mxu0 0
      %1042 = vmatpush2.bf16.msra.mxu0 0
      %1043 = vmatprep.subr.bf16.mxu0 0
      %1044 = vmatpush2.bf16.msra.mxu0 0
      %1045 = vmatprep.subr.bf16.mxu0 0
      %1046 = vmatpush2.bf16.msra.mxu0 0
      %1047 = vmatprep.subr.bf16.mxu0 0
      %1048 = vmatpush2.bf16.msra.mxu0 0
      %1049 = vmatprep.mubr.bf16.mxu0 0
      %1050 = vmatmul.mubr.bf16.gmra.mxu0 %v1015
      %v1051 = vpop.f32.mrf.mxu0
      %v1052 = vadd.f32 0.0, %v1051
      %v1053 = vpop.f32.mrf.mxu0
      %v1054 = vadd.f32 0.0, %v1053
      %v1055 = vpop.f32.mrf.mxu0
      %v1056 = vadd.f32 0.0, %v1055
      %v1057 = vpop.f32.mrf.mxu0
      %v1058 = vadd.f32 0.0, %v1057
      %1059 = vdwg.mxu0
      %v1060 = vld [vmem:[#allocation2 + $0x30] sm:$0xff]
      %v1061 = vld [vmem:[#allocation2 + $0x38] sm:$0xff]
      %v1062 = vld [vmem:[#allocation2 + $0x70] sm:$0xff]
      %v1063 = vld [vmem:[#allocation2 + $0x78] sm:$0xff]
      %v1064 = vadd.f32 %v1060, %v1052
      %v1065 = vadd.f32 %v1061, %v1054
      %v1066 = vadd.f32 %v1062, %v1056
      %v1067 = vadd.f32 %v1063, %v1058
      %1068 = vst [vmem:[#allocation2 + $0x30] sm:$0xff] %v1064
      %1069 = vst [vmem:[#allocation2 + $0x38] sm:$0xff] %v1065
      %1070 = vst [vmem:[#allocation2 + $0x70] sm:$0xff] %v1066
      %1071 = vst [vmem:[#allocation2 + $0x78] sm:$0xff] %v1067
      %v1072 = vld [vmem:[%s5] sm:$0xff]
      %v1073 = vld [vmem:[%s5 + $0x8] sm:$0xf]
      %v1074 = vld [vmem:[%s5 + $0xc] sm:$0xff]
      %v1075 = vld [vmem:[%s5 + $0x14] sm:$0xf]
      %v1076 = vld [vmem:[%s5 + $0x18] sm:$0xff]
      %v1077 = vld [vmem:[%s5 + $0x20] sm:$0xf]
      %v1078 = vld [vmem:[%s5 + $0x24] sm:$0xff]
      %v1079 = vld [vmem:[%s5 + $0x2c] sm:$0xf]
      %vm1080 = vcmask 1045504
      %v1081 = vrot.slane %v559, 2
      %v1082 = vrot.slane %v560, 2
      %v1083 = vsel %vm1080, %v1081, %v1082
      %v1092 = vunpack.c.l.b16 %v1072
      %v1093 = vunpack.c.h.b16 %v1072
      %v1094 = vunpack.c.l.b16 %v1073
      %v1095 = vunpack.c.l.b16 %v1074
      %v1096 = vunpack.c.h.b16 %v1074
      %v1097 = vunpack.c.l.b16 %v1075
      %v1098 = vunpack.c.l.b16 %v1076
      %v1099 = vunpack.c.h.b16 %v1076
      %v1100 = vunpack.c.l.b16 %v1077
      %v1101 = vunpack.c.l.b16 %v1078
      %v1102 = vunpack.c.h.b16 %v1078
      %v1103 = vunpack.c.l.b16 %v1079
      %v1104 = vpack.c.b16 %v1095, %v1092
      %v1105 = vpack.c.b16 %v1096, %v1093
      %v1106 = vpack.c.b16 %v1097, %v1094
      %v1107 = vpack.c.b16 %v1101, %v1098
      %v1108 = vpack.c.b16 %v1102, %v1099
      %v1109 = vpack.c.b16 %v1103, %v1100
      %v1117 = vsel %vm645, %v1083, 0
      %1119 = vmatprep.subr.bf16.mxu0 0
      %1120 = vmatpush1.bf16.msra.mxu0 0
      %1121 = vmatprep.subr.bf16.mxu0 0
      %1122 = vmatpush1.bf16.msra.mxu0 0
      %1123 = vmatprep.subr.bf16.mxu0 0
      %1124 = vmatpush1.bf16.msra.mxu0 0
      %1125 = vmatprep.subr.bf16.mxu0 0
      %1126 = vmatpush1.bf16.msra.mxu0 0
      %1127 = vmatprep.subr.bf16.mxu0 0
      %1128 = vmatpush1.bf16.msra.mxu0 0
      %1129 = vmatprep.subr.bf16.mxu0 0
      %1130 = vmatpush1.bf16.msra.mxu0 0
      %1131 = vmatprep.subr.bf16.mxu0 %v1108
      %1132 = vmatpush1.bf16.msra.mxu0 %v1107
      %1133 = vmatprep.subr.bf16.mxu0 %v1105
      %1134 = vmatpush1.bf16.msra.mxu0 %v1104
      %1135 = vmatprep.subr.bf16.mxu0 0
      %1136 = vmatpush2.bf16.msra.mxu0 0
      %1137 = vmatprep.subr.bf16.mxu0 0
      %1138 = vmatpush2.bf16.msra.mxu0 0
      %1139 = vmatprep.subr.bf16.mxu0 0
      %1140 = vmatpush2.bf16.msra.mxu0 0
      %1141 = vmatprep.subr.bf16.mxu0 0
      %1142 = vmatpush2.bf16.msra.mxu0 0
      %1143 = vmatprep.subr.bf16.mxu0 0
      %1144 = vmatpush2.bf16.msra.mxu0 0
      %1145 = vmatprep.subr.bf16.mxu0 0
      %1146 = vmatpush2.bf16.msra.mxu0 0
      %1147 = vmatprep.subr.bf16.mxu0 0
      %1148 = vmatpush2.bf16.msra.mxu0 0
      %1149 = vmatprep.subr.bf16.mxu0 0
      %1150 = vmatpush2.bf16.msra.mxu0 0
      %1151 = vmatprep.mubr.bf16.mxu0 0
      %1152 = vmatmul.mubr.bf16.gmra.mxu0 %v1117
      %v1153 = vpop.f32.mrf.mxu0
      %v1154 = vadd.f32 0.0, %v1153
      %v1155 = vpop.f32.mrf.mxu0
      %v1156 = vadd.f32 0.0, %v1155
      %v1157 = vpop.f32.mrf.mxu0
      %v1158 = vadd.f32 0.0, %v1157
      %v1159 = vpop.f32.mrf.mxu0
      %v1160 = vadd.f32 0.0, %v1159
      %1161 = vdwg.mxu0
      %1162 = vmatprep.subr.bf16.mxu0 0
      %1163 = vmatpush1.bf16.msra.mxu0 0
      %1164 = vmatprep.subr.bf16.mxu0 0
      %1165 = vmatpush1.bf16.msra.mxu0 0
      %1166 = vmatprep.subr.bf16.mxu0 0
      %1167 = vmatpush1.bf16.msra.mxu0 0
      %1168 = vmatprep.subr.bf16.mxu0 0
      %1169 = vmatpush1.bf16.msra.mxu0 0
      %1170 = vmatprep.subr.bf16.mxu0 0
      %1171 = vmatpush1.bf16.msra.mxu0 0
      %1172 = vmatprep.subr.bf16.mxu0 0
      %1173 = vmatpush1.bf16.msra.mxu0 0
      %1174 = vmatprep.subr.bf16.mxu0 0
      %1175 = vmatpush1.bf16.msra.mxu0 %v1109
      %1176 = vmatprep.subr.bf16.mxu0 0
      %1177 = vmatpush1.bf16.msra.mxu0 %v1106
      %1178 = vmatprep.subr.bf16.mxu0 0
      %1179 = vmatpush2.bf16.msra.mxu0 0
      %1180 = vmatprep.subr.bf16.mxu0 0
      %1181 = vmatpush2.bf16.msra.mxu0 0
      %1182 = vmatprep.subr.bf16.mxu0 0
      %1183 = vmatpush2.bf16.msra.mxu0 0
      %1184 = vmatprep.subr.bf16.mxu0 0
      %1185 = vmatpush2.bf16.msra.mxu0 0
      %1186 = vmatprep.subr.bf16.mxu0 0
      %1187 = vmatpush2.bf16.msra.mxu0 0
      %1188 = vmatprep.subr.bf16.mxu0 0
      %1189 = vmatpush2.bf16.msra.mxu0 0
      %1190 = vmatprep.subr.bf16.mxu0 0
      %1191 = vmatpush2.bf16.msra.mxu0 0
      %1192 = vmatprep.subr.bf16.mxu0 0
      %1193 = vmatpush2.bf16.msra.mxu0 0
      %1194 = vmatprep.mubr.bf16.mxu0 0
      %1195 = vmatmul.mubr.bf16.gmra.mxu0 %v1117
      %v1196 = vpop.f32.mrf.mxu0
      %v1197 = vadd.f32 0.0, %v1196
      %v1198 = vpop.f32.mrf.mxu0
      %v1199 = vpop.f32.mrf.mxu0
      %v1200 = vadd.f32 0.0, %v1199
      %v1201 = vpop.f32.mrf.mxu0
      %1202 = vdwg.mxu0
      %v1203 = vld [vmem:[#allocation2 + $0x18] sm:$0xff]
      %v1204 = vld [vmem:[#allocation2 + $0x20] sm:$0xff]
      %v1205 = vld [vmem:[#allocation2 + $0x28] sm:$0xff]
      %v1206 = vld [vmem:[#allocation2 + $0x58] sm:$0xff]
      %v1207 = vld [vmem:[#allocation2 + $0x60] sm:$0xff]
      %v1208 = vld [vmem:[#allocation2 + $0x68] sm:$0xff]
      %v1209 = vadd.f32 %v1203, %v1154
      %v1210 = vadd.f32 %v1204, %v1156
      %v1211 = vadd.f32 %v1205, %v1197
      %v1212 = vadd.f32 %v1206, %v1158
      %v1213 = vadd.f32 %v1207, %v1160
      %v1214 = vadd.f32 %v1208, %v1200
      %1215 = vst [vmem:[#allocation2 + $0x18] sm:$0xff] %v1209
      %1216 = vst [vmem:[#allocation2 + $0x20] sm:$0xff] %v1210
      %1217 = vst [vmem:[#allocation2 + $0x28] sm:$0xff] %v1211
      %1218 = vst [vmem:[#allocation2 + $0x58] sm:$0xff] %v1212
      %1219 = vst [vmem:[#allocation2 + $0x60] sm:$0xff] %v1213
      %1220 = vst [vmem:[#allocation2 + $0x68] sm:$0xff] %v1214
      %v1221 = vld [vmem:[%s6] sm:$0xff]
      %v1222 = vld [vmem:[%s6 + $0x8] sm:$0xff]
      %v1223 = vld [vmem:[%s6 + $0x10] sm:$0xff]
      %v1224 = vld [vmem:[%s6 + $0x18] sm:$0xff]
      %vm1225 = vsmask.f32 5376
      %v1226 = vrot.slane %v978, 2
      %v1227 = vrot.slane %v981, 3
      %v1228 = vor.u32 %v1226, %v1227
      %v1229 = vrot.slane %v986, 2
      %v1230 = vrot.slane %v989, 3
      %v1231 = vor.u32 %v1229, %v1230
      %v1232 = vsel %vm1225, %v1228, %v1231
      %v1237 = vunpack.c.l.b16 %v1221
      %v1238 = vunpack.c.h.b16 %v1221
      %v1239 = vunpack.c.l.b16 %v1222
      %v1240 = vunpack.c.h.b16 %v1222
      %v1241 = vunpack.c.l.b16 %v1223
      %v1242 = vunpack.c.h.b16 %v1223
      %v1243 = vunpack.c.l.b16 %v1224
      %v1244 = vunpack.c.h.b16 %v1224
      %v1245 = vpack.c.b16 %v1239, %v1237
      %v1246 = vpack.c.b16 %v1240, %v1238
      %v1247 = vpack.c.b16 %v1243, %v1241
      %v1248 = vpack.c.b16 %v1244, %v1242
      %v1254 = vsel %vm645, %v1232, 0
      %1256 = vmatprep.subr.bf16.mxu0 0
      %1257 = vmatpush1.bf16.msra.mxu0 0
      %1258 = vmatprep.subr.bf16.mxu0 0
      %1259 = vmatpush1.bf16.msra.mxu0 0
      %1260 = vmatprep.subr.bf16.mxu0 0
      %1261 = vmatpush1.bf16.msra.mxu0 0
      %1262 = vmatprep.subr.bf16.mxu0 0
      %1263 = vmatpush1.bf16.msra.mxu0 0
      %1264 = vmatprep.subr.bf16.mxu0 0
      %1265 = vmatpush1.bf16.msra.mxu0 0
      %1266 = vmatprep.subr.bf16.mxu0 0
      %1267 = vmatpush1.bf16.msra.mxu0 0
      %1268 = vmatprep.subr.bf16.mxu0 %v1248
      %1269 = vmatpush1.bf16.msra.mxu0 %v1247
      %1270 = vmatprep.subr.bf16.mxu0 %v1246
      %1271 = vmatpush1.bf16.msra.mxu0 %v1245
      %1272 = vmatprep.subr.bf16.mxu0 0
      %1273 = vmatpush2.bf16.msra.mxu0 0
      %1274 = vmatprep.subr.bf16.mxu0 0
      %1275 = vmatpush2.bf16.msra.mxu0 0
      %1276 = vmatprep.subr.bf16.mxu0 0
      %1277 = vmatpush2.bf16.msra.mxu0 0
      %1278 = vmatprep.subr.bf16.mxu0 0
      %1279 = vmatpush2.bf16.msra.mxu0 0
      %1280 = vmatprep.subr.bf16.mxu0 0
      %1281 = vmatpush2.bf16.msra.mxu0 0
      %1282 = vmatprep.subr.bf16.mxu0 0
      %1283 = vmatpush2.bf16.msra.mxu0 0
      %1284 = vmatprep.subr.bf16.mxu0 0
      %1285 = vmatpush2.bf16.msra.mxu0 0
      %1286 = vmatprep.subr.bf16.mxu0 0
      %1287 = vmatpush2.bf16.msra.mxu0 0
      %1288 = vmatprep.mubr.bf16.mxu0 0
      %1289 = vmatmul.mubr.bf16.gmra.mxu0 %v1254
      %v1290 = vpop.f32.mrf.mxu0
      %v1291 = vadd.f32 0.0, %v1290
      %v1292 = vpop.f32.mrf.mxu0
      %v1293 = vadd.f32 0.0, %v1292
      %v1294 = vpop.f32.mrf.mxu0
      %v1295 = vadd.f32 0.0, %v1294
      %v1296 = vpop.f32.mrf.mxu0
      %v1297 = vadd.f32 0.0, %v1296
      %1298 = vdwg.mxu0
      %v1299 = vld [vmem:[#allocation2 + $0x10] sm:$0xff]
      %v1300 = vld [vmem:[#allocation2 + $0x18] sm:$0xff]
      %v1301 = vld [vmem:[#allocation2 + $0x50] sm:$0xff]
      %v1302 = vld [vmem:[#allocation2 + $0x58] sm:$0xff]
      %v1303 = vadd.f32 %v1299, %v1291
      %v1304 = vadd.f32 %v1300, %v1293
      %v1305 = vadd.f32 %v1301, %v1295
      %v1306 = vadd.f32 %v1302, %v1297
      %1307 = vst [vmem:[#allocation2 + $0x10] sm:$0xff] %v1303
      %1308 = vst [vmem:[#allocation2 + $0x18] sm:$0xff] %v1304
      %1309 = vst [vmem:[#allocation2 + $0x50] sm:$0xff] %v1305
      %1310 = vst [vmem:[#allocation2 + $0x58] sm:$0xff] %v1306
      %v1311 = vld [vmem:[%s7] sm:$0xff]
      %v1312 = vld [vmem:[%s7 + $0x8] sm:$0xff]
      %v1313 = vld [vmem:[%s7 + $0x10] sm:$0xff]
      %v1314 = vld [vmem:[%s7 + $0x18] sm:$0xff]
      %vm1315 = vsmask.f32 4352
      %v1316 = vrot.slane %v978, 3
      %v1317 = vrot.slane %v981, 4
      %v1318 = vor.u32 %v1316, %v1317
      %v1319 = vrot.slane %v986, 3
      %v1320 = vrot.slane %v989, 4
      %v1321 = vor.u32 %v1319, %v1320
      %v1322 = vsel %vm1315, %v1318, %v1321
      %v1327 = vunpack.c.l.b16 %v1311
      %v1328 = vunpack.c.h.b16 %v1311
      %v1329 = vunpack.c.l.b16 %v1312
      %v1330 = vunpack.c.h.b16 %v1312
      %v1331 = vunpack.c.l.b16 %v1313
      %v1332 = vunpack.c.h.b16 %v1313
      %v1333 = vunpack.c.l.b16 %v1314
      %v1334 = vunpack.c.h.b16 %v1314
      %v1335 = vpack.c.b16 %v1329, %v1327
      %v1336 = vpack.c.b16 %v1330, %v1328
      %v1337 = vpack.c.b16 %v1333, %v1331
      %v1338 = vpack.c.b16 %v1334, %v1332
      %v1344 = vsel %vm645, %v1322, 0
      %1346 = vmatprep.subr.bf16.mxu0 0
      %1347 = vmatpush1.bf16.msra.mxu0 0
      %1348 = vmatprep.subr.bf16.mxu0 0
      %1349 = vmatpush1.bf16.msra.mxu0 0
      %1350 = vmatprep.subr.bf16.mxu0 0
      %1351 = vmatpush1.bf16.msra.mxu0 0
      %1352 = vmatprep.subr.bf16.mxu0 0
      %1353 = vmatpush1.bf16.msra.mxu0 0
      %1354 = vmatprep.subr.bf16.mxu0 0
      %1355 = vmatpush1.bf16.msra.mxu0 0
      %1356 = vmatprep.subr.bf16.mxu0 0
      %1357 = vmatpush1.bf16.msra.mxu0 0
      %1358 = vmatprep.subr.bf16.mxu0 %v1338
      %1359 = vmatpush1.bf16.msra.mxu0 %v1337
      %1360 = vmatprep.subr.bf16.mxu0 %v1336
      %1361 = vmatpush1.bf16.msra.mxu0 %v1335
      %1362 = vmatprep.subr.bf16.mxu0 0
      %1363 = vmatpush2.bf16.msra.mxu0 0
      %1364 = vmatprep.subr.bf16.mxu0 0
      %1365 = vmatpush2.bf16.msra.mxu0 0
      %1366 = vmatprep.subr.bf16.mxu0 0
      %1367 = vmatpush2.bf16.msra.mxu0 0
      %1368 = vmatprep.subr.bf16.mxu0 0
      %1369 = vmatpush2.bf16.msra.mxu0 0
      %1370 = vmatprep.subr.bf16.mxu0 0
      %1371 = vmatpush2.bf16.msra.mxu0 0
      %1372 = vmatprep.subr.bf16.mxu0 0
      %1373 = vmatpush2.bf16.msra.mxu0 0
      %1374 = vmatprep.subr.bf16.mxu0 0
      %1375 = vmatpush2.bf16.msra.mxu0 0
      %1376 = vmatprep.subr.bf16.mxu0 0
      %1377 = vmatpush2.bf16.msra.mxu0 0
      %1378 = vmatprep.mubr.bf16.mxu0 0
      %1379 = vmatmul.mubr.bf16.gmra.mxu0 %v1344
      %v1380 = vpop.f32.mrf.mxu0
      %v1381 = vadd.f32 0.0, %v1380
      %v1382 = vpop.f32.mrf.mxu0
      %v1383 = vadd.f32 0.0, %v1382
      %v1384 = vpop.f32.mrf.mxu0
      %v1385 = vadd.f32 0.0, %v1384
      %v1386 = vpop.f32.mrf.mxu0
      %v1387 = vadd.f32 0.0, %v1386
      %1388 = vdwg.mxu0
      %v1389 = vld [vmem:[#allocation2 + $0x10] sm:$0xff]
      %v1390 = vld [vmem:[#allocation2 + $0x18] sm:$0xff]
      %v1391 = vld [vmem:[#allocation2 + $0x50] sm:$0xff]
      %v1392 = vld [vmem:[#allocation2 + $0x58] sm:$0xff]
      %v1393 = vadd.f32 %v1389, %v1381
      %v1394 = vadd.f32 %v1390, %v1383
      %v1395 = vadd.f32 %v1391, %v1385
      %v1396 = vadd.f32 %v1392, %v1387
      %1397 = vst [vmem:[#allocation2 + $0x10] sm:$0xff] %v1393
      %1398 = vst [vmem:[#allocation2 + $0x18] sm:$0xff] %v1394
      %1399 = vst [vmem:[#allocation2 + $0x50] sm:$0xff] %v1395
      %1400 = vst [vmem:[#allocation2 + $0x58] sm:$0xff] %v1396
      %v1401 = vld [vmem:[%s8] sm:$0xff]
      %v1402 = vld [vmem:[%s8 + $0x8] sm:$0xf]
      %v1403 = vld [vmem:[%s8 + $0xc] sm:$0xff]
      %v1404 = vld [vmem:[%s8 + $0x14] sm:$0xf]
      %v1405 = vld [vmem:[%s8 + $0x18] sm:$0xff]
      %v1406 = vld [vmem:[%s8 + $0x20] sm:$0xf]
      %v1407 = vld [vmem:[%s8 + $0x24] sm:$0xff]
      %v1408 = vld [vmem:[%s8 + $0x2c] sm:$0xf]
      %v1409 = vpack.c.b16 %v558, %v557
      %v1418 = vunpack.c.l.b16 %v1401
      %v1419 = vunpack.c.h.b16 %v1401
      %v1420 = vunpack.c.l.b16 %v1402
      %v1421 = vunpack.c.l.b16 %v1403
      %v1422 = vunpack.c.h.b16 %v1403
      %v1423 = vunpack.c.l.b16 %v1404
      %v1424 = vunpack.c.l.b16 %v1405
      %v1425 = vunpack.c.h.b16 %v1405
      %v1426 = vunpack.c.l.b16 %v1406
      %v1427 = vunpack.c.l.b16 %v1407
      %v1428 = vunpack.c.h.b16 %v1407
      %v1429 = vunpack.c.l.b16 %v1408
      %v1430 = vpack.c.b16 %v1421, %v1418
      %v1431 = vpack.c.b16 %v1422, %v1419
      %v1432 = vpack.c.b16 %v1423, %v1420
      %v1433 = vpack.c.b16 %v1427, %v1424
      %v1434 = vpack.c.b16 %v1428, %v1425
      %v1435 = vpack.c.b16 %v1429, %v1426
      %v1443 = vsel %vm645, %v1409, 0
      %1445 = vmatprep.subr.bf16.mxu0 0
      %1446 = vmatpush1.bf16.msra.mxu0 0
      %1447 = vmatprep.subr.bf16.mxu0 0
      %1448 = vmatpush1.bf16.msra.mxu0 0
      %1449 = vmatprep.subr.bf16.mxu0 0
      %1450 = vmatpush1.bf16.msra.mxu0 0
      %1451 = vmatprep.subr.bf16.mxu0 0
      %1452 = vmatpush1.bf16.msra.mxu0 0
      %1453 = vmatprep.subr.bf16.mxu0 0
      %1454 = vmatpush1.bf16.msra.mxu0 0
      %1455 = vmatprep.subr.bf16.mxu0 0
      %1456 = vmatpush1.bf16.msra.mxu0 0
      %1457 = vmatprep.subr.bf16.mxu0 %v1434
      %1458 = vmatpush1.bf16.msra.mxu0 %v1433
      %1459 = vmatprep.subr.bf16.mxu0 %v1431
      %1460 = vmatpush1.bf16.msra.mxu0 %v1430
      %1461 = vmatprep.subr.bf16.mxu0 0
      %1462 = vmatpush2.bf16.msra.mxu0 0
      %1463 = vmatprep.subr.bf16.mxu0 0
      %1464 = vmatpush2.bf16.msra.mxu0 0
      %1465 = vmatprep.subr.bf16.mxu0 0
      %1466 = vmatpush2.bf16.msra.mxu0 0
      %1467 = vmatprep.subr.bf16.mxu0 0
      %1468 = vmatpush2.bf16.msra.mxu0 0
      %1469 = vmatprep.subr.bf16.mxu0 0
      %1470 = vmatpush2.bf16.msra.mxu0 0
      %1471 = vmatprep.subr.bf16.mxu0 0
      %1472 = vmatpush2.bf16.msra.mxu0 0
      %1473 = vmatprep.subr.bf16.mxu0 0
      %1474 = vmatpush2.bf16.msra.mxu0 0
      %1475 = vmatprep.subr.bf16.mxu0 0
      %1476 = vmatpush2.bf16.msra.mxu0 0
      %1477 = vmatprep.mubr.bf16.mxu0 0
      %1478 = vmatmul.mubr.bf16.gmra.mxu0 %v1443
      %v1479 = vpop.f32.mrf.mxu0
      %v1480 = vadd.f32 0.0, %v1479
      %v1481 = vpop.f32.mrf.mxu0
      %v1482 = vadd.f32 0.0, %v1481
      %v1483 = vpop.f32.mrf.mxu0
      %v1484 = vadd.f32 0.0, %v1483
      %v1485 = vpop.f32.mrf.mxu0
      %v1486 = vadd.f32 0.0, %v1485
      %1487 = vdwg.mxu0
      %1488 = vmatprep.subr.bf16.mxu0 0
      %1489 = vmatpush1.bf16.msra.mxu0 0
      %1490 = vmatprep.subr.bf16.mxu0 0
      %1491 = vmatpush1.bf16.msra.mxu0 0
      %1492 = vmatprep.subr.bf16.mxu0 0
      %1493 = vmatpush1.bf16.msra.mxu0 0
      %1494 = vmatprep.subr.bf16.mxu0 0
      %1495 = vmatpush1.bf16.msra.mxu0 0
      %1496 = vmatprep.subr.bf16.mxu0 0
      %1497 = vmatpush1.bf16.msra.mxu0 0
      %1498 = vmatprep.subr.bf16.mxu0 0
      %1499 = vmatpush1.bf16.msra.mxu0 0
      %1500 = vmatprep.subr.bf16.mxu0 0
      %1501 = vmatpush1.bf16.msra.mxu0 %v1435
      %1502 = vmatprep.subr.bf16.mxu0 0
      %1503 = vmatpush1.bf16.msra.mxu0 %v1432
      %1504 = vmatprep.subr.bf16.mxu0 0
      %1505 = vmatpush2.bf16.msra.mxu0 0
      %1506 = vmatprep.subr.bf16.mxu0 0
      %1507 = vmatpush2.bf16.msra.mxu0 0
      %1508 = vmatprep.subr.bf16.mxu0 0
      %1509 = vmatpush2.bf16.msra.mxu0 0
      %1510 = vmatprep.subr.bf16.mxu0 0
      %1511 = vmatpush2.bf16.msra.mxu0 0
      %1512 = vmatprep.subr.bf16.mxu0 0
      %1513 = vmatpush2.bf16.msra.mxu0 0
      %1514 = vmatprep.subr.bf16.mxu0 0
      %1515 = vmatpush2.bf16.msra.mxu0 0
      %1516 = vmatprep.subr.bf16.mxu0 0
      %1517 = vmatpush2.bf16.msra.mxu0 0
      %1518 = vmatprep.subr.bf16.mxu0 0
      %1519 = vmatpush2.bf16.msra.mxu0 0
      %1520 = vmatprep.mubr.bf16.mxu0 0
      %1521 = vmatmul.mubr.bf16.gmra.mxu0 %v1443
      %v1522 = vpop.f32.mrf.mxu0
      %v1523 = vadd.f32 0.0, %v1522
      %v1524 = vpop.f32.mrf.mxu0
      %v1525 = vpop.f32.mrf.mxu0
      %v1526 = vadd.f32 0.0, %v1525
      %v1527 = vpop.f32.mrf.mxu0
      %1528 = vdwg.mxu0
      %v1529 = vld [vmem:[#allocation2 + $0x18] sm:$0xff]
      %v1530 = vld [vmem:[#allocation2 + $0x20] sm:$0xff]
      %v1531 = vld [vmem:[#allocation2 + $0x28] sm:$0xff]
      %v1532 = vld [vmem:[#allocation2 + $0x58] sm:$0xff]
      %v1533 = vld [vmem:[#allocation2 + $0x60] sm:$0xff]
      %v1534 = vld [vmem:[#allocation2 + $0x68] sm:$0xff]
      %v1535 = vadd.f32 %v1529, %v1480
      %v1536 = vadd.f32 %v1530, %v1482
      %v1537 = vadd.f32 %v1531, %v1523
      %v1538 = vadd.f32 %v1532, %v1484
      %v1539 = vadd.f32 %v1533, %v1486
      %v1540 = vadd.f32 %v1534, %v1526
      %1541 = vst [vmem:[#allocation2 + $0x18] sm:$0xff] %v1535
      %1542 = vst [vmem:[#allocation2 + $0x20] sm:$0xff] %v1536
      %1543 = vst [vmem:[#allocation2 + $0x28] sm:$0xff] %v1537
      %1544 = vst [vmem:[#allocation2 + $0x58] sm:$0xff] %v1538
      %1545 = vst [vmem:[#allocation2 + $0x60] sm:$0xff] %v1539
      %1546 = vst [vmem:[#allocation2 + $0x68] sm:$0xff] %v1540
      %v1547 = vld [vmem:[%s9] sm:$0xff]
      %v1548 = vld [vmem:[%s9 + $0x8] sm:$0xff]
      %v1549 = vld [vmem:[%s9 + $0x10] sm:$0xff]
      %v1550 = vld [vmem:[%s9 + $0x18] sm:$0xff]
      %v1552 = vunpack.c.l.b16 %v536
      %v1553 = vpack.c.b16 %v1552, %v1552
      %vm1554 = vsmask.f32 7424
      %v1555 = vshrl.u32 %v1409, 16
      %v1557 = vshll.u32 %v1409, 16
      %v1559 = vrot.slane %v1557, 1
      %v1560 = vor.u32 %v1555, %v1559
      %v1562 = vshll.u32 %v1553, 16
      %v1564 = vrot.slane %v1562, 1
      %v1565 = vsel %vm1554, %v1560, %v1564
      %v1570 = vunpack.c.l.b16 %v1547
      %v1571 = vunpack.c.h.b16 %v1547
      %v1572 = vunpack.c.l.b16 %v1548
      %v1573 = vunpack.c.h.b16 %v1548
      %v1574 = vunpack.c.l.b16 %v1549
      %v1575 = vunpack.c.h.b16 %v1549
      %v1576 = vunpack.c.l.b16 %v1550
      %v1577 = vunpack.c.h.b16 %v1550
      %v1578 = vpack.c.b16 %v1572, %v1570
      %v1579 = vpack.c.b16 %v1573, %v1571
      %v1580 = vpack.c.b16 %v1576, %v1574
      %v1581 = vpack.c.b16 %v1577, %v1575
      %v1587 = vsel %vm645, %v1565, 0
      %1589 = vmatprep.subr.bf16.mxu0 0
      %1590 = vmatpush1.bf16.msra.mxu0 0
      %1591 = vmatprep.subr.bf16.mxu0 0
      %1592 = vmatpush1.bf16.msra.mxu0 0
      %1593 = vmatprep.subr.bf16.mxu0 0
      %1594 = vmatpush1.bf16.msra.mxu0 0
      %1595 = vmatprep.subr.bf16.mxu0 0
      %1596 = vmatpush1.bf16.msra.mxu0 0
      %1597 = vmatprep.subr.bf16.mxu0 0
      %1598 = vmatpush1.bf16.msra.mxu0 0
      %1599 = vmatprep.subr.bf16.mxu0 0
      %1600 = vmatpush1.bf16.msra.mxu0 0
      %1601 = vmatprep.subr.bf16.mxu0 %v1581
      %1602 = vmatpush1.bf16.msra.mxu0 %v1580
      %1603 = vmatprep.subr.bf16.mxu0 %v1579
      %1604 = vmatpush1.bf16.msra.mxu0 %v1578
      %1605 = vmatprep.subr.bf16.mxu0 0
      %1606 = vmatpush2.bf16.msra.mxu0 0
      %1607 = vmatprep.subr.bf16.mxu0 0
      %1608 = vmatpush2.bf16.msra.mxu0 0
      %1609 = vmatprep.subr.bf16.mxu0 0
      %1610 = vmatpush2.bf16.msra.mxu0 0
      %1611 = vmatprep.subr.bf16.mxu0 0
      %1612 = vmatpush2.bf16.msra.mxu0 0
      %1613 = vmatprep.subr.bf16.mxu0 0
      %1614 = vmatpush2.bf16.msra.mxu0 0
      %1615 = vmatprep.subr.bf16.mxu0 0
      %1616 = vmatpush2.bf16.msra.mxu0 0
      %1617 = vmatprep.subr.bf16.mxu0 0
      %1618 = vmatpush2.bf16.msra.mxu0 0
      %1619 = vmatprep.subr.bf16.mxu0 0
      %1620 = vmatpush2.bf16.msra.mxu0 0
      %1621 = vmatprep.mubr.bf16.mxu0 0
      %1622 = vmatmul.mubr.bf16.gmra.mxu0 %v1587
      %v1623 = vpop.f32.mrf.mxu0
      %v1624 = vadd.f32 0.0, %v1623
      %v1625 = vpop.f32.mrf.mxu0
      %v1626 = vadd.f32 0.0, %v1625
      %v1627 = vpop.f32.mrf.mxu0
      %v1628 = vadd.f32 0.0, %v1627
      %v1629 = vpop.f32.mrf.mxu0
      %v1630 = vadd.f32 0.0, %v1629
      %1631 = vdwg.mxu0
      %v1632 = vld [vmem:[#allocation2 + $0x30] sm:$0xff]
      %v1633 = vld [vmem:[#allocation2 + $0x38] sm:$0xff]
      %v1634 = vld [vmem:[#allocation2 + $0x70] sm:$0xff]
      %v1635 = vld [vmem:[#allocation2 + $0x78] sm:$0xff]
      %v1636 = vadd.f32 %v1632, %v1624
      %v1637 = vadd.f32 %v1633, %v1626
      %v1638 = vadd.f32 %v1634, %v1628
      %v1639 = vadd.f32 %v1635, %v1630
      %1640 = vst [vmem:[#allocation2 + $0x30] sm:$0xff] %v1636
      %1641 = vst [vmem:[#allocation2 + $0x38] sm:$0xff] %v1637
      %1642 = vst [vmem:[#allocation2 + $0x70] sm:$0xff] %v1638
      %1643 = vst [vmem:[#allocation2 + $0x78] sm:$0xff] %v1639
      %v1644 = vld [vmem:[%s10] sm:$0xf]
      %v1645 = vld [vmem:[%s10 + $0x4] sm:$0xf]
      %v1646 = vld [vmem:[%s10 + $0x8] sm:$0xf]
      %v1647 = vld [vmem:[%s10 + $0xc] sm:$0xf]
      %v1648 = vrot.slane %v1409, 1
      %v1649 = vrot.slane %v1553, 1
      %v1650 = vsel %vm907, %v1648, %v1649
      %v1655 = vunpack.c.l.b16 %v1644
      %v1656 = vunpack.c.l.b16 %v1645
      %v1657 = vunpack.c.l.b16 %v1646
      %v1658 = vunpack.c.l.b16 %v1647
      %v1659 = vpack.c.b16 %v1656, %v1655
      %v1660 = vpack.c.b16 %v1658, %v1657
      %v1664 = vsel %vm645, %v1650, 0
      %1666 = vmatprep.subr.bf16.mxu0 0
      %1667 = vmatpush1.bf16.msra.mxu0 0
      %1668 = vmatprep.subr.bf16.mxu0 0
      %1669 = vmatpush1.bf16.msra.mxu0 0
      %1670 = vmatprep.subr.bf16.mxu0 0
      %1671 = vmatpush1.bf16.msra.mxu0 0
      %1672 = vmatprep.subr.bf16.mxu0 0
      %1673 = vmatpush1.bf16.msra.mxu0 0
      %1674 = vmatprep.subr.bf16.mxu0 0
      %1675 = vmatpush1.bf16.msra.mxu0 0
      %1676 = vmatprep.subr.bf16.mxu0 0
      %1677 = vmatpush1.bf16.msra.mxu0 0
      %1678 = vmatprep.subr.bf16.mxu0 0
      %1679 = vmatpush1.bf16.msra.mxu0 %v1660
      %1680 = vmatprep.subr.bf16.mxu0 0
      %1681 = vmatpush1.bf16.msra.mxu0 %v1659
      %1682 = vmatprep.subr.bf16.mxu0 0
      %1683 = vmatpush2.bf16.msra.mxu0 0
      %1684 = vmatprep.subr.bf16.mxu0 0
      %1685 = vmatpush2.bf16.msra.mxu0 0
      %1686 = vmatprep.subr.bf16.mxu0 0
      %1687 = vmatpush2.bf16.msra.mxu0 0
      %1688 = vmatprep.subr.bf16.mxu0 0
      %1689 = vmatpush2.bf16.msra.mxu0 0
      %1690 = vmatprep.subr.bf16.mxu0 0
      %1691 = vmatpush2.bf16.msra.mxu0 0
      %1692 = vmatprep.subr.bf16.mxu0 0
      %1693 = vmatpush2.bf16.msra.mxu0 0
      %1694 = vmatprep.subr.bf16.mxu0 0
      %1695 = vmatpush2.bf16.msra.mxu0 0
      %1696 = vmatprep.subr.bf16.mxu0 0
      %1697 = vmatpush2.bf16.msra.mxu0 0
      %1698 = vmatprep.mubr.bf16.mxu0 0
      %1699 = vmatmul.mubr.bf16.gmra.mxu0 %v1664
      %v1700 = vpop.f32.mrf.mxu0
      %v1701 = vadd.f32 0.0, %v1700
      %v1702 = vpop.f32.mrf.mxu0
      %v1703 = vpop.f32.mrf.mxu0
      %v1704 = vadd.f32 0.0, %v1703
      %v1705 = vpop.f32.mrf.mxu0
      %1706 = vdwg.mxu0
      %v1707 = vld [vmem:[#allocation2 + $0x20] sm:$0xff]
      %v1708 = vld [vmem:[#allocation2 + $0x60] sm:$0xff]
      %v1709 = vadd.f32 %v1707, %v1701
      %v1710 = vadd.f32 %v1708, %v1704
      %1711 = vst [vmem:[#allocation2 + $0x20] sm:$0xff] %v1709
      %1712 = vst [vmem:[#allocation2 + $0x60] sm:$0xff] %v1710
      %v1713 = vld [vmem:[%s11] sm:$0xf]
      %v1714 = vld [vmem:[%s11 + $0x4] sm:$0xf]
      %v1715 = vld [vmem:[%s11 + $0x8] sm:$0xf]
      %v1716 = vld [vmem:[%s11 + $0xc] sm:$0xf]
      %v1717 = vrot.slane %v1409, 2
      %v1718 = vrot.slane %v1553, 2
      %v1719 = vsel %vm1080, %v1717, %v1718
      %v1724 = vunpack.c.l.b16 %v1713
      %v1725 = vunpack.c.l.b16 %v1714
      %v1726 = vunpack.c.l.b16 %v1715
      %v1727 = vunpack.c.l.b16 %v1716
      %v1728 = vpack.c.b16 %v1725, %v1724
      %v1729 = vpack.c.b16 %v1727, %v1726
      %v1733 = vsel %vm645, %v1719, 0
      %1735 = vmatprep.subr.bf16.mxu0 0
      %1736 = vmatpush1.bf16.msra.mxu0 0
      %1737 = vmatprep.subr.bf16.mxu0 0
      %1738 = vmatpush1.bf16.msra.mxu0 0
      %1739 = vmatprep.subr.bf16.mxu0 0
      %1740 = vmatpush1.bf16.msra.mxu0 0
      %1741 = vmatprep.subr.bf16.mxu0 0
      %1742 = vmatpush1.bf16.msra.mxu0 0
      %1743 = vmatprep.subr.bf16.mxu0 0
      %1744 = vmatpush1.bf16.msra.mxu0 0
      %1745 = vmatprep.subr.bf16.mxu0 0
      %1746 = vmatpush1.bf16.msra.mxu0 0
      %1747 = vmatprep.subr.bf16.mxu0 0
      %1748 = vmatpush1.bf16.msra.mxu0 %v1729
      %1749 = vmatprep.subr.bf16.mxu0 0
      %1750 = vmatpush1.bf16.msra.mxu0 %v1728
      %1751 = vmatprep.subr.bf16.mxu0 0
      %1752 = vmatpush2.bf16.msra.mxu0 0
      %1753 = vmatprep.subr.bf16.mxu0 0
      %1754 = vmatpush2.bf16.msra.mxu0 0
      %1755 = vmatprep.subr.bf16.mxu0 0
      %1756 = vmatpush2.bf16.msra.mxu0 0
      %1757 = vmatprep.subr.bf16.mxu0 0
      %1758 = vmatpush2.bf16.msra.mxu0 0
      %1759 = vmatprep.subr.bf16.mxu0 0
      %1760 = vmatpush2.bf16.msra.mxu0 0
      %1761 = vmatprep.subr.bf16.mxu0 0
      %1762 = vmatpush2.bf16.msra.mxu0 0
      %1763 = vmatprep.subr.bf16.mxu0 0
      %1764 = vmatpush2.bf16.msra.mxu0 0
      %1765 = vmatprep.subr.bf16.mxu0 0
      %1766 = vmatpush2.bf16.msra.mxu0 0
      %1767 = vmatprep.mubr.bf16.mxu0 0
      %1768 = vmatmul.mubr.bf16.gmra.mxu0 %v1733
      %v1769 = vpop.f32.mrf.mxu0
      %v1770 = vadd.f32 0.0, %v1769
      %v1771 = vpop.f32.mrf.mxu0
      %v1772 = vpop.f32.mrf.mxu0
      %v1773 = vadd.f32 0.0, %v1772
      %v1774 = vpop.f32.mrf.mxu0
      %1775 = vdwg.mxu0
      %v1776 = vld [vmem:[#allocation2 + $0x38] sm:$0xff]
      %v1777 = vld [vmem:[#allocation2 + $0x78] sm:$0xff]
      %v1778 = vadd.f32 %v1776, %v1770
      %v1779 = vadd.f32 %v1777, %v1773
      %1780 = vst [vmem:[#allocation2 + $0x38] sm:$0xff] %v1778
      %1781 = vst [vmem:[#allocation2 + $0x78] sm:$0xff] %v1779
      %v1782 = vld [vmem:[#allocation2] sm:$0xff]
      %v1783 = vld [vmem:[#allocation2 + $0x8] sm:$0xff]
      %v1784 = vld [vmem:[#allocation2 + $0x10] sm:$0xff]
      %v1785 = vld [vmem:[#allocation2 + $0x18] sm:$0xff]
      %v1786 = vld [vmem:[#allocation2 + $0x20] sm:$0xff]
      %v1787 = vld [vmem:[#allocation2 + $0x28] sm:$0xff]
      %v1788 = vld [vmem:[#allocation2 + $0x30] sm:$0xff]
      %v1789 = vld [vmem:[#allocation2 + $0x38] sm:$0xff]
      %v1790 = vld [vmem:[#allocation2 + $0x40] sm:$0xff]
      %v1791 = vld [vmem:[#allocation2 + $0x48] sm:$0xff]
      %v1792 = vld [vmem:[#allocation2 + $0x50] sm:$0xff]
      %v1793 = vld [vmem:[#allocation2 + $0x58] sm:$0xff]
      %v1794 = vld [vmem:[#allocation2 + $0x60] sm:$0xff]
      %v1795 = vld [vmem:[#allocation2 + $0x68] sm:$0xff]
      %v1796 = vld [vmem:[#allocation2 + $0x70] sm:$0xff]
      %v1797 = vld [vmem:[#allocation2 + $0x78] sm:$0xff]
      %v1798 = vld [vmem:[%s12] sm:$0xff]
      %v1800 = vlaneseq
      %v1801 = vshrl.u32 %v1800, 7
      %v1802 = vsub.s32 0, %v1801
      %v1803 = vrot.slane %v1798, %v1802
      %v1804 = vlaneseq
      %v1805 = vshrl.u32 %v1804, 7
      %v1806 = vsub.s32 1, %v1805
      %v1807 = vrot.slane %v1798, %v1806
      %v1808 = vlaneseq
      %v1809 = vshrl.u32 %v1808, 7
      %v1810 = vsub.s32 2, %v1809
      %v1811 = vrot.slane %v1798, %v1810
      %v1812 = vlaneseq
      %v1813 = vshrl.u32 %v1812, 7
      %v1814 = vsub.s32 3, %v1813
      %v1815 = vrot.slane %v1798, %v1814
      %v1816 = vlaneseq
      %v1817 = vshrl.u32 %v1816, 7
      %v1818 = vsub.s32 4, %v1817
      %v1819 = vrot.slane %v1798, %v1818
      %v1820 = vlaneseq
      %v1821 = vshrl.u32 %v1820, 7
      %v1822 = vsub.s32 5, %v1821
      %v1823 = vrot.slane %v1798, %v1822
      %v1824 = vlaneseq
      %v1825 = vshrl.u32 %v1824, 7
      %v1826 = vsub.s32 6, %v1825
      %v1827 = vrot.slane %v1798, %v1826
      %v1828 = vlaneseq
      %v1829 = vshrl.u32 %v1828, 7
      %v1830 = vsub.s32 7, %v1829
      %v1831 = vrot.slane %v1798, %v1830
      %v1840 = vadd.f32 %v1782, %v1803
      %v1841 = vadd.f32 %v1783, %v1807
      %v1842 = vadd.f32 %v1784, %v1811
      %v1843 = vadd.f32 %v1785, %v1815
      %v1844 = vadd.f32 %v1786, %v1819
      %v1845 = vadd.f32 %v1787, %v1823
      %v1846 = vadd.f32 %v1788, %v1827
      %v1847 = vadd.f32 %v1789, %v1831
      %v1848 = vadd.f32 %v1790, %v1803
      %v1849 = vadd.f32 %v1791, %v1807
      %v1850 = vadd.f32 %v1792, %v1811
      %v1851 = vadd.f32 %v1793, %v1815
      %v1852 = vadd.f32 %v1794, %v1819
      %v1853 = vadd.f32 %v1795, %v1823
      %v1854 = vadd.f32 %v1796, %v1827
      %v1855 = vadd.f32 %v1797, %v1831
      %v1856 = vmax.f32 %v1840, 0.0
      %v1857 = vmax.f32 %v1841, 0.0
      %v1858 = vmax.f32 %v1842, 0.0
      %v1859 = vmax.f32 %v1843, 0.0
      %v1860 = vmax.f32 %v1844, 0.0
      %v1861 = vmax.f32 %v1845, 0.0
      %v1862 = vmax.f32 %v1846, 0.0
      %v1863 = vmax.f32 %v1847, 0.0
      %v1864 = vmax.f32 %v1848, 0.0
      %v1865 = vmax.f32 %v1849, 0.0
      %v1866 = vmax.f32 %v1850, 0.0
      %v1867 = vmax.f32 %v1851, 0.0
      %v1868 = vmax.f32 %v1852, 0.0
      %v1869 = vmax.f32 %v1853, 0.0
      %v1870 = vmax.f32 %v1854, 0.0
      %v1871 = vmax.f32 %v1855, 0.0
      %v1872 = vpack.c.bf16 %v1864, %v1856
      %v1873 = vpack.c.bf16 %v1865, %v1857
      %v1874 = vpack.c.bf16 %v1866, %v1858
      %v1875 = vpack.c.bf16 %v1867, %v1859
      %v1876 = vpack.c.bf16 %v1868, %v1860
      %v1877 = vpack.c.bf16 %v1869, %v1861
      %v1878 = vpack.c.bf16 %v1870, %v1862
      %v1879 = vpack.c.bf16 %v1871, %v1863
      %v1880 = vld [vmem:[%s13] sm:$0xf]
      %v1881 = vld [vmem:[%s13 + $0x4] sm:$0xf]
      %v1882 = vld [vmem:[%s13 + $0x8] sm:$0xf]
      %v1883 = vld [vmem:[%s13 + $0xc] sm:$0xf]
      %v1884 = vld [vmem:[%s13 + $0x10] sm:$0xf]
      %v1885 = vld [vmem:[%s13 + $0x14] sm:$0xf]
      %v1886 = vld [vmem:[%s13 + $0x18] sm:$0xf]
      %v1887 = vld [vmem:[%s13 + $0x1c] sm:$0xf]
      %v1888 = vld [vmem:[%s13 + $0x20] sm:$0xf]
      %v1889 = vld [vmem:[%s13 + $0x24] sm:$0xf]
      %v1890 = vld [vmem:[%s13 + $0x28] sm:$0xf]
      %v1891 = vld [vmem:[%s13 + $0x2c] sm:$0xf]
      %v1892 = vld [vmem:[%s13 + $0x30] sm:$0xf]
      %v1893 = vld [vmem:[%s13 + $0x34] sm:$0xf]
      %v1894 = vld [vmem:[%s13 + $0x38] sm:$0xf]
      %v1895 = vld [vmem:[%s13 + $0x3c] sm:$0xf]
      %v1896 = vld [vmem:[%s13 + $0x40] sm:$0xf]
      %v1897 = vld [vmem:[%s13 + $0x44] sm:$0xf]
      %v1898 = vld [vmem:[%s13 + $0x48] sm:$0xf]
      %v1899 = vld [vmem:[%s13 + $0x4c] sm:$0xf]
      %v1900 = vld [vmem:[%s13 + $0x50] sm:$0xf]
      %v1901 = vld [vmem:[%s13 + $0x54] sm:$0xf]
      %v1902 = vld [vmem:[%s13 + $0x58] sm:$0xf]
      %v1903 = vld [vmem:[%s13 + $0x5c] sm:$0xf]
      %v1904 = vld [vmem:[%s13 + $0x60] sm:$0xf]
      %v1905 = vld [vmem:[%s13 + $0x64] sm:$0xf]
      %v1906 = vld [vmem:[%s13 + $0x68] sm:$0xf]
      %v1907 = vld [vmem:[%s13 + $0x6c] sm:$0xf]
      %v1908 = vld [vmem:[%s13 + $0x70] sm:$0xf]
      %v1909 = vld [vmem:[%s13 + $0x74] sm:$0xf]
      %v1910 = vld [vmem:[%s13 + $0x78] sm:$0xf]
      %v1911 = vld [vmem:[%s13 + $0x7c] sm:$0xf]
      %v1912 = vld [vmem:[%s13 + $0x80] sm:$0xf]
      %v1913 = vld [vmem:[%s13 + $0x84] sm:$0xf]
      %v1914 = vld [vmem:[%s13 + $0x88] sm:$0xf]
      %v1915 = vld [vmem:[%s13 + $0x8c] sm:$0xf]
      %v1916 = vld [vmem:[%s13 + $0x90] sm:$0xf]
      %v1917 = vld [vmem:[%s13 + $0x94] sm:$0xf]
      %v1918 = vld [vmem:[%s13 + $0x98] sm:$0xf]
      %v1919 = vld [vmem:[%s13 + $0x9c] sm:$0xf]
      %v1920 = vld [vmem:[%s13 + $0xa0] sm:$0xf]
      %v1921 = vld [vmem:[%s13 + $0xa4] sm:$0xf]
      %v1922 = vld [vmem:[%s13 + $0xa8] sm:$0xf]
      %v1923 = vld [vmem:[%s13 + $0xac] sm:$0xf]
      %v1924 = vld [vmem:[%s13 + $0xb0] sm:$0xf]
      %v1925 = vld [vmem:[%s13 + $0xb4] sm:$0xf]
      %v1926 = vld [vmem:[%s13 + $0xb8] sm:$0xf]
      %v1927 = vld [vmem:[%s13 + $0xbc] sm:$0xf]
      %v1928 = vld [vmem:[%s13 + $0xc0] sm:$0xf]
      %v1929 = vld [vmem:[%s13 + $0xc4] sm:$0xf]
      %v1930 = vld [vmem:[%s13 + $0xc8] sm:$0xf]
      %v1931 = vld [vmem:[%s13 + $0xcc] sm:$0xf]
      %v1932 = vld [vmem:[%s13 + $0xd0] sm:$0xf]
      %v1933 = vld [vmem:[%s13 + $0xd4] sm:$0xf]
      %v1934 = vld [vmem:[%s13 + $0xd8] sm:$0xf]
      %v1935 = vld [vmem:[%s13 + $0xdc] sm:$0xf]
      %v1936 = vld [vmem:[%s13 + $0xe0] sm:$0xf]
      %v1937 = vld [vmem:[%s13 + $0xe4] sm:$0xf]
      %v1938 = vld [vmem:[%s13 + $0xe8] sm:$0xf]
      %v1939 = vld [vmem:[%s13 + $0xec] sm:$0xf]
      %v1940 = vld [vmem:[%s13 + $0xf0] sm:$0xf]
      %v1941 = vld [vmem:[%s13 + $0xf4] sm:$0xf]
      %v1942 = vld [vmem:[%s13 + $0xf8] sm:$0xf]
      %v1943 = vld [vmem:[%s13 + $0xfc] sm:$0xf]
      %v1944 = vld [vmem:[%s13 + $0x100] sm:$0xf]
      %v1945 = vld [vmem:[%s13 + $0x104] sm:$0xf]
      %v1946 = vld [vmem:[%s13 + $0x108] sm:$0xf]
      %v1947 = vld [vmem:[%s13 + $0x10c] sm:$0xf]
      %v1948 = vld [vmem:[%s13 + $0x110] sm:$0xf]
      %v1949 = vld [vmem:[%s13 + $0x114] sm:$0xf]
      %v1950 = vld [vmem:[%s13 + $0x118] sm:$0xf]
      %v1951 = vld [vmem:[%s13 + $0x11c] sm:$0xf]
      %v1952 = vld [vmem:[%s13 + $0x120] sm:$0xf]
      %v1953 = vld [vmem:[%s13 + $0x124] sm:$0xf]
      %v1954 = vld [vmem:[%s13 + $0x128] sm:$0xf]
      %v1955 = vld [vmem:[%s13 + $0x12c] sm:$0xf]
      %v1956 = vld [vmem:[%s13 + $0x130] sm:$0xf]
      %v1957 = vld [vmem:[%s13 + $0x134] sm:$0xf]
      %v1958 = vld [vmem:[%s13 + $0x138] sm:$0xf]
      %v1959 = vld [vmem:[%s13 + $0x13c] sm:$0xf]
      %v1960 = vld [vmem:[%s13 + $0x140] sm:$0xf]
      %v1961 = vld [vmem:[%s13 + $0x144] sm:$0xf]
      %v1962 = vld [vmem:[%s13 + $0x148] sm:$0xf]
      %v1963 = vld [vmem:[%s13 + $0x14c] sm:$0xf]
      %v1964 = vld [vmem:[%s13 + $0x150] sm:$0xf]
      %v1965 = vld [vmem:[%s13 + $0x154] sm:$0xf]
      %v1966 = vld [vmem:[%s13 + $0x158] sm:$0xf]
      %v1967 = vld [vmem:[%s13 + $0x15c] sm:$0xf]
      %v1968 = vld [vmem:[%s13 + $0x160] sm:$0xf]
      %v1969 = vld [vmem:[%s13 + $0x164] sm:$0xf]
      %v1970 = vld [vmem:[%s13 + $0x168] sm:$0xf]
      %v1971 = vld [vmem:[%s13 + $0x16c] sm:$0xf]
      %v1972 = vld [vmem:[%s13 + $0x170] sm:$0xf]
      %v1973 = vld [vmem:[%s13 + $0x174] sm:$0xf]
      %v1974 = vld [vmem:[%s13 + $0x178] sm:$0xf]
      %v1975 = vld [vmem:[%s13 + $0x17c] sm:$0xf]
      %v1976 = vld [vmem:[%s13 + $0x180] sm:$0xf]
      %v1977 = vld [vmem:[%s13 + $0x184] sm:$0xf]
      %v1978 = vld [vmem:[%s13 + $0x188] sm:$0xf]
      %v1979 = vld [vmem:[%s13 + $0x18c] sm:$0xf]
      %v1980 = vld [vmem:[%s13 + $0x190] sm:$0xf]
      %v1981 = vld [vmem:[%s13 + $0x194] sm:$0xf]
      %v1982 = vld [vmem:[%s13 + $0x198] sm:$0xf]
      %v1983 = vld [vmem:[%s13 + $0x19c] sm:$0xf]
      %v1984 = vld [vmem:[%s13 + $0x1a0] sm:$0xf]
      %v1985 = vld [vmem:[%s13 + $0x1a4] sm:$0xf]
      %v1986 = vld [vmem:[%s13 + $0x1a8] sm:$0xf]
      %v1987 = vld [vmem:[%s13 + $0x1ac] sm:$0xf]
      %v1988 = vld [vmem:[%s13 + $0x1b0] sm:$0xf]
      %v1989 = vld [vmem:[%s13 + $0x1b4] sm:$0xf]
      %v1990 = vld [vmem:[%s13 + $0x1b8] sm:$0xf]
      %v1991 = vld [vmem:[%s13 + $0x1bc] sm:$0xf]
      %v1992 = vld [vmem:[%s13 + $0x1c0] sm:$0xf]
      %v1993 = vld [vmem:[%s13 + $0x1c4] sm:$0xf]
      %v1994 = vld [vmem:[%s13 + $0x1c8] sm:$0xf]
      %v1995 = vld [vmem:[%s13 + $0x1cc] sm:$0xf]
      %v1996 = vld [vmem:[%s13 + $0x1d0] sm:$0xf]
      %v1997 = vld [vmem:[%s13 + $0x1d4] sm:$0xf]
      %v1998 = vld [vmem:[%s13 + $0x1d8] sm:$0xf]
      %v1999 = vld [vmem:[%s13 + $0x1dc] sm:$0xf]
      %v2000 = vld [vmem:[%s13 + $0x1e0] sm:$0xf]
      %v2001 = vld [vmem:[%s13 + $0x1e4] sm:$0xf]
      %v2002 = vld [vmem:[%s13 + $0x1e8] sm:$0xf]
      %v2003 = vld [vmem:[%s13 + $0x1ec] sm:$0xf]
      %v2004 = vld [vmem:[%s13 + $0x1f0] sm:$0xf]
      %v2005 = vld [vmem:[%s13 + $0x1f4] sm:$0xf]
      %v2006 = vld [vmem:[%s13 + $0x1f8] sm:$0xf]
      %v2007 = vld [vmem:[%s13 + $0x1fc] sm:$0xf]
      %v2008 = vld [vmem:[%s14] sm:$0x1]
      %v2010 = vlaneseq
      %v2011 = vshrl.u32 %v2010, 7
      %v2012 = vsub.s32 0, %v2011
      %v2013 = vrot.slane %v2008, %v2012
      %v2143 = vunpack.c.l.b16 %v1880
      %v2144 = vunpack.c.l.b16 %v1881
      %v2145 = vunpack.c.l.b16 %v1882
      %v2146 = vunpack.c.l.b16 %v1883
      %v2147 = vunpack.c.l.b16 %v1884
      %v2148 = vunpack.c.l.b16 %v1885
      %v2149 = vunpack.c.l.b16 %v1886
      %v2150 = vunpack.c.l.b16 %v1887
      %v2151 = vunpack.c.l.b16 %v1888
      %v2152 = vunpack.c.l.b16 %v1889
      %v2153 = vunpack.c.l.b16 %v1890
      %v2154 = vunpack.c.l.b16 %v1891
      %v2155 = vunpack.c.l.b16 %v1892
      %v2156 = vunpack.c.l.b16 %v1893
      %v2157 = vunpack.c.l.b16 %v1894
      %v2158 = vunpack.c.l.b16 %v1895
      %v2159 = vunpack.c.l.b16 %v1896
      %v2160 = vunpack.c.l.b16 %v1897
      %v2161 = vunpack.c.l.b16 %v1898
      %v2162 = vunpack.c.l.b16 %v1899
      %v2163 = vunpack.c.l.b16 %v1900
      %v2164 = vunpack.c.l.b16 %v1901
      %v2165 = vunpack.c.l.b16 %v1902
      %v2166 = vunpack.c.l.b16 %v1903
      %v2167 = vunpack.c.l.b16 %v1904
      %v2168 = vunpack.c.l.b16 %v1905
      %v2169 = vunpack.c.l.b16 %v1906
      %v2170 = vunpack.c.l.b16 %v1907
      %v2171 = vunpack.c.l.b16 %v1908
      %v2172 = vunpack.c.l.b16 %v1909
      %v2173 = vunpack.c.l.b16 %v1910
      %v2174 = vunpack.c.l.b16 %v1911
      %v2175 = vunpack.c.l.b16 %v1912
      %v2176 = vunpack.c.l.b16 %v1913
      %v2177 = vunpack.c.l.b16 %v1914
      %v2178 = vunpack.c.l.b16 %v1915
      %v2179 = vunpack.c.l.b16 %v1916
      %v2180 = vunpack.c.l.b16 %v1917
      %v2181 = vunpack.c.l.b16 %v1918
      %v2182 = vunpack.c.l.b16 %v1919
      %v2183 = vunpack.c.l.b16 %v1920
      %v2184 = vunpack.c.l.b16 %v1921
      %v2185 = vunpack.c.l.b16 %v1922
      %v2186 = vunpack.c.l.b16 %v1923
      %v2187 = vunpack.c.l.b16 %v1924
      %v2188 = vunpack.c.l.b16 %v1925
      %v2189 = vunpack.c.l.b16 %v1926
      %v2190 = vunpack.c.l.b16 %v1927
      %v2191 = vunpack.c.l.b16 %v1928
      %v2192 = vunpack.c.l.b16 %v1929
      %v2193 = vunpack.c.l.b16 %v1930
      %v2194 = vunpack.c.l.b16 %v1931
      %v2195 = vunpack.c.l.b16 %v1932
      %v2196 = vunpack.c.l.b16 %v1933
      %v2197 = vunpack.c.l.b16 %v1934
      %v2198 = vunpack.c.l.b16 %v1935
      %v2199 = vunpack.c.l.b16 %v1936
      %v2200 = vunpack.c.l.b16 %v1937
      %v2201 = vunpack.c.l.b16 %v1938
      %v2202 = vunpack.c.l.b16 %v1939
      %v2203 = vunpack.c.l.b16 %v1940
      %v2204 = vunpack.c.l.b16 %v1941
      %v2205 = vunpack.c.l.b16 %v1942
      %v2206 = vunpack.c.l.b16 %v1943
      %v2207 = vunpack.c.l.b16 %v1944
      %v2208 = vunpack.c.l.b16 %v1945
      %v2209 = vunpack.c.l.b16 %v1946
      %v2210 = vunpack.c.l.b16 %v1947
      %v2211 = vunpack.c.l.b16 %v1948
      %v2212 = vunpack.c.l.b16 %v1949
      %v2213 = vunpack.c.l.b16 %v1950
      %v2214 = vunpack.c.l.b16 %v1951
      %v2215 = vunpack.c.l.b16 %v1952
      %v2216 = vunpack.c.l.b16 %v1953
      %v2217 = vunpack.c.l.b16 %v1954
      %v2218 = vunpack.c.l.b16 %v1955
      %v2219 = vunpack.c.l.b16 %v1956
      %v2220 = vunpack.c.l.b16 %v1957
      %v2221 = vunpack.c.l.b16 %v1958
      %v2222 = vunpack.c.l.b16 %v1959
      %v2223 = vunpack.c.l.b16 %v1960
      %v2224 = vunpack.c.l.b16 %v1961
      %v2225 = vunpack.c.l.b16 %v1962
      %v2226 = vunpack.c.l.b16 %v1963
      %v2227 = vunpack.c.l.b16 %v1964
      %v2228 = vunpack.c.l.b16 %v1965
      %v2229 = vunpack.c.l.b16 %v1966
      %v2230 = vunpack.c.l.b16 %v1967
      %v2231 = vunpack.c.l.b16 %v1968
      %v2232 = vunpack.c.l.b16 %v1969
      %v2233 = vunpack.c.l.b16 %v1970
      %v2234 = vunpack.c.l.b16 %v1971
      %v2235 = vunpack.c.l.b16 %v1972
      %v2236 = vunpack.c.l.b16 %v1973
      %v2237 = vunpack.c.l.b16 %v1974
      %v2238 = vunpack.c.l.b16 %v1975
      %v2239 = vunpack.c.l.b16 %v1976
      %v2240 = vunpack.c.l.b16 %v1977
      %v2241 = vunpack.c.l.b16 %v1978
      %v2242 = vunpack.c.l.b16 %v1979
      %v2243 = vunpack.c.l.b16 %v1980
      %v2244 = vunpack.c.l.b16 %v1981
      %v2245 = vunpack.c.l.b16 %v1982
      %v2246 = vunpack.c.l.b16 %v1983
      %v2247 = vunpack.c.l.b16 %v1984
      %v2248 = vunpack.c.l.b16 %v1985
      %v2249 = vunpack.c.l.b16 %v1986
      %v2250 = vunpack.c.l.b16 %v1987
      %v2251 = vunpack.c.l.b16 %v1988
      %v2252 = vunpack.c.l.b16 %v1989
      %v2253 = vunpack.c.l.b16 %v1990
      %v2254 = vunpack.c.l.b16 %v1991
      %v2255 = vunpack.c.l.b16 %v1992
      %v2256 = vunpack.c.l.b16 %v1993
      %v2257 = vunpack.c.l.b16 %v1994
      %v2258 = vunpack.c.l.b16 %v1995
      %v2259 = vunpack.c.l.b16 %v1996
      %v2260 = vunpack.c.l.b16 %v1997
      %v2261 = vunpack.c.l.b16 %v1998
      %v2262 = vunpack.c.l.b16 %v1999
      %v2263 = vunpack.c.l.b16 %v2000
      %v2264 = vunpack.c.l.b16 %v2001
      %v2265 = vunpack.c.l.b16 %v2002
      %v2266 = vunpack.c.l.b16 %v2003
      %v2267 = vunpack.c.l.b16 %v2004
      %v2268 = vunpack.c.l.b16 %v2005
      %v2269 = vunpack.c.l.b16 %v2006
      %v2270 = vunpack.c.l.b16 %v2007
      %v2271 = vpack.c.b16 %v2144, %v2143
      %v2272 = vpack.c.b16 %v2146, %v2145
      %v2273 = vpack.c.b16 %v2148, %v2147
      %v2274 = vpack.c.b16 %v2150, %v2149
      %v2275 = vpack.c.b16 %v2152, %v2151
      %v2276 = vpack.c.b16 %v2154, %v2153
      %v2277 = vpack.c.b16 %v2156, %v2155
      %v2278 = vpack.c.b16 %v2158, %v2157
      %v2279 = vpack.c.b16 %v2160, %v2159
      %v2280 = vpack.c.b16 %v2162, %v2161
      %v2281 = vpack.c.b16 %v2164, %v2163
      %v2282 = vpack.c.b16 %v2166, %v2165
      %v2283 = vpack.c.b16 %v2168, %v2167
      %v2284 = vpack.c.b16 %v2170, %v2169
      %v2285 = vpack.c.b16 %v2172, %v2171
      %v2286 = vpack.c.b16 %v2174, %v2173
      %v2287 = vpack.c.b16 %v2176, %v2175
      %v2288 = vpack.c.b16 %v2178, %v2177
      %v2289 = vpack.c.b16 %v2180, %v2179
      %v2290 = vpack.c.b16 %v2182, %v2181
      %v2291 = vpack.c.b16 %v2184, %v2183
      %v2292 = vpack.c.b16 %v2186, %v2185
      %v2293 = vpack.c.b16 %v2188, %v2187
      %v2294 = vpack.c.b16 %v2190, %v2189
      %v2295 = vpack.c.b16 %v2192, %v2191
      %v2296 = vpack.c.b16 %v2194, %v2193
      %v2297 = vpack.c.b16 %v2196, %v2195
      %v2298 = vpack.c.b16 %v2198, %v2197
      %v2299 = vpack.c.b16 %v2200, %v2199
      %v2300 = vpack.c.b16 %v2202, %v2201
      %v2301 = vpack.c.b16 %v2204, %v2203
      %v2302 = vpack.c.b16 %v2206, %v2205
      %v2303 = vpack.c.b16 %v2208, %v2207
      %v2304 = vpack.c.b16 %v2210, %v2209
      %v2305 = vpack.c.b16 %v2212, %v2211
      %v2306 = vpack.c.b16 %v2214, %v2213
      %v2307 = vpack.c.b16 %v2216, %v2215
      %v2308 = vpack.c.b16 %v2218, %v2217
      %v2309 = vpack.c.b16 %v2220, %v2219
      %v2310 = vpack.c.b16 %v2222, %v2221
      %v2311 = vpack.c.b16 %v2224, %v2223
      %v2312 = vpack.c.b16 %v2226, %v2225
      %v2313 = vpack.c.b16 %v2228, %v2227
      %v2314 = vpack.c.b16 %v2230, %v2229
      %v2315 = vpack.c.b16 %v2232, %v2231
      %v2316 = vpack.c.b16 %v2234, %v2233
      %v2317 = vpack.c.b16 %v2236, %v2235
      %v2318 = vpack.c.b16 %v2238, %v2237
      %v2319 = vpack.c.b16 %v2240, %v2239
      %v2320 = vpack.c.b16 %v2242, %v2241
      %v2321 = vpack.c.b16 %v2244, %v2243
      %v2322 = vpack.c.b16 %v2246, %v2245
      %v2323 = vpack.c.b16 %v2248, %v2247
      %v2324 = vpack.c.b16 %v2250, %v2249
      %v2325 = vpack.c.b16 %v2252, %v2251
      %v2326 = vpack.c.b16 %v2254, %v2253
      %v2327 = vpack.c.b16 %v2256, %v2255
      %v2328 = vpack.c.b16 %v2258, %v2257
      %v2329 = vpack.c.b16 %v2260, %v2259
      %v2330 = vpack.c.b16 %v2262, %v2261
      %v2331 = vpack.c.b16 %v2264, %v2263
      %v2332 = vpack.c.b16 %v2266, %v2265
      %v2333 = vpack.c.b16 %v2268, %v2267
      %v2334 = vpack.c.b16 %v2270, %v2269
      %2399 = vmatprep.subr.bf16.mxu0 0
      %2400 = vmatpush1.bf16.msra.mxu0 %v2278
      %2401 = vmatprep.subr.bf16.mxu0 0
      %2402 = vmatpush1.bf16.msra.mxu0 %v2277
      %2403 = vmatprep.subr.bf16.mxu0 0
      %2404 = vmatpush1.bf16.msra.mxu0 %v2276
      %2405 = vmatprep.subr.bf16.mxu0 0
      %2406 = vmatpush1.bf16.msra.mxu0 %v2275
      %2407 = vmatprep.subr.bf16.mxu0 0
      %2408 = vmatpush1.bf16.msra.mxu0 %v2274
      %2409 = vmatprep.subr.bf16.mxu0 0
      %2410 = vmatpush1.bf16.msra.mxu0 %v2273
      %2411 = vmatprep.subr.bf16.mxu0 0
      %2412 = vmatpush1.bf16.msra.mxu0 %v2272
      %2413 = vmatprep.subr.bf16.mxu0 0
      %2414 = vmatpush1.bf16.msra.mxu0 %v2271
      %2415 = vmatprep.subr.bf16.mxu0 0
      %2416 = vmatpush2.bf16.msra.mxu0 %v2286
      %2417 = vmatprep.subr.bf16.mxu0 0
      %2418 = vmatpush2.bf16.msra.mxu0 %v2285
      %2419 = vmatprep.subr.bf16.mxu0 0
      %2420 = vmatpush2.bf16.msra.mxu0 %v2284
      %2421 = vmatprep.subr.bf16.mxu0 0
      %2422 = vmatpush2.bf16.msra.mxu0 %v2283
      %2423 = vmatprep.subr.bf16.mxu0 0
      %2424 = vmatpush2.bf16.msra.mxu0 %v2282
      %2425 = vmatprep.subr.bf16.mxu0 0
      %2426 = vmatpush2.bf16.msra.mxu0 %v2281
      %2427 = vmatprep.subr.bf16.mxu0 0
      %2428 = vmatpush2.bf16.msra.mxu0 %v2280
      %2429 = vmatprep.subr.bf16.mxu0 0
      %2430 = vmatpush2.bf16.msra.mxu0 %v2279
      %2431 = vmatprep.mubr.bf16.mxu0 %v1873
      %2432 = vmatmul.mubr.bf16.gmra.mxu0 %v1872
      %v2433 = vpop.f32.mrf.mxu0
      %v2434 = vadd.f32 %v2013, %v2433
      %v2435 = vpop.f32.mrf.mxu0
      %v2436 = vpop.f32.mrf.mxu0
      %v2437 = vadd.f32 %v2013, %v2436
      %v2438 = vpop.f32.mrf.mxu0
      %2439 = vdwg.mxu0
      %2440 = vmatprep.subr.bf16.mxu0 0
      %2441 = vmatpush1.bf16.msra.mxu0 %v2294
      %2442 = vmatprep.subr.bf16.mxu0 0
      %2443 = vmatpush1.bf16.msra.mxu0 %v2293
      %2444 = vmatprep.subr.bf16.mxu0 0
      %2445 = vmatpush1.bf16.msra.mxu0 %v2292
      %2446 = vmatprep.subr.bf16.mxu0 0
      %2447 = vmatpush1.bf16.msra.mxu0 %v2291
      %2448 = vmatprep.subr.bf16.mxu0 0
      %2449 = vmatpush1.bf16.msra.mxu0 %v2290
      %2450 = vmatprep.subr.bf16.mxu0 0
      %2451 = vmatpush1.bf16.msra.mxu0 %v2289
      %2452 = vmatprep.subr.bf16.mxu0 0
      %2453 = vmatpush1.bf16.msra.mxu0 %v2288
      %2454 = vmatprep.subr.bf16.mxu0 0
      %2455 = vmatpush1.bf16.msra.mxu0 %v2287
      %2456 = vmatprep.subr.bf16.mxu0 0
      %2457 = vmatpush2.bf16.msra.mxu0 %v2302
      %2458 = vmatprep.subr.bf16.mxu0 0
      %2459 = vmatpush2.bf16.msra.mxu0 %v2301
      %2460 = vmatprep.subr.bf16.mxu0 0
      %2461 = vmatpush2.bf16.msra.mxu0 %v2300
      %2462 = vmatprep.subr.bf16.mxu0 0
      %2463 = vmatpush2.bf16.msra.mxu0 %v2299
      %2464 = vmatprep.subr.bf16.mxu0 0
      %2465 = vmatpush2.bf16.msra.mxu0 %v2298
      %2466 = vmatprep.subr.bf16.mxu0 0
      %2467 = vmatpush2.bf16.msra.mxu0 %v2297
      %2468 = vmatprep.subr.bf16.mxu0 0
      %2469 = vmatpush2.bf16.msra.mxu0 %v2296
      %2470 = vmatprep.subr.bf16.mxu0 0
      %2471 = vmatpush2.bf16.msra.mxu0 %v2295
      %2472 = vmatprep.mubr.bf16.mxu0 %v1875
      %2473 = vmatmul.mubr.bf16.gmra.mxu0 %v1874
      %v2474 = vpop.f32.mrf.mxu0
      %v2475 = vadd.f32 %v2434, %v2474
      %v2476 = vpop.f32.mrf.mxu0
      %v2477 = vpop.f32.mrf.mxu0
      %v2478 = vadd.f32 %v2437, %v2477
      %v2479 = vpop.f32.mrf.mxu0
      %2480 = vdwg.mxu0
      %2481 = vmatprep.subr.bf16.mxu0 0
      %2482 = vmatpush1.bf16.msra.mxu0 %v2310
      %2483 = vmatprep.subr.bf16.mxu0 0
      %2484 = vmatpush1.bf16.msra.mxu0 %v2309
      %2485 = vmatprep.subr.bf16.mxu0 0
      %2486 = vmatpush1.bf16.msra.mxu0 %v2308
      %2487 = vmatprep.subr.bf16.mxu0 0
      %2488 = vmatpush1.bf16.msra.mxu0 %v2307
      %2489 = vmatprep.subr.bf16.mxu0 0
      %2490 = vmatpush1.bf16.msra.mxu0 %v2306
      %2491 = vmatprep.subr.bf16.mxu0 0
      %2492 = vmatpush1.bf16.msra.mxu0 %v2305
      %2493 = vmatprep.subr.bf16.mxu0 0
      %2494 = vmatpush1.bf16.msra.mxu0 %v2304
      %2495 = vmatprep.subr.bf16.mxu0 0
      %2496 = vmatpush1.bf16.msra.mxu0 %v2303
      %2497 = vmatprep.subr.bf16.mxu0 0
      %2498 = vmatpush2.bf16.msra.mxu0 %v2318
      %2499 = vmatprep.subr.bf16.mxu0 0
      %2500 = vmatpush2.bf16.msra.mxu0 %v2317
      %2501 = vmatprep.subr.bf16.mxu0 0
      %2502 = vmatpush2.bf16.msra.mxu0 %v2316
      %2503 = vmatprep.subr.bf16.mxu0 0
      %2504 = vmatpush2.bf16.msra.mxu0 %v2315
      %2505 = vmatprep.subr.bf16.mxu0 0
      %2506 = vmatpush2.bf16.msra.mxu0 %v2314
      %2507 = vmatprep.subr.bf16.mxu0 0
      %2508 = vmatpush2.bf16.msra.mxu0 %v2313
      %2509 = vmatprep.subr.bf16.mxu0 0
      %2510 = vmatpush2.bf16.msra.mxu0 %v2312
      %2511 = vmatprep.subr.bf16.mxu0 0
      %2512 = vmatpush2.bf16.msra.mxu0 %v2311
      %2513 = vmatprep.mubr.bf16.mxu0 %v1877
      %2514 = vmatmul.mubr.bf16.gmra.mxu0 %v1876
      %v2515 = vpop.f32.mrf.mxu0
      %v2516 = vadd.f32 %v2475, %v2515
      %v2517 = vpop.f32.mrf.mxu0
      %v2518 = vpop.f32.mrf.mxu0
      %v2519 = vadd.f32 %v2478, %v2518
      %v2520 = vpop.f32.mrf.mxu0
      %2521 = vdwg.mxu0
      %2522 = vmatprep.subr.bf16.mxu0 0
      %2523 = vmatpush1.bf16.msra.mxu0 %v2326
      %2524 = vmatprep.subr.bf16.mxu0 0
      %2525 = vmatpush1.bf16.msra.mxu0 %v2325
      %2526 = vmatprep.subr.bf16.mxu0 0
      %2527 = vmatpush1.bf16.msra.mxu0 %v2324
      %2528 = vmatprep.subr.bf16.mxu0 0
      %2529 = vmatpush1.bf16.msra.mxu0 %v2323
      %2530 = vmatprep.subr.bf16.mxu0 0
      %2531 = vmatpush1.bf16.msra.mxu0 %v2322
      %2532 = vmatprep.subr.bf16.mxu0 0
      %2533 = vmatpush1.bf16.msra.mxu0 %v2321
      %2534 = vmatprep.subr.bf16.mxu0 0
      %2535 = vmatpush1.bf16.msra.mxu0 %v2320
      %2536 = vmatprep.subr.bf16.mxu0 0
      %2537 = vmatpush1.bf16.msra.mxu0 %v2319
      %2538 = vmatprep.subr.bf16.mxu0 0
      %2539 = vmatpush2.bf16.msra.mxu0 %v2334
      %2540 = vmatprep.subr.bf16.mxu0 0
      %2541 = vmatpush2.bf16.msra.mxu0 %v2333
      %2542 = vmatprep.subr.bf16.mxu0 0
      %2543 = vmatpush2.bf16.msra.mxu0 %v2332
      %2544 = vmatprep.subr.bf16.mxu0 0
      %2545 = vmatpush2.bf16.msra.mxu0 %v2331
      %2546 = vmatprep.subr.bf16.mxu0 0
      %2547 = vmatpush2.bf16.msra.mxu0 %v2330
      %2548 = vmatprep.subr.bf16.mxu0 0
      %2549 = vmatpush2.bf16.msra.mxu0 %v2329
      %2550 = vmatprep.subr.bf16.mxu0 0
      %2551 = vmatpush2.bf16.msra.mxu0 %v2328
      %2552 = vmatprep.subr.bf16.mxu0 0
      %2553 = vmatpush2.bf16.msra.mxu0 %v2327
      %2554 = vmatprep.mubr.bf16.mxu0 %v1879
      %2555 = vmatmul.mubr.bf16.gmra.mxu0 %v1878
      %v2556 = vpop.f32.mrf.mxu0
      %v2557 = vadd.f32 %v2516, %v2556
      %v2558 = vpop.f32.mrf.mxu0
      %v2559 = vpop.f32.mrf.mxu0
      %v2560 = vadd.f32 %v2519, %v2559
      %v2561 = vpop.f32.mrf.mxu0
      %2562 = vdwg.mxu0
      %vm2563 = vcmask 97280
      %2564 = vst.msk [vmem:[%s530] sm:$0xff] %vm2563, %v2557
      %2565 = vst.msk [vmem:[%s530 + $0x8] sm:$0xff] %vm2563, %v2560
      %s2566 = smul.u32 2, %s31
      %p2567 = scmp.lt.s32.totalorder %s30, 1
      %s2568 = scalar_select %p2567, %s30, 1
      %p2569 = scmp.lt.s32.totalorder %s2566, 5
      %s2570 = scalar_select %p2569, %s2566, 5
      %s2571 = smul.addr %s2568, 6
      %s2572 = sadd.s32 %s2570, %s2571
      %s2573 = smul.addr %s2572, 8
      %s2574 = scalar_lea.vmem %s15, %s2573
      // Predicated region
      $region81: #{summarization.1} parent=79 // pred_check
        %p2575 = pneg %p380
      $region82: #{summarization.1} parent=79 // pred_check_branch
        %2577 = sbr.rel (%p2575) target = $region84
      $region83: #{summarization.1} parent=79 // pred_region
        %s2578 = smul.u32 2, %s31
      $region84: #{summarization.1} parent=79 // pred_fallthru
        _
    $region80: #{summarization.1} parent=5 // pred_fallthru
      _
    %p2579 = scmp.le.s32.totalorder 2, %s21
    // Predicated region
    $region85: #{summarization.1} parent=5 // pred_check
      %p2580 = pneg %p2579
    $region86: #{summarization.1} parent=5 // pred_check_branch
      %2582 = sbr.rel (%p2580) target = $region88
    $region87: #{summarization.1} parent=5 // pred_region
      %s2583 = ssub.s32 %s21, 2
      // Predicated region
      $region89: #{summarization.1} parent=87 // pred_check
        %p2584 = pneg %p386
      $region90: #{summarization.1} parent=87 // pred_check_branch
        %2586 = sbr.rel (%p2584) target = $region92
      $region91: #{summarization.1} parent=87 // pred_region
        %s2587 = smul.u32 2, %s33
        %p2588 = scmp.lt.s32.totalorder %s32, 1
        %s2589 = scalar_select %p2588, %s32, 1
        %p2590 = scmp.lt.s32.totalorder %s2587, 5
        %s2591 = scalar_select %p2590, %s2587, 5
        %s2592 = smul.addr %s2589, 6
        %s2593 = sadd.s32 %s2591, %s2592
        %s2594 = smul.addr %s2593, 8
        %s2595 = scalar_lea.vmem %s15, %s2594
      $region92: #{summarization.1} parent=87 // pred_fallthru
        _
    $region88: #{summarization.1} parent=5 // pred_fallthru
      _
  $region6: #{summarization.1} parent=0 // loop_footer
    %s25 = sadd.s32 1, %s21
  $region7: #{summarization.1} parent=0 // loop_footer_branch
    %20 = sbr.rel target = $region3
  $region8: #{summarization.1} parent=0 // loop_exit
    _

</llo_original>
